<compile_context>
chip_gen: v7x
topology: tpu7x:2x2x1
jax: 0.10.0
libtpu: 0.0.40
codegen_flags: <defaults>
</compile_context>

<pallas_src>
import functools
import numpy as np

import jax
import jax.numpy as jnp
from jax.experimental import pallas as pl
from jax.experimental.pallas import tpu as pltpu


def _silu(v):
    return v * jax.nn.sigmoid(v)


# ----------------------------------------------------------------------------
# Fused UNet forward kernel (one batch element per grid step)
# ----------------------------------------------------------------------------
def _fused_unet_kernel(temb_ref, x_ref,
                       tw1_ref, tw2_ref, ew_ref,
                       ciw_ref, c1w_ref, c2w_ref, cow_ref,
                       p_ref, mask_ref, smallm_ref, smalle_ref,
                       o_ref,
                       *, H, W, C, M, G, gn_eps):
    HW = H * W
    inv_n = 1.0 / float(HW * (M // G))

    # --- unpack packed small parameters (columns; broadcast over lanes) -----
    def colM(j):
        return smallm_ref[:, j:j + 1]                       # (M, 1)

    conv_in_b = colM(0)
    gn1_g, gn1_b = colM(1), colM(2)
    conv1_b = colM(3)
    gn2_g, gn2_b = colM(4), colM(5)
    conv2_b = colM(6)
    out_gn_g, out_gn_b = colM(7), colM(8)
    emb_b = colM(9)
    out_conv_b = smallm_ref[0:C, 10:11]                     # (C, 1)
    tb1 = smalle_ref[:, 0:1]                                # (E, 1)
    tb2 = smalle_ref[:, 1:2]                                # (E, 1)

    def conv3x3(h, w2_ref, bias):
        """3x3 'same' conv, channels-major.

        h: (cin, HW); w2_ref: (cout, 9*cin) tap-major repacked weights;
        bias: (cout, 1).  Tap shifts are static lane rolls (XLU) with
        precomputed border masks; the 9 shifted copies are stacked
        sublane-wise into a (9*cin, HW) im2col matrix so the conv is a single
        lane-dense MXU dot (no per-tap accumulator adds / MRF drains).
        """
        taps = []
        for tap in range(9):
            dy, dx = tap // 3 - 1, tap % 3 - 1
            off = dy * W + dx
            if off == 0:
                taps.append(h)
            else:
                sh = pltpu.roll(h, shift=(-off) % HW, axis=1)
                taps.append(sh * mask_ref[tap:tap + 1, :])
        patch = jnp.concatenate(taps, axis=0)               # (9*cin, HW)
        out = jnp.dot(w2_ref[...], patch,
                      preferred_element_type=jnp.float32)   # (cout, HW)
        return out + bias                                   # bias in epilogue

    def gn_silu(h, gamma, beta):
        """GroupNorm + SiLU on (M, HW) activations.

        Group sums via a lane-dense (M,M)@(M,HW) matmul with the same-group
        indicator P (MXU has headroom) + XLU lane reductions; no 1-row dots.
        """
        gs = jnp.dot(p_ref[...], h, preferred_element_type=jnp.float32)
        gq = jnp.dot(p_ref[...], h * h, preferred_element_type=jnp.float32)
        mean = jnp.sum(gs, axis=1, keepdims=True) * inv_n             # (M, 1)
        ex2 = jnp.sum(gq, axis=1, keepdims=True) * inv_n              # (M, 1)
        var = jnp.maximum(ex2 - mean * mean, 0.0)          # clamped E[x^2]-E[x]^2
        y = (h - mean) * jax.lax.rsqrt(var + gn_eps)
        y = y * gamma + beta
        return _silu(y)

    # ---- time-embedding MLP (column orientation, 8 replicated lanes) -------
    t8 = jnp.broadcast_to(temb_ref[0], (M, 8))                        # (M, 8)
    h1 = _silu(jnp.dot(tw1_ref[...], t8,
                       preferred_element_type=jnp.float32) + tb1)     # (E, 8)
    h2 = jnp.dot(tw2_ref[...], h1, preferred_element_type=jnp.float32) + tb2
    es = _silu(h2)                                                    # (E, 8)
    e = jnp.dot(ew_ref[...], es,
                preferred_element_type=jnp.float32)[:, 0:1] + emb_b   # (M, 1)

    # ---- conv_in ------------------------------------------------------------
    h = conv3x3(x_ref[0], ciw_ref, conv_in_b)                         # (M, HW)
    skip = h

    # ---- ResBlock (time-emb add & residual add fused into conv epilogues) --
    h = gn_silu(h, gn1_g, gn1_b)
    h = conv3x3(h, c1w_ref, conv1_b) + e
    h = gn_silu(h, gn2_g, gn2_b)
    h = conv3x3(h, c2w_ref, conv2_b) + skip

    # ---- output head --------------------------------------------------------
    h = gn_silu(h, out_gn_g, out_gn_b)
    o_ref[0] = conv3x3(h, cow_ref, out_conv_b)                        # (C, HW)


# ----------------------------------------------------------------------------
# Glue (pure parameter / embedding setup, no hot-path compute)
# ----------------------------------------------------------------------------
def timestep_embedding(t, dim, max_period=10000.0):
    half = dim // 2
    freqs = jnp.exp(
        -jnp.log(max_period) * jnp.arange(half, dtype=jnp.float32) / half)
    args = t.astype(jnp.float32)[:, None] * freqs[None, :]
    return jnp.concatenate([jnp.cos(args), jnp.sin(args)], axis=-1)


def _const_index(ndim):
    return lambda bi: (0,) * ndim


class DDPM:
    """Classic DDPM; forward(x, t) returns the predicted noise eps."""

    def __init__(self, resolution=(16, 16), in_channels=4, model_channels=32,
                 num_groups=8, timesteps=1000, linear_start=1e-4,
                 linear_end=2e-2, logvar_init=0.0, seed=0):
        self.channels = in_channels
        self.resolution = resolution
        self.model_channels = model_channels
        self.num_groups = num_groups
        self.num_timesteps = timesteps
        self.pred_target = 'eps'

        # register_schedule (linear beta schedule).  Parameter setup only;
        # never touched by forward().
        betas = (np.linspace(linear_start ** 0.5, linear_end ** 0.5,
                             timesteps, dtype=np.float64) ** 2)
        alphas = 1.0 - betas
        alphas_bar = np.cumprod(alphas, axis=0)
        alphas_bar_prev = np.append(1.0, alphas_bar[:-1])
        self.betas = jnp.asarray(betas, jnp.float32)
        self.alphas_bar = jnp.asarray(alphas_bar, jnp.float32)
        self.sqrt_alphas_bar = jnp.asarray(np.sqrt(alphas_bar), jnp.float32)
        self.sqrt_one_minus_alphas_bar = jnp.asarray(
            np.sqrt(1.0 - alphas_bar), jnp.float32)
        self.sqrt_recip_alphas_bar = jnp.asarray(
            np.sqrt(1.0 / alphas_bar), jnp.float32)
        self.sqrt_recipm1_alphas_bar = jnp.asarray(
            np.sqrt(1.0 / alphas_bar - 1.0), jnp.float32)
        post_var = betas * (1.0 - alphas_bar_prev) / (1.0 - alphas_bar)
        self.posterior_variance = jnp.asarray(post_var, jnp.float32)
        self.posterior_log_variance_clipped = jnp.asarray(
            np.log(np.maximum(post_var, 1e-20)), jnp.float32)
        self.posterior_mean_coef1 = jnp.asarray(
            betas * np.sqrt(alphas_bar_prev) / (1.0 - alphas_bar), jnp.float32)
        self.posterior_mean_coef2 = jnp.asarray(
            (1.0 - alphas_bar_prev) * np.sqrt(alphas) / (1.0 - alphas_bar),
            jnp.float32)
        self.logvar = jnp.full((timesteps,), logvar_init, jnp.float32)

        # ---- UNet parameters (deterministic init), repacked for the kernel --
        C, M, G = in_channels, model_channels, num_groups
        E = 4 * M
        H, W = resolution
        HW = H * W
        CP = 8                      # input channels zero-padded to 8 sublanes
        self.emb_channels = E
        self.cp = CP

        key = jax.random.PRNGKey(seed)
        ks = jax.random.split(key, 8)

        def w_init(k, shape, scale=0.05):
            return scale * jax.random.normal(k, shape, jnp.float32)

        time_w1 = w_init(ks[0], (E, M))
        time_w2 = w_init(ks[1], (E, E))
        emb_w = w_init(ks[2], (M, E))
        conv_in_w = w_init(ks[3], (3, 3, C, M))
        conv1_w = w_init(ks[4], (3, 3, M, M))
        conv2_w = w_init(ks[5], (3, 3, M, M))
        out_conv_w = w_init(ks[6], (3, 3, M, C))

        def pack_conv(w):
            # (3,3,cin,cout) -> (cout, 9*cin), tap-major (tap = ky*3 + kx)
            co, ci = w.shape[3], w.shape[2]
            return jnp.transpose(w, (3, 0, 1, 2)).reshape(co, 9 * ci)

        conv_in_w = jnp.pad(conv_in_w, ((0, 0), (0, 0), (0, CP - C), (0, 0)))

        zM = jnp.zeros((M,), jnp.float32)
        oM = jnp.ones((M,), jnp.float32)
        # packed per-channel params, one column each:
        #  0 conv_in_b  1 gn1_g  2 gn1_b  3 conv1_b  4 gn2_g  5 gn2_b
        #  6 conv2_b    7 out_gn_g  8 out_gn_b  9 emb_b  10 out_conv_b[:C]
        small_m = jnp.stack([zM, oM, zM, zM, oM, zM, zM, oM, zM, zM, zM],
                            axis=1)                          # (M, 11)
        small_e = jnp.zeros((E, 2), jnp.float32)             # time_b1 | time_b2

        # GroupNorm same-group indicator (block-diagonal ones), (M, M)
        grp = np.arange(M) // (M // G)
        p_mat = (grp[:, None] == grp[None, :]).astype(np.float32)

        # 3x3 tap border masks over the flattened HW axis, (9, HW)
        ys, xs = np.divmod(np.arange(HW), W)
        masks = np.zeros((9, HW), np.float32)
        for tap in range(9):
            dy, dx = tap // 3 - 1, tap % 3 - 1
            ok = ((ys + dy >= 0) & (ys + dy < H) &
                  (xs + dx >= 0) & (xs + dx < W))
            masks[tap] = ok.astype(np.float32)

        self.weights = (
            time_w1, time_w2, emb_w,
            pack_conv(conv_in_w),        # (M, 9*CP)
            pack_conv(conv1_w),          # (M, 9*M)
            pack_conv(conv2_w),          # (M, 9*M)
            pack_conv(out_conv_w),       # (C, 9*M)
            jnp.asarray(p_mat),          # (M, M)
            jnp.asarray(masks),          # (9, HW)
            small_m,                     # (M, 11)
            small_e,                     # (E, 2)
        )

    # forward(x, t) = self.model(x, t): conditioning_key=None -> UNet(x, t)
    def forward(self, x_nchw, t):
        B = x_nchw.shape[0]
        H, W = self.resolution
        HW = H * W
        C, M, G = self.channels, self.model_channels, self.num_groups
        CP = self.cp

        # lane-dense NCHW I/O: (B, C, H*W), channels zero-padded 4 -> 8
        x2 = x_nchw.astype(jnp.float32).reshape(B, C, HW)
        x2 = jnp.pad(x2, ((0, 0), (0, CP - C), (0, 0)))
        temb = timestep_embedding(t, M)[:, :, None]          # (B, M, 1)

        weights = self.weights
        out = pl.pallas_call(
            functools.partial(_fused_unet_kernel,
                              H=H, W=W, C=C, M=M, G=G, gn_eps=1e-5),
            out_shape=jax.ShapeDtypeStruct((B, C, HW), jnp.float32),
            grid=(B,),
            in_specs=[
                pl.BlockSpec((1, M, 1), lambda bi: (bi, 0, 0)),
                pl.BlockSpec((1, CP, HW), lambda bi: (bi, 0, 0)),
            ] + [pl.BlockSpec(w.shape, _const_index(w.ndim)) for w in weights],
            out_specs=pl.BlockSpec((1, C, HW), lambda bi: (bi, 0, 0)),
            compiler_params=pltpu.CompilerParams(
                dimension_semantics=("parallel",)),          # v7x: 2 TCs
        )(temb, x2, *weights)

        return out.reshape(B, C, H, W)                       # NCHW, no transpose


if __name__ == "__main__":
    B, C, H, W = 2, 4, 16, 16
    key = jax.random.PRNGKey(0)
    kx, kt = jax.random.split(key)
    x = jax.random.normal(kx, (B, C, H, W), jnp.float32)           # NCHW input
    t = jax.random.randint(kt, (B,), 0, 1000, dtype=jnp.int32)     # timesteps

    model = DDPM(resolution=(H, W), in_channels=C, model_channels=32)
    eps = model.forward(x, t)
    eps = jax.block_until_ready(eps)

    assert eps.shape == (B, C, H, W), eps.shape
    assert bool(jnp.all(jnp.isfinite(eps)))
    print("KERNEL_OK")
</pallas_src>

<mosaic_0001>
module attributes {stable_mosaic.version = 11 : i64} {
  func.func @_fused_unet_kernel(%arg0: i32, %arg1: memref<1x32x1xf32, #tpu.memory_space<vmem>>, %arg2: memref<1x8x256xf32, #tpu.memory_space<vmem>>, %arg3: memref<128x32xf32, #tpu.memory_space<vmem>>, %arg4: memref<128x128xf32, #tpu.memory_space<vmem>>, %arg5: memref<32x128xf32, #tpu.memory_space<vmem>>, %arg6: memref<32x72xf32, #tpu.memory_space<vmem>>, %arg7: memref<32x288xf32, #tpu.memory_space<vmem>>, %arg8: memref<32x288xf32, #tpu.memory_space<vmem>>, %arg9: memref<4x288xf32, #tpu.memory_space<vmem>>, %arg10: memref<32x32xf32, #tpu.memory_space<vmem>>, %arg11: memref<9x256xf32, #tpu.memory_space<vmem>>, %arg12: memref<32x11xf32, #tpu.memory_space<vmem>>, %arg13: memref<128x2xf32, #tpu.memory_space<vmem>>, %arg14: memref<1x4x256xf32, #tpu.memory_space<vmem>>) attributes {dimension_semantics = [#tpu.dimension_semantics<parallel>], iteration_bounds = array<i64: 2>, scalar_prefetch = 0 : i64, scratch_operands = 0 : i64, tpu.core_type = #tpu.core_type<tc>, window_params = [{transform_indices = @transform_0, window_bounds = array<i64: 1, 32, 1>}, {transform_indices = @transform_1, window_bounds = array<i64: 1, 8, 256>}, {pipeline_mode = #tpu.pipeline_mode<synchronous>, transform_indices = @transform_2, window_bounds = array<i64: 128, 32>}, {pipeline_mode = #tpu.pipeline_mode<synchronous>, transform_indices = @transform_3, window_bounds = array<i64: 128, 128>}, {pipeline_mode = #tpu.pipeline_mode<synchronous>, transform_indices = @transform_4, window_bounds = array<i64: 32, 128>}, {pipeline_mode = #tpu.pipeline_mode<synchronous>, transform_indices = @transform_5, window_bounds = array<i64: 32, 72>}, {pipeline_mode = #tpu.pipeline_mode<synchronous>, transform_indices = @transform_6, window_bounds = array<i64: 32, 288>}, {pipeline_mode = #tpu.pipeline_mode<synchronous>, transform_indices = @transform_7, window_bounds = array<i64: 32, 288>}, {pipeline_mode = #tpu.pipeline_mode<synchronous>, transform_indices = @transform_8, window_bounds = array<i64: 4, 288>}, {pipeline_mode = #tpu.pipeline_mode<synchronous>, transform_indices = @transform_9, window_bounds = array<i64: 32, 32>}, {pipeline_mode = #tpu.pipeline_mode<synchronous>, transform_indices = @transform_10, window_bounds = array<i64: 9, 256>}, {pipeline_mode = #tpu.pipeline_mode<synchronous>, transform_indices = @transform_11, window_bounds = array<i64: 32, 11>}, {pipeline_mode = #tpu.pipeline_mode<synchronous>, transform_indices = @transform_12, window_bounds = array<i64: 128, 2>}, {transform_indices = @transform_13, window_bounds = array<i64: 1, 4, 256>}]} {
    %c0 = arith.constant 0 : index
    %c0_0 = arith.constant 0 : index
    %0 = vector.load %arg12[%c0, %c0_0] : memref<32x11xf32, #tpu.memory_space<vmem>>, vector<32x1xf32>
    %c0_1 = arith.constant 0 : index
    %c1 = arith.constant 1 : index
    %1 = vector.load %arg12[%c0_1, %c1] : memref<32x11xf32, #tpu.memory_space<vmem>>, vector<32x1xf32>
    %c0_2 = arith.constant 0 : index
    %c2 = arith.constant 2 : index
    %2 = vector.load %arg12[%c0_2, %c2] : memref<32x11xf32, #tpu.memory_space<vmem>>, vector<32x1xf32>
    %c0_3 = arith.constant 0 : index
    %c3 = arith.constant 3 : index
    %3 = vector.load %arg12[%c0_3, %c3] : memref<32x11xf32, #tpu.memory_space<vmem>>, vector<32x1xf32>
    %c0_4 = arith.constant 0 : index
    %c4 = arith.constant 4 : index
    %4 = vector.load %arg12[%c0_4, %c4] : memref<32x11xf32, #tpu.memory_space<vmem>>, vector<32x1xf32>
    %c0_5 = arith.constant 0 : index
    %c5 = arith.constant 5 : index
    %5 = vector.load %arg12[%c0_5, %c5] : memref<32x11xf32, #tpu.memory_space<vmem>>, vector<32x1xf32>
    %c0_6 = arith.constant 0 : index
    %c6 = arith.constant 6 : index
    %6 = vector.load %arg12[%c0_6, %c6] : memref<32x11xf32, #tpu.memory_space<vmem>>, vector<32x1xf32>
    %c0_7 = arith.constant 0 : index
    %c7 = arith.constant 7 : index
    %7 = vector.load %arg12[%c0_7, %c7] : memref<32x11xf32, #tpu.memory_space<vmem>>, vector<32x1xf32>
    %c0_8 = arith.constant 0 : index
    %c8 = arith.constant 8 : index
    %8 = vector.load %arg12[%c0_8, %c8] : memref<32x11xf32, #tpu.memory_space<vmem>>, vector<32x1xf32>
    %c0_9 = arith.constant 0 : index
    %c9 = arith.constant 9 : index
    %9 = vector.load %arg12[%c0_9, %c9] : memref<32x11xf32, #tpu.memory_space<vmem>>, vector<32x1xf32>
    %c0_10 = arith.constant 0 : index
    %c10 = arith.constant 10 : index
    %10 = vector.load %arg12[%c0_10, %c10] : memref<32x11xf32, #tpu.memory_space<vmem>>, vector<4x1xf32>
    %c0_11 = arith.constant 0 : index
    %c0_12 = arith.constant 0 : index
    %11 = vector.load %arg13[%c0_11, %c0_12] : memref<128x2xf32, #tpu.memory_space<vmem>>, vector<128x1xf32>
    %c0_13 = arith.constant 0 : index
    %c1_14 = arith.constant 1 : index
    %12 = vector.load %arg13[%c0_13, %c1_14] : memref<128x2xf32, #tpu.memory_space<vmem>>, vector<128x1xf32>
    %c0_15 = arith.constant 0 : index
    %c0_16 = arith.constant 0 : index
    %c0_17 = arith.constant 0 : index
    %13 = vector.load %arg1[%c0_15, %c0_16, %c0_17] : memref<1x32x1xf32, #tpu.memory_space<vmem>>, vector<1x32x1xf32>
    %14 = vector.shape_cast %13 : vector<1x32x1xf32> to vector<32x1xf32>
    %15 = vector.shape_cast %14 : vector<32x1xf32> to vector<32x1xf32>
    %16 = vector.broadcast %15 : vector<32x1xf32> to vector<32x8xf32>
    %c0_18 = arith.constant 0 : index
    %c0_19 = arith.constant 0 : index
    %17 = vector.load %arg3[%c0_18, %c0_19] : memref<128x32xf32, #tpu.memory_space<vmem>>, vector<128x32xf32>
    %cst = arith.constant dense<0.000000e+00> : vector<128x8xf32>
    %18 = tpu.matmul %17, %16, %cst {dimension_numbers = #tpu.dot_dimension_numbers<[1], [0], [0], [1], [0, 0, 1, 1], [], []>} : vector<128x32xf32>, vector<32x8xf32>, vector<128x8xf32> -> vector<128x8xf32>
    %19 = vector.broadcast %11 : vector<128x1xf32> to vector<128x8xf32>
    %20 = arith.addf %18, %19 : vector<128x8xf32>
    %21 = arith.negf %20 : vector<128x8xf32>
    %22 = math.exp %21 : vector<128x8xf32>
    %cst_20 = arith.constant 1.000000e+00 : f32
    %23 = vector.broadcast %cst_20 : f32 to vector<128x8xf32>
    %24 = arith.addf %23, %22 : vector<128x8xf32>
    %25 = arith.divf %23, %24 : vector<128x8xf32>
    %26 = arith.mulf %20, %25 : vector<128x8xf32>
    %c0_21 = arith.constant 0 : index
    %c0_22 = arith.constant 0 : index
    %27 = vector.load %arg4[%c0_21, %c0_22] : memref<128x128xf32, #tpu.memory_space<vmem>>, vector<128x128xf32>
    %cst_23 = arith.constant dense<0.000000e+00> : vector<128x8xf32>
    %28 = tpu.matmul %27, %26, %cst_23 {dimension_numbers = #tpu.dot_dimension_numbers<[1], [0], [0], [1], [0, 0, 1, 1], [], []>} : vector<128x128xf32>, vector<128x8xf32>, vector<128x8xf32> -> vector<128x8xf32>
    %29 = vector.broadcast %12 : vector<128x1xf32> to vector<128x8xf32>
    %30 = arith.addf %28, %29 : vector<128x8xf32>
    %31 = arith.negf %30 : vector<128x8xf32>
    %32 = math.exp %31 : vector<128x8xf32>
    %cst_24 = arith.constant 1.000000e+00 : f32
    %33 = vector.broadcast %cst_24 : f32 to vector<128x8xf32>
    %34 = arith.addf %33, %32 : vector<128x8xf32>
    %35 = arith.divf %33, %34 : vector<128x8xf32>
    %36 = arith.mulf %30, %35 : vector<128x8xf32>
    %c0_25 = arith.constant 0 : index
    %c0_26 = arith.constant 0 : index
    %37 = vector.load %arg5[%c0_25, %c0_26] : memref<32x128xf32, #tpu.memory_space<vmem>>, vector<32x128xf32>
    %cst_27 = arith.constant dense<0.000000e+00> : vector<32x8xf32>
    %38 = tpu.matmul %37, %36, %cst_27 {dimension_numbers = #tpu.dot_dimension_numbers<[1], [0], [0], [1], [0, 0, 1, 1], [], []>} : vector<32x128xf32>, vector<128x8xf32>, vector<32x8xf32> -> vector<32x8xf32>
    %39 = vector.extract_strided_slice %38 {offsets = [0, 0], sizes = [32, 1], strides = [1, 1]} : vector<32x8xf32> to vector<32x1xf32>
    %40 = arith.addf %39, %9 : vector<32x1xf32>
    %c0_28 = arith.constant 0 : index
    %c0_29 = arith.constant 0 : index
    %c0_30 = arith.constant 0 : index
    %41 = vector.load %arg2[%c0_28, %c0_29, %c0_30] : memref<1x8x256xf32, #tpu.memory_space<vmem>>, vector<1x8x256xf32>
    %42 = vector.shape_cast %41 : vector<1x8x256xf32> to vector<8x256xf32>
    %c17_i32 = arith.constant 17 : i32
    %43 = tpu.dynamic_rotate %42 by %c17_i32 dim 1 : vector<8x256xf32>, i32 -> vector<8x256xf32>
    %c0_31 = arith.constant 0 : index
    %c0_32 = arith.constant 0 : index
    %44 = vector.load %arg11[%c0_31, %c0_32] : memref<9x256xf32, #tpu.memory_space<vmem>>, vector<1x256xf32>
    %45 = vector.broadcast %44 : vector<1x256xf32> to vector<8x256xf32>
    %46 = arith.mulf %43, %45 : vector<8x256xf32>
    %c16_i32 = arith.constant 16 : i32
    %47 = tpu.dynamic_rotate %42 by %c16_i32 dim 1 : vector<8x256xf32>, i32 -> vector<8x256xf32>
    %c1_33 = arith.constant 1 : index
    %c0_34 = arith.constant 0 : index
    %48 = vector.load %arg11[%c1_33, %c0_34] : memref<9x256xf32, #tpu.memory_space<vmem>>, vector<1x256xf32>
    %49 = vector.broadcast %48 : vector<1x256xf32> to vector<8x256xf32>
    %50 = arith.mulf %47, %49 : vector<8x256xf32>
    %c15_i32 = arith.constant 15 : i32
    %51 = tpu.dynamic_rotate %42 by %c15_i32 dim 1 : vector<8x256xf32>, i32 -> vector<8x256xf32>
    %c2_35 = arith.constant 2 : index
    %c0_36 = arith.constant 0 : index
    %52 = vector.load %arg11[%c2_35, %c0_36] : memref<9x256xf32, #tpu.memory_space<vmem>>, vector<1x256xf32>
    %53 = vector.broadcast %52 : vector<1x256xf32> to vector<8x256xf32>
    %54 = arith.mulf %51, %53 : vector<8x256xf32>
    %c1_i32 = arith.constant 1 : i32
    %55 = tpu.dynamic_rotate %42 by %c1_i32 dim 1 : vector<8x256xf32>, i32 -> vector<8x256xf32>
    %c3_37 = arith.constant 3 : index
    %c0_38 = arith.constant 0 : index
    %56 = vector.load %arg11[%c3_37, %c0_38] : memref<9x256xf32, #tpu.memory_space<vmem>>, vector<1x256xf32>
    %57 = vector.broadcast %56 : vector<1x256xf32> to vector<8x256xf32>
    %58 = arith.mulf %55, %57 : vector<8x256xf32>
    %c255_i32 = arith.constant 255 : i32
    %59 = tpu.dynamic_rotate %42 by %c255_i32 dim 1 : vector<8x256xf32>, i32 -> vector<8x256xf32>
    %c5_39 = arith.constant 5 : index
    %c0_40 = arith.constant 0 : index
    %60 = vector.load %arg11[%c5_39, %c0_40] : memref<9x256xf32, #tpu.memory_space<vmem>>, vector<1x256xf32>
    %61 = vector.broadcast %60 : vector<1x256xf32> to vector<8x256xf32>
    %62 = arith.mulf %59, %61 : vector<8x256xf32>
    %c241_i32 = arith.constant 241 : i32
    %63 = tpu.dynamic_rotate %42 by %c241_i32 dim 1 : vector<8x256xf32>, i32 -> vector<8x256xf32>
    %c6_41 = arith.constant 6 : index
    %c0_42 = arith.constant 0 : index
    %64 = vector.load %arg11[%c6_41, %c0_42] : memref<9x256xf32, #tpu.memory_space<vmem>>, vector<1x256xf32>
    %65 = vector.broadcast %64 : vector<1x256xf32> to vector<8x256xf32>
    %66 = arith.mulf %63, %65 : vector<8x256xf32>
    %c240_i32 = arith.constant 240 : i32
    %67 = tpu.dynamic_rotate %42 by %c240_i32 dim 1 : vector<8x256xf32>, i32 -> vector<8x256xf32>
    %c7_43 = arith.constant 7 : index
    %c0_44 = arith.constant 0 : index
    %68 = vector.load %arg11[%c7_43, %c0_44] : memref<9x256xf32, #tpu.memory_space<vmem>>, vector<1x256xf32>
    %69 = vector.broadcast %68 : vector<1x256xf32> to vector<8x256xf32>
    %70 = arith.mulf %67, %69 : vector<8x256xf32>
    %c239_i32 = arith.constant 239 : i32
    %71 = tpu.dynamic_rotate %42 by %c239_i32 dim 1 : vector<8x256xf32>, i32 -> vector<8x256xf32>
    %c8_45 = arith.constant 8 : index
    %c0_46 = arith.constant 0 : index
    %72 = vector.load %arg11[%c8_45, %c0_46] : memref<9x256xf32, #tpu.memory_space<vmem>>, vector<1x256xf32>
    %73 = vector.broadcast %72 : vector<1x256xf32> to vector<8x256xf32>
    %74 = arith.mulf %71, %73 : vector<8x256xf32>
    %75 = tpu.concatenate %46, %50, %54, %58, %42, %62, %66, %70, %74 in 0 : vector<8x256xf32>, vector<8x256xf32>, vector<8x256xf32>, vector<8x256xf32>, vector<8x256xf32>, vector<8x256xf32>, vector<8x256xf32>, vector<8x256xf32>, vector<8x256xf32> -> vector<72x256xf32>
    %c0_47 = arith.constant 0 : index
    %c0_48 = arith.constant 0 : index
    %76 = vector.load %arg6[%c0_47, %c0_48] : memref<32x72xf32, #tpu.memory_space<vmem>>, vector<32x72xf32>
    %cst_49 = arith.constant dense<0.000000e+00> : vector<32x256xf32>
    %77 = tpu.matmul %76, %75, %cst_49 {dimension_numbers = #tpu.dot_dimension_numbers<[1], [0], [0], [1], [0, 0, 1, 1], [], []>} : vector<32x72xf32>, vector<72x256xf32>, vector<32x256xf32> -> vector<32x256xf32>
    %78 = vector.broadcast %0 : vector<32x1xf32> to vector<32x256xf32>
    %79 = arith.addf %77, %78 : vector<32x256xf32>
    %c0_50 = arith.constant 0 : index
    %c0_51 = arith.constant 0 : index
    %80 = vector.load %arg10[%c0_50, %c0_51] : memref<32x32xf32, #tpu.memory_space<vmem>>, vector<32x32xf32>
    %cst_52 = arith.constant dense<0.000000e+00> : vector<32x256xf32>
    %81 = tpu.matmul %80, %79, %cst_52 {dimension_numbers = #tpu.dot_dimension_numbers<[1], [0], [0], [1], [0, 0, 1, 1], [], []>} : vector<32x32xf32>, vector<32x256xf32>, vector<32x256xf32> -> vector<32x256xf32>
    %c0_53 = arith.constant 0 : index
    %c0_54 = arith.constant 0 : index
    %82 = vector.load %arg10[%c0_53, %c0_54] : memref<32x32xf32, #tpu.memory_space<vmem>>, vector<32x32xf32>
    %83 = arith.mulf %79, %79 : vector<32x256xf32>
    %cst_55 = arith.constant dense<0.000000e+00> : vector<32x256xf32>
    %84 = tpu.matmul %82, %83, %cst_55 {dimension_numbers = #tpu.dot_dimension_numbers<[1], [0], [0], [1], [0, 0, 1, 1], [], []>} : vector<32x32xf32>, vector<32x256xf32>, vector<32x256xf32> -> vector<32x256xf32>
    %cst_56 = arith.constant dense<0.000000e+00> : vector<32xf32>
    %85 = vector.multi_reduction <add>, %81, %cst_56 [1] : vector<32x256xf32> to vector<32xf32>
    %86 = vector.shape_cast %85 : vector<32xf32> to vector<32x1xf32>
    %cst_57 = arith.constant 9.765625E-4 : f32
    %87 = vector.broadcast %cst_57 : f32 to vector<32x1xf32>
    %88 = arith.mulf %86, %87 : vector<32x1xf32>
    %cst_58 = arith.constant dense<0.000000e+00> : vector<32xf32>
    %89 = vector.multi_reduction <add>, %84, %cst_58 [1] : vector<32x256xf32> to vector<32xf32>
    %90 = vector.shape_cast %89 : vector<32xf32> to vector<32x1xf32>
    %cst_59 = arith.constant 9.765625E-4 : f32
    %91 = vector.broadcast %cst_59 : f32 to vector<32x1xf32>
    %92 = arith.mulf %90, %91 : vector<32x1xf32>
    %93 = arith.mulf %88, %88 : vector<32x1xf32>
    %94 = arith.subf %92, %93 : vector<32x1xf32>
    %cst_60 = arith.constant 0.000000e+00 : f32
    %95 = vector.broadcast %cst_60 : f32 to vector<32x1xf32>
    %96 = arith.maximumf %94, %95 : vector<32x1xf32>
    %97 = vector.broadcast %88 : vector<32x1xf32> to vector<32x256xf32>
    %98 = arith.subf %79, %97 : vector<32x256xf32>
    %cst_61 = arith.constant 9.99999974E-6 : f32
    %99 = vector.broadcast %cst_61 : f32 to vector<32x1xf32>
    %100 = arith.addf %96, %99 : vector<32x1xf32>
    %101 = math.rsqrt %100 : vector<32x1xf32>
    %102 = vector.broadcast %101 : vector<32x1xf32> to vector<32x256xf32>
    %103 = arith.mulf %98, %102 : vector<32x256xf32>
    %104 = vector.broadcast %1 : vector<32x1xf32> to vector<32x256xf32>
    %105 = arith.mulf %103, %104 : vector<32x256xf32>
    %106 = vector.broadcast %2 : vector<32x1xf32> to vector<32x256xf32>
    %107 = arith.addf %105, %106 : vector<32x256xf32>
    %108 = arith.negf %107 : vector<32x256xf32>
    %109 = math.exp %108 : vector<32x256xf32>
    %cst_62 = arith.constant 1.000000e+00 : f32
    %110 = vector.broadcast %cst_62 : f32 to vector<32x256xf32>
    %111 = arith.addf %110, %109 : vector<32x256xf32>
    %112 = arith.divf %110, %111 : vector<32x256xf32>
    %113 = arith.mulf %107, %112 : vector<32x256xf32>
    %c17_i32_63 = arith.constant 17 : i32
    %114 = tpu.dynamic_rotate %113 by %c17_i32_63 dim 1 : vector<32x256xf32>, i32 -> vector<32x256xf32>
    %c0_64 = arith.constant 0 : index
    %c0_65 = arith.constant 0 : index
    %115 = vector.load %arg11[%c0_64, %c0_65] : memref<9x256xf32, #tpu.memory_space<vmem>>, vector<1x256xf32>
    %116 = vector.broadcast %115 : vector<1x256xf32> to vector<32x256xf32>
    %117 = arith.mulf %114, %116 : vector<32x256xf32>
    %c16_i32_66 = arith.constant 16 : i32
    %118 = tpu.dynamic_rotate %113 by %c16_i32_66 dim 1 : vector<32x256xf32>, i32 -> vector<32x256xf32>
    %c1_67 = arith.constant 1 : index
    %c0_68 = arith.constant 0 : index
    %119 = vector.load %arg11[%c1_67, %c0_68] : memref<9x256xf32, #tpu.memory_space<vmem>>, vector<1x256xf32>
    %120 = vector.broadcast %119 : vector<1x256xf32> to vector<32x256xf32>
    %121 = arith.mulf %118, %120 : vector<32x256xf32>
    %c15_i32_69 = arith.constant 15 : i32
    %122 = tpu.dynamic_rotate %113 by %c15_i32_69 dim 1 : vector<32x256xf32>, i32 -> vector<32x256xf32>
    %c2_70 = arith.constant 2 : index
    %c0_71 = arith.constant 0 : index
    %123 = vector.load %arg11[%c2_70, %c0_71] : memref<9x256xf32, #tpu.memory_space<vmem>>, vector<1x256xf32>
    %124 = vector.broadcast %123 : vector<1x256xf32> to vector<32x256xf32>
    %125 = arith.mulf %122, %124 : vector<32x256xf32>
    %c1_i32_72 = arith.constant 1 : i32
    %126 = tpu.dynamic_rotate %113 by %c1_i32_72 dim 1 : vector<32x256xf32>, i32 -> vector<32x256xf32>
    %c3_73 = arith.constant 3 : index
    %c0_74 = arith.constant 0 : index
    %127 = vector.load %arg11[%c3_73, %c0_74] : memref<9x256xf32, #tpu.memory_space<vmem>>, vector<1x256xf32>
    %128 = vector.broadcast %127 : vector<1x256xf32> to vector<32x256xf32>
    %129 = arith.mulf %126, %128 : vector<32x256xf32>
    %c255_i32_75 = arith.constant 255 : i32
    %130 = tpu.dynamic_rotate %113 by %c255_i32_75 dim 1 : vector<32x256xf32>, i32 -> vector<32x256xf32>
    %c5_76 = arith.constant 5 : index
    %c0_77 = arith.constant 0 : index
    %131 = vector.load %arg11[%c5_76, %c0_77] : memref<9x256xf32, #tpu.memory_space<vmem>>, vector<1x256xf32>
    %132 = vector.broadcast %131 : vector<1x256xf32> to vector<32x256xf32>
    %133 = arith.mulf %130, %132 : vector<32x256xf32>
    %c241_i32_78 = arith.constant 241 : i32
    %134 = tpu.dynamic_rotate %113 by %c241_i32_78 dim 1 : vector<32x256xf32>, i32 -> vector<32x256xf32>
    %c6_79 = arith.constant 6 : index
    %c0_80 = arith.constant 0 : index
    %135 = vector.load %arg11[%c6_79, %c0_80] : memref<9x256xf32, #tpu.memory_space<vmem>>, vector<1x256xf32>
    %136 = vector.broadcast %135 : vector<1x256xf32> to vector<32x256xf32>
    %137 = arith.mulf %134, %136 : vector<32x256xf32>
    %c240_i32_81 = arith.constant 240 : i32
    %138 = tpu.dynamic_rotate %113 by %c240_i32_81 dim 1 : vector<32x256xf32>, i32 -> vector<32x256xf32>
    %c7_82 = arith.constant 7 : index
    %c0_83 = arith.constant 0 : index
    %139 = vector.load %arg11[%c7_82, %c0_83] : memref<9x256xf32, #tpu.memory_space<vmem>>, vector<1x256xf32>
    %140 = vector.broadcast %139 : vector<1x256xf32> to vector<32x256xf32>
    %141 = arith.mulf %138, %140 : vector<32x256xf32>
    %c239_i32_84 = arith.constant 239 : i32
    %142 = tpu.dynamic_rotate %113 by %c239_i32_84 dim 1 : vector<32x256xf32>, i32 -> vector<32x256xf32>
    %c8_85 = arith.constant 8 : index
    %c0_86 = arith.constant 0 : index
    %143 = vector.load %arg11[%c8_85, %c0_86] : memref<9x256xf32, #tpu.memory_space<vmem>>, vector<1x256xf32>
    %144 = vector.broadcast %143 : vector<1x256xf32> to vector<32x256xf32>
    %145 = arith.mulf %142, %144 : vector<32x256xf32>
    %146 = tpu.concatenate %117, %121, %125, %129, %113, %133, %137, %141, %145 in 0 : vector<32x256xf32>, vector<32x256xf32>, vector<32x256xf32>, vector<32x256xf32>, vector<32x256xf32>, vector<32x256xf32>, vector<32x256xf32>, vector<32x256xf32>, vector<32x256xf32> -> vector<288x256xf32>
    %c0_87 = arith.constant 0 : index
    %c0_88 = arith.constant 0 : index
    %147 = vector.load %arg7[%c0_87, %c0_88] : memref<32x288xf32, #tpu.memory_space<vmem>>, vector<32x288xf32>
    %cst_89 = arith.constant dense<0.000000e+00> : vector<32x256xf32>
    %148 = tpu.matmul %147, %146, %cst_89 {dimension_numbers = #tpu.dot_dimension_numbers<[1], [0], [0], [1], [0, 0, 1, 1], [], []>} : vector<32x288xf32>, vector<288x256xf32>, vector<32x256xf32> -> vector<32x256xf32>
    %149 = vector.broadcast %3 : vector<32x1xf32> to vector<32x256xf32>
    %150 = arith.addf %148, %149 : vector<32x256xf32>
    %151 = vector.broadcast %40 : vector<32x1xf32> to vector<32x256xf32>
    %152 = arith.addf %150, %151 : vector<32x256xf32>
    %c0_90 = arith.constant 0 : index
    %c0_91 = arith.constant 0 : index
    %153 = vector.load %arg10[%c0_90, %c0_91] : memref<32x32xf32, #tpu.memory_space<vmem>>, vector<32x32xf32>
    %cst_92 = arith.constant dense<0.000000e+00> : vector<32x256xf32>
    %154 = tpu.matmul %153, %152, %cst_92 {dimension_numbers = #tpu.dot_dimension_numbers<[1], [0], [0], [1], [0, 0, 1, 1], [], []>} : vector<32x32xf32>, vector<32x256xf32>, vector<32x256xf32> -> vector<32x256xf32>
    %c0_93 = arith.constant 0 : index
    %c0_94 = arith.constant 0 : index
    %155 = vector.load %arg10[%c0_93, %c0_94] : memref<32x32xf32, #tpu.memory_space<vmem>>, vector<32x32xf32>
    %156 = arith.mulf %152, %152 : vector<32x256xf32>
    %cst_95 = arith.constant dense<0.000000e+00> : vector<32x256xf32>
    %157 = tpu.matmul %155, %156, %cst_95 {dimension_numbers = #tpu.dot_dimension_numbers<[1], [0], [0], [1], [0, 0, 1, 1], [], []>} : vector<32x32xf32>, vector<32x256xf32>, vector<32x256xf32> -> vector<32x256xf32>
    %cst_96 = arith.constant dense<0.000000e+00> : vector<32xf32>
    %158 = vector.multi_reduction <add>, %154, %cst_96 [1] : vector<32x256xf32> to vector<32xf32>
    %159 = vector.shape_cast %158 : vector<32xf32> to vector<32x1xf32>
    %cst_97 = arith.constant 9.765625E-4 : f32
    %160 = vector.broadcast %cst_97 : f32 to vector<32x1xf32>
    %161 = arith.mulf %159, %160 : vector<32x1xf32>
    %cst_98 = arith.constant dense<0.000000e+00> : vector<32xf32>
    %162 = vector.multi_reduction <add>, %157, %cst_98 [1] : vector<32x256xf32> to vector<32xf32>
    %163 = vector.shape_cast %162 : vector<32xf32> to vector<32x1xf32>
    %cst_99 = arith.constant 9.765625E-4 : f32
    %164 = vector.broadcast %cst_99 : f32 to vector<32x1xf32>
    %165 = arith.mulf %163, %164 : vector<32x1xf32>
    %166 = arith.mulf %161, %161 : vector<32x1xf32>
    %167 = arith.subf %165, %166 : vector<32x1xf32>
    %cst_100 = arith.constant 0.000000e+00 : f32
    %168 = vector.broadcast %cst_100 : f32 to vector<32x1xf32>
    %169 = arith.maximumf %167, %168 : vector<32x1xf32>
    %170 = vector.broadcast %161 : vector<32x1xf32> to vector<32x256xf32>
    %171 = arith.subf %152, %170 : vector<32x256xf32>
    %cst_101 = arith.constant 9.99999974E-6 : f32
    %172 = vector.broadcast %cst_101 : f32 to vector<32x1xf32>
    %173 = arith.addf %169, %172 : vector<32x1xf32>
    %174 = math.rsqrt %173 : vector<32x1xf32>
    %175 = vector.broadcast %174 : vector<32x1xf32> to vector<32x256xf32>
    %176 = arith.mulf %171, %175 : vector<32x256xf32>
    %177 = vector.broadcast %4 : vector<32x1xf32> to vector<32x256xf32>
    %178 = arith.mulf %176, %177 : vector<32x256xf32>
    %179 = vector.broadcast %5 : vector<32x1xf32> to vector<32x256xf32>
    %180 = arith.addf %178, %179 : vector<32x256xf32>
    %181 = arith.negf %180 : vector<32x256xf32>
    %182 = math.exp %181 : vector<32x256xf32>
    %cst_102 = arith.constant 1.000000e+00 : f32
    %183 = vector.broadcast %cst_102 : f32 to vector<32x256xf32>
    %184 = arith.addf %183, %182 : vector<32x256xf32>
    %185 = arith.divf %183, %184 : vector<32x256xf32>
    %186 = arith.mulf %180, %185 : vector<32x256xf32>
    %c17_i32_103 = arith.constant 17 : i32
    %187 = tpu.dynamic_rotate %186 by %c17_i32_103 dim 1 : vector<32x256xf32>, i32 -> vector<32x256xf32>
    %c0_104 = arith.constant 0 : index
    %c0_105 = arith.constant 0 : index
    %188 = vector.load %arg11[%c0_104, %c0_105] : memref<9x256xf32, #tpu.memory_space<vmem>>, vector<1x256xf32>
    %189 = vector.broadcast %188 : vector<1x256xf32> to vector<32x256xf32>
    %190 = arith.mulf %187, %189 : vector<32x256xf32>
    %c16_i32_106 = arith.constant 16 : i32
    %191 = tpu.dynamic_rotate %186 by %c16_i32_106 dim 1 : vector<32x256xf32>, i32 -> vector<32x256xf32>
    %c1_107 = arith.constant 1 : index
    %c0_108 = arith.constant 0 : index
    %192 = vector.load %arg11[%c1_107, %c0_108] : memref<9x256xf32, #tpu.memory_space<vmem>>, vector<1x256xf32>
    %193 = vector.broadcast %192 : vector<1x256xf32> to vector<32x256xf32>
    %194 = arith.mulf %191, %193 : vector<32x256xf32>
    %c15_i32_109 = arith.constant 15 : i32
    %195 = tpu.dynamic_rotate %186 by %c15_i32_109 dim 1 : vector<32x256xf32>, i32 -> vector<32x256xf32>
    %c2_110 = arith.constant 2 : index
    %c0_111 = arith.constant 0 : index
    %196 = vector.load %arg11[%c2_110, %c0_111] : memref<9x256xf32, #tpu.memory_space<vmem>>, vector<1x256xf32>
    %197 = vector.broadcast %196 : vector<1x256xf32> to vector<32x256xf32>
    %198 = arith.mulf %195, %197 : vector<32x256xf32>
    %c1_i32_112 = arith.constant 1 : i32
    %199 = tpu.dynamic_rotate %186 by %c1_i32_112 dim 1 : vector<32x256xf32>, i32 -> vector<32x256xf32>
    %c3_113 = arith.constant 3 : index
    %c0_114 = arith.constant 0 : index
    %200 = vector.load %arg11[%c3_113, %c0_114] : memref<9x256xf32, #tpu.memory_space<vmem>>, vector<1x256xf32>
    %201 = vector.broadcast %200 : vector<1x256xf32> to vector<32x256xf32>
    %202 = arith.mulf %199, %201 : vector<32x256xf32>
    %c255_i32_115 = arith.constant 255 : i32
    %203 = tpu.dynamic_rotate %186 by %c255_i32_115 dim 1 : vector<32x256xf32>, i32 -> vector<32x256xf32>
    %c5_116 = arith.constant 5 : index
    %c0_117 = arith.constant 0 : index
    %204 = vector.load %arg11[%c5_116, %c0_117] : memref<9x256xf32, #tpu.memory_space<vmem>>, vector<1x256xf32>
    %205 = vector.broadcast %204 : vector<1x256xf32> to vector<32x256xf32>
    %206 = arith.mulf %203, %205 : vector<32x256xf32>
    %c241_i32_118 = arith.constant 241 : i32
    %207 = tpu.dynamic_rotate %186 by %c241_i32_118 dim 1 : vector<32x256xf32>, i32 -> vector<32x256xf32>
    %c6_119 = arith.constant 6 : index
    %c0_120 = arith.constant 0 : index
    %208 = vector.load %arg11[%c6_119, %c0_120] : memref<9x256xf32, #tpu.memory_space<vmem>>, vector<1x256xf32>
    %209 = vector.broadcast %208 : vector<1x256xf32> to vector<32x256xf32>
    %210 = arith.mulf %207, %209 : vector<32x256xf32>
    %c240_i32_121 = arith.constant 240 : i32
    %211 = tpu.dynamic_rotate %186 by %c240_i32_121 dim 1 : vector<32x256xf32>, i32 -> vector<32x256xf32>
    %c7_122 = arith.constant 7 : index
    %c0_123 = arith.constant 0 : index
    %212 = vector.load %arg11[%c7_122, %c0_123] : memref<9x256xf32, #tpu.memory_space<vmem>>, vector<1x256xf32>
    %213 = vector.broadcast %212 : vector<1x256xf32> to vector<32x256xf32>
    %214 = arith.mulf %211, %213 : vector<32x256xf32>
    %c239_i32_124 = arith.constant 239 : i32
    %215 = tpu.dynamic_rotate %186 by %c239_i32_124 dim 1 : vector<32x256xf32>, i32 -> vector<32x256xf32>
    %c8_125 = arith.constant 8 : index
    %c0_126 = arith.constant 0 : index
    %216 = vector.load %arg11[%c8_125, %c0_126] : memref<9x256xf32, #tpu.memory_space<vmem>>, vector<1x256xf32>
    %217 = vector.broadcast %216 : vector<1x256xf32> to vector<32x256xf32>
    %218 = arith.mulf %215, %217 : vector<32x256xf32>
    %219 = tpu.concatenate %190, %194, %198, %202, %186, %206, %210, %214, %218 in 0 : vector<32x256xf32>, vector<32x256xf32>, vector<32x256xf32>, vector<32x256xf32>, vector<32x256xf32>, vector<32x256xf32>, vector<32x256xf32>, vector<32x256xf32>, vector<32x256xf32> -> vector<288x256xf32>
    %c0_127 = arith.constant 0 : index
    %c0_128 = arith.constant 0 : index
    %220 = vector.load %arg8[%c0_127, %c0_128] : memref<32x288xf32, #tpu.memory_space<vmem>>, vector<32x288xf32>
    %cst_129 = arith.constant dense<0.000000e+00> : vector<32x256xf32>
    %221 = tpu.matmul %220, %219, %cst_129 {dimension_numbers = #tpu.dot_dimension_numbers<[1], [0], [0], [1], [0, 0, 1, 1], [], []>} : vector<32x288xf32>, vector<288x256xf32>, vector<32x256xf32> -> vector<32x256xf32>
    %222 = vector.broadcast %6 : vector<32x1xf32> to vector<32x256xf32>
    %223 = arith.addf %221, %222 : vector<32x256xf32>
    %224 = arith.addf %223, %79 : vector<32x256xf32>
    %c0_130 = arith.constant 0 : index
    %c0_131 = arith.constant 0 : index
    %225 = vector.load %arg10[%c0_130, %c0_131] : memref<32x32xf32, #tpu.memory_space<vmem>>, vector<32x32xf32>
    %cst_132 = arith.constant dense<0.000000e+00> : vector<32x256xf32>
    %226 = tpu.matmul %225, %224, %cst_132 {dimension_numbers = #tpu.dot_dimension_numbers<[1], [0], [0], [1], [0, 0, 1, 1], [], []>} : vector<32x32xf32>, vector<32x256xf32>, vector<32x256xf32> -> vector<32x256xf32>
    %c0_133 = arith.constant 0 : index
    %c0_134 = arith.constant 0 : index
    %227 = vector.load %arg10[%c0_133, %c0_134] : memref<32x32xf32, #tpu.memory_space<vmem>>, vector<32x32xf32>
    %228 = arith.mulf %224, %224 : vector<32x256xf32>
    %cst_135 = arith.constant dense<0.000000e+00> : vector<32x256xf32>
    %229 = tpu.matmul %227, %228, %cst_135 {dimension_numbers = #tpu.dot_dimension_numbers<[1], [0], [0], [1], [0, 0, 1, 1], [], []>} : vector<32x32xf32>, vector<32x256xf32>, vector<32x256xf32> -> vector<32x256xf32>
    %cst_136 = arith.constant dense<0.000000e+00> : vector<32xf32>
    %230 = vector.multi_reduction <add>, %226, %cst_136 [1] : vector<32x256xf32> to vector<32xf32>
    %231 = vector.shape_cast %230 : vector<32xf32> to vector<32x1xf32>
    %cst_137 = arith.constant 9.765625E-4 : f32
    %232 = vector.broadcast %cst_137 : f32 to vector<32x1xf32>
    %233 = arith.mulf %231, %232 : vector<32x1xf32>
    %cst_138 = arith.constant dense<0.000000e+00> : vector<32xf32>
    %234 = vector.multi_reduction <add>, %229, %cst_138 [1] : vector<32x256xf32> to vector<32xf32>
    %235 = vector.shape_cast %234 : vector<32xf32> to vector<32x1xf32>
    %cst_139 = arith.constant 9.765625E-4 : f32
    %236 = vector.broadcast %cst_139 : f32 to vector<32x1xf32>
    %237 = arith.mulf %235, %236 : vector<32x1xf32>
    %238 = arith.mulf %233, %233 : vector<32x1xf32>
    %239 = arith.subf %237, %238 : vector<32x1xf32>
    %cst_140 = arith.constant 0.000000e+00 : f32
    %240 = vector.broadcast %cst_140 : f32 to vector<32x1xf32>
    %241 = arith.maximumf %239, %240 : vector<32x1xf32>
    %242 = vector.broadcast %233 : vector<32x1xf32> to vector<32x256xf32>
    %243 = arith.subf %224, %242 : vector<32x256xf32>
    %cst_141 = arith.constant 9.99999974E-6 : f32
    %244 = vector.broadcast %cst_141 : f32 to vector<32x1xf32>
    %245 = arith.addf %241, %244 : vector<32x1xf32>
    %246 = math.rsqrt %245 : vector<32x1xf32>
    %247 = vector.broadcast %246 : vector<32x1xf32> to vector<32x256xf32>
    %248 = arith.mulf %243, %247 : vector<32x256xf32>
    %249 = vector.broadcast %7 : vector<32x1xf32> to vector<32x256xf32>
    %250 = arith.mulf %248, %249 : vector<32x256xf32>
    %251 = vector.broadcast %8 : vector<32x1xf32> to vector<32x256xf32>
    %252 = arith.addf %250, %251 : vector<32x256xf32>
    %253 = arith.negf %252 : vector<32x256xf32>
    %254 = math.exp %253 : vector<32x256xf32>
    %cst_142 = arith.constant 1.000000e+00 : f32
    %255 = vector.broadcast %cst_142 : f32 to vector<32x256xf32>
    %256 = arith.addf %255, %254 : vector<32x256xf32>
    %257 = arith.divf %255, %256 : vector<32x256xf32>
    %258 = arith.mulf %252, %257 : vector<32x256xf32>
    %c17_i32_143 = arith.constant 17 : i32
    %259 = tpu.dynamic_rotate %258 by %c17_i32_143 dim 1 : vector<32x256xf32>, i32 -> vector<32x256xf32>
    %c0_144 = arith.constant 0 : index
    %c0_145 = arith.constant 0 : index
    %260 = vector.load %arg11[%c0_144, %c0_145] : memref<9x256xf32, #tpu.memory_space<vmem>>, vector<1x256xf32>
    %261 = vector.broadcast %260 : vector<1x256xf32> to vector<32x256xf32>
    %262 = arith.mulf %259, %261 : vector<32x256xf32>
    %c16_i32_146 = arith.constant 16 : i32
    %263 = tpu.dynamic_rotate %258 by %c16_i32_146 dim 1 : vector<32x256xf32>, i32 -> vector<32x256xf32>
    %c1_147 = arith.constant 1 : index
    %c0_148 = arith.constant 0 : index
    %264 = vector.load %arg11[%c1_147, %c0_148] : memref<9x256xf32, #tpu.memory_space<vmem>>, vector<1x256xf32>
    %265 = vector.broadcast %264 : vector<1x256xf32> to vector<32x256xf32>
    %266 = arith.mulf %263, %265 : vector<32x256xf32>
    %c15_i32_149 = arith.constant 15 : i32
    %267 = tpu.dynamic_rotate %258 by %c15_i32_149 dim 1 : vector<32x256xf32>, i32 -> vector<32x256xf32>
    %c2_150 = arith.constant 2 : index
    %c0_151 = arith.constant 0 : index
    %268 = vector.load %arg11[%c2_150, %c0_151] : memref<9x256xf32, #tpu.memory_space<vmem>>, vector<1x256xf32>
    %269 = vector.broadcast %268 : vector<1x256xf32> to vector<32x256xf32>
    %270 = arith.mulf %267, %269 : vector<32x256xf32>
    %c1_i32_152 = arith.constant 1 : i32
    %271 = tpu.dynamic_rotate %258 by %c1_i32_152 dim 1 : vector<32x256xf32>, i32 -> vector<32x256xf32>
    %c3_153 = arith.constant 3 : index
    %c0_154 = arith.constant 0 : index
    %272 = vector.load %arg11[%c3_153, %c0_154] : memref<9x256xf32, #tpu.memory_space<vmem>>, vector<1x256xf32>
    %273 = vector.broadcast %272 : vector<1x256xf32> to vector<32x256xf32>
    %274 = arith.mulf %271, %273 : vector<32x256xf32>
    %c255_i32_155 = arith.constant 255 : i32
    %275 = tpu.dynamic_rotate %258 by %c255_i32_155 dim 1 : vector<32x256xf32>, i32 -> vector<32x256xf32>
    %c5_156 = arith.constant 5 : index
    %c0_157 = arith.constant 0 : index
    %276 = vector.load %arg11[%c5_156, %c0_157] : memref<9x256xf32, #tpu.memory_space<vmem>>, vector<1x256xf32>
    %277 = vector.broadcast %276 : vector<1x256xf32> to vector<32x256xf32>
    %278 = arith.mulf %275, %277 : vector<32x256xf32>
    %c241_i32_158 = arith.constant 241 : i32
    %279 = tpu.dynamic_rotate %258 by %c241_i32_158 dim 1 : vector<32x256xf32>, i32 -> vector<32x256xf32>
    %c6_159 = arith.constant 6 : index
    %c0_160 = arith.constant 0 : index
    %280 = vector.load %arg11[%c6_159, %c0_160] : memref<9x256xf32, #tpu.memory_space<vmem>>, vector<1x256xf32>
    %281 = vector.broadcast %280 : vector<1x256xf32> to vector<32x256xf32>
    %282 = arith.mulf %279, %281 : vector<32x256xf32>
    %c240_i32_161 = arith.constant 240 : i32
    %283 = tpu.dynamic_rotate %258 by %c240_i32_161 dim 1 : vector<32x256xf32>, i32 -> vector<32x256xf32>
    %c7_162 = arith.constant 7 : index
    %c0_163 = arith.constant 0 : index
    %284 = vector.load %arg11[%c7_162, %c0_163] : memref<9x256xf32, #tpu.memory_space<vmem>>, vector<1x256xf32>
    %285 = vector.broadcast %284 : vector<1x256xf32> to vector<32x256xf32>
    %286 = arith.mulf %283, %285 : vector<32x256xf32>
    %c239_i32_164 = arith.constant 239 : i32
    %287 = tpu.dynamic_rotate %258 by %c239_i32_164 dim 1 : vector<32x256xf32>, i32 -> vector<32x256xf32>
    %c8_165 = arith.constant 8 : index
    %c0_166 = arith.constant 0 : index
    %288 = vector.load %arg11[%c8_165, %c0_166] : memref<9x256xf32, #tpu.memory_space<vmem>>, vector<1x256xf32>
    %289 = vector.broadcast %288 : vector<1x256xf32> to vector<32x256xf32>
    %290 = arith.mulf %287, %289 : vector<32x256xf32>
    %291 = tpu.concatenate %262, %266, %270, %274, %258, %278, %282, %286, %290 in 0 : vector<32x256xf32>, vector<32x256xf32>, vector<32x256xf32>, vector<32x256xf32>, vector<32x256xf32>, vector<32x256xf32>, vector<32x256xf32>, vector<32x256xf32>, vector<32x256xf32> -> vector<288x256xf32>
    %c0_167 = arith.constant 0 : index
    %c0_168 = arith.constant 0 : index
    %292 = vector.load %arg9[%c0_167, %c0_168] : memref<4x288xf32, #tpu.memory_space<vmem>>, vector<4x288xf32>
    %cst_169 = arith.constant dense<0.000000e+00> : vector<4x256xf32>
    %293 = tpu.matmul %292, %291, %cst_169 {dimension_numbers = #tpu.dot_dimension_numbers<[1], [0], [0], [1], [0, 0, 1, 1], [], []>} : vector<4x288xf32>, vector<288x256xf32>, vector<4x256xf32> -> vector<4x256xf32>
    %294 = vector.broadcast %10 : vector<4x1xf32> to vector<4x256xf32>
    %295 = arith.addf %293, %294 : vector<4x256xf32>
    %c0_170 = arith.constant 0 : index
    %c0_171 = arith.constant 0 : index
    %c0_172 = arith.constant 0 : index
    %296 = vector.load %arg14[%c0_170, %c0_171, %c0_172] : memref<1x4x256xf32, #tpu.memory_space<vmem>>, vector<1x4x256xf32>
    %297 = vector.shape_cast %296 : vector<1x4x256xf32> to vector<4x256xf32>
    %298 = vector.shape_cast %295 : vector<4x256xf32> to vector<1x4x256xf32>
    tpu.vector_store %arg14[%c0_170, %c0_171, %c0_172], %298 {strides = array<i32>} : memref<1x4x256xf32, #tpu.memory_space<vmem>>, vector<1x4x256xf32>,
    return
  }
  func.func @transform_0(%arg0: i32) -> (i32, i32, i32) {
    %c0_i32 = arith.constant 0 : i32
    %c0_i32_0 = arith.constant 0 : i32
    %c0_i32_1 = arith.constant 0 : i32
    return %arg0, %c0_i32, %c0_i32_0 : i32, i32, i32
  }
  func.func @transform_1(%arg0: i32) -> (i32, i32, i32) {
    %c0_i32 = arith.constant 0 : i32
    %c0_i32_0 = arith.constant 0 : i32
    %c0_i32_1 = arith.constant 0 : i32
    return %arg0, %c0_i32, %c0_i32_0 : i32, i32, i32
  }
  func.func @transform_2(%arg0: i32) -> (i32, i32) {
    %c0_i32 = arith.constant 0 : i32
    %c0_i32_0 = arith.constant 0 : i32
    %c0_i32_1 = arith.constant 0 : i32
    return %c0_i32, %c0_i32_0 : i32, i32
  }
  func.func @transform_3(%arg0: i32) -> (i32, i32) {
    %c0_i32 = arith.constant 0 : i32
    %c0_i32_0 = arith.constant 0 : i32
    %c0_i32_1 = arith.constant 0 : i32
    return %c0_i32, %c0_i32_0 : i32, i32
  }
  func.func @transform_4(%arg0: i32) -> (i32, i32) {
    %c0_i32 = arith.constant 0 : i32
    %c0_i32_0 = arith.constant 0 : i32
    %c0_i32_1 = arith.constant 0 : i32
    return %c0_i32, %c0_i32_0 : i32, i32
  }
  func.func @transform_5(%arg0: i32) -> (i32, i32) {
    %c0_i32 = arith.constant 0 : i32
    %c0_i32_0 = arith.constant 0 : i32
    %c0_i32_1 = arith.constant 0 : i32
    return %c0_i32, %c0_i32_0 : i32, i32
  }
  func.func @transform_6(%arg0: i32) -> (i32, i32) {
    %c0_i32 = arith.constant 0 : i32
    %c0_i32_0 = arith.constant 0 : i32
    %c0_i32_1 = arith.constant 0 : i32
    return %c0_i32, %c0_i32_0 : i32, i32
  }
  func.func @transform_7(%arg0: i32) -> (i32, i32) {
    %c0_i32 = arith.constant 0 : i32
    %c0_i32_0 = arith.constant 0 : i32
    %c0_i32_1 = arith.constant 0 : i32
    return %c0_i32, %c0_i32_0 : i32, i32
  }
  func.func @transform_8(%arg0: i32) -> (i32, i32) {
    %c0_i32 = arith.constant 0 : i32
    %c0_i32_0 = arith.constant 0 : i32
    %c0_i32_1 = arith.constant 0 : i32
    return %c0_i32, %c0_i32_0 : i32, i32
  }
  func.func @transform_9(%arg0: i32) -> (i32, i32) {
    %c0_i32 = arith.constant 0 : i32
    %c0_i32_0 = arith.constant 0 : i32
    %c0_i32_1 = arith.constant 0 : i32
    return %c0_i32, %c0_i32_0 : i32, i32
  }
  func.func @transform_10(%arg0: i32) -> (i32, i32) {
    %c0_i32 = arith.constant 0 : i32
    %c0_i32_0 = arith.constant 0 : i32
    %c0_i32_1 = arith.constant 0 : i32
    return %c0_i32, %c0_i32_0 : i32, i32
  }
  func.func @transform_11(%arg0: i32) -> (i32, i32) {
    %c0_i32 = arith.constant 0 : i32
    %c0_i32_0 = arith.constant 0 : i32
    %c0_i32_1 = arith.constant 0 : i32
    return %c0_i32, %c0_i32_0 : i32, i32
  }
  func.func @transform_12(%arg0: i32) -> (i32, i32) {
    %c0_i32 = arith.constant 0 : i32
    %c0_i32_0 = arith.constant 0 : i32
    %c0_i32_1 = arith.constant 0 : i32
    return %c0_i32, %c0_i32_0 : i32, i32
  }
  func.func @transform_13(%arg0: i32) -> (i32, i32, i32) {
    %c0_i32 = arith.constant 0 : i32
    %c0_i32_0 = arith.constant 0 : i32
    %c0_i32_1 = arith.constant 0 : i32
    return %arg0, %c0_i32, %c0_i32_0 : i32, i32, i32
  }
}

</mosaic_0001>

<llo_original>
// kernel: tpu_custom_call.1
$region0: #{tpu_custom_call.1}
  #allocation0 [shape = 'u32[]', space=smem, size = 0x4, offset = 0x4, fixed_abs, tag = 'smem constant byte address 0x4 - core index']
  #allocation1 [shape = 'u32[144,128]{1,0:T(1,128)}', space=vmem, size = 0x12000, scoped, tag = 'internal scratch']
  %s0 = inlined_call_operand.vmem [shape: f32[2,32,1], index: 0, kind: input, shape index: {}]
  %s1 = inlined_call_operand.vmem [shape: f32[2,8,256], index: 1, kind: input, shape index: {}]
  %s2 = inlined_call_operand.vmem [shape: f32[128,32], index: 2, kind: input, shape index: {}]
  %s3 = inlined_call_operand.vmem [shape: f32[128,128], index: 3, kind: input, shape index: {}]
  %s4 = inlined_call_operand.vmem [shape: f32[32,128], index: 4, kind: input, shape index: {}]
  %s5 = inlined_call_operand.hbm [shape: f32[32,72], index: 5, kind: input, shape index: {}]
  %s6 = inlined_call_operand.vmem [shape: f32[32,288], index: 6, kind: input, shape index: {}]
  %s7 = inlined_call_operand.vmem [shape: f32[32,288], index: 7, kind: input, shape index: {}]
  %s8 = inlined_call_operand.hbm [shape: f32[4,288], index: 8, kind: input, shape index: {}]
  %s9 = inlined_call_operand.hbm [shape: f32[32,32], index: 9, kind: input, shape index: {}]
  %s10 = inlined_call_operand.hbm [shape: f32[9,256], index: 10, kind: input, shape index: {}]
  %s11 = inlined_call_operand.vmem [shape: f32[32,11], index: 11, kind: input, shape index: {}]
  %s12 = inlined_call_operand.vmem [shape: f32[128,2], index: 12, kind: input, shape index: {}]
  %s13 = inlined_call_operand.hbm [shape: f32[2,4,256], index: 13, kind: output, shape index: {}]
  %s14 = sld [smem:[#allocation0]]
  $region101: #{tpu_custom_call.1} parent=0
    _
  %s16 = ssub.s32 1, %s14
  %s17 = scalar_select 0, %s16, %s14
  $region1: #{tpu_custom_call.1} parent=0
    #allocation2 [shape = 'u8[16384]{0}', space=vmem, size = 0x4000, scoped, tag = 'input window, operand 5, single buffered']
    #allocation3 [shape = 's32[2]{0}', space=sflag, size = 0x8, scoped, tag = 'scoped memory for tpu_custom_call.1']
    #allocation4 [shape = 's32[2]{0}', space=sflag, size = 0x8, scoped, tag = 'scoped memory for tpu_custom_call.1']
    #allocation5 [shape = 'u8[6144]{0}', space=vmem, size = 0x1800, scoped, tag = 'input window, operand 8, single buffered']
    #allocation6 [shape = 's32[1]{0}', space=sflag, size = 0x4, scoped, tag = 'scoped memory for tpu_custom_call.1']
    #allocation7 [shape = 'u8[16384]{0}', space=vmem, size = 0x4000, scoped, tag = 'input window, operand 9, single buffered']
    #allocation8 [shape = 'u8[16384]{0}', space=vmem, size = 0x4000, scoped, tag = 'input window, operand 10, single buffered']
    #allocation9 [shape = 's32[1]{0}', space=sflag, size = 0x4, scoped, tag = 'scoped memory for tpu_custom_call.1']
    #allocation10 [shape = 'u8[8192]{0}', space=vmem, size = 0x2000, scoped, tag = 'output window, operand 0']
    %18 = vsyncpa [#allocation3], 0
    %19 = vsyncpa [#allocation6], 0
    %20 = vsyncpa [#allocation9], 0
    %21 = vsyncpa [#allocation4], 0
    %s22 = scalar_lea.sflag [#allocation4], 1
    %23 = vsyncpa %s22, 0
    loop: start=0, step=1, limit=4
    $region2: #{tpu_custom_call.1} parent=1 // loop_pre_header
      _
    $region3: #{tpu_custom_call.1} parent=1 // loop_header
      %s25 = sphi 0, %s29
      %p26 = scmp.ge.s32.totalorder %s25, 4
      %s35 = sphi 0, %s37
      %s38 = sphi 0, %s35
      %s39 = sphi 0, %s38
      %s55 = sphi 0, %s39
      %s61 = sphi 0, %s63
      %s64 = sphi 0, %s61
      %s65 = sphi 0, %s64
      %s81 = sphi 0, %s65
      %s85 = sphi 0, %s85
      %s87 = sphi 0, %s85
      %s88 = sphi 0, %s87
      %s102 = sphi 0, %s88
      %s106 = sphi 0, %s106
      %s108 = sphi 0, %s106
      %s109 = sphi 0, %s108
      %s123 = sphi 0, %s109
      %s127 = sphi 0, %s127
      %s129 = sphi 0, %s127
      %s130 = sphi 0, %s129
      %s144 = sphi 0, %s130
      %s148 = sphi 0, %s148
      %s150 = sphi 0, %s148
      %s151 = sphi 0, %s150
      %s165 = sphi 0, %s151
      %s169 = sphi 0, %s169
      %s171 = sphi 0, %s169
      %s172 = sphi 0, %s171
      %s186 = sphi 0, %s172
      %s190 = sphi 0, %s190
      %s192 = sphi 0, %s190
      %s193 = sphi 0, %s192
      %s207 = sphi 0, %s193
      %s211 = sphi 0, %s211
      %s213 = sphi 0, %s211
      %s214 = sphi 0, %s213
      %s228 = sphi 0, %s214
      %s232 = sphi 0, %s232
      %s234 = sphi 0, %s232
      %s235 = sphi 0, %s234
      %s249 = sphi 0, %s235
      %s253 = sphi 0, %s253
      %s255 = sphi 0, %s253
      %s256 = sphi 0, %s255
      %s270 = sphi 0, %s256
      %s274 = sphi 0, %s274
      %s276 = sphi 0, %s274
      %s277 = sphi 0, %s276
      %s291 = sphi 0, %s277
      %s295 = sphi 0, %s295
      %s297 = sphi 0, %s295
      %s298 = sphi 0, %s297
      %s312 = sphi 0, %s298
      %s318 = sphi 0, %s320
      %s321 = sphi 0, %s318
      %s322 = sphi 0, %s321
      %s338 = sphi 0, %s322
    $region4: #{tpu_custom_call.1} parent=1 // loop_header_branch
      %28 = sbr.rel (%p26) target = $region8
    $region5: #{tpu_custom_call.1} parent=1 // loop_body
      %s30 = ssub.s32 %s25, 1
      %s31 = ssub.s32 %s25, 2
      %s32 = sadd.s32 %s25, 1
      %s33 = ssub.s32 %s25, %s32
      %p34 = scmp.eq.s32.totalorder %s33, 0
      %s36 = sadd.s32 %s35, 1
      %s37 = scalar_select %p34, %s35, %s36
      %p40 = pneg %p34
      %p41 = scmp.eq.s32.totalorder %s25, 1
      %p42 = por %p40, %p41
      %p43 = scmp.ne.s32.totalorder %s35, %s38
      %p44 = scmp.eq.s32.totalorder %s25, 0
      %p45 = por %p43, %p44
      %p46 = scmp.ne.s32.totalorder %s35, %s38
      %p47 = scmp.eq.s32.totalorder %s30, 1
      %p48 = por %p46, %p47
      %p49 = scmp.ne.s32.totalorder %s38, %s39
      %p50 = scmp.eq.s32.totalorder %s30, 0
      %p51 = por %p49, %p50
      %p52 = scmp.ne.s32.totalorder %s38, %s39
      %p53 = scmp.eq.s32.totalorder %s31, 1
      %p54 = por %p52, %p53
      %p56 = scmp.ne.s32.totalorder %s39, %s55
      %p57 = scmp.eq.s32.totalorder %s31, 0
      %p58 = por %p56, %p57
      %s59 = ssub.s32 %s25, %s32
      %p60 = scmp.eq.s32.totalorder %s59, 0
      %s62 = sadd.s32 %s61, 1
      %s63 = scalar_select %p60, %s61, %s62
      %p66 = pneg %p60
      %p67 = scmp.eq.s32.totalorder %s25, 1
      %p68 = por %p66, %p67
      %p69 = scmp.ne.s32.totalorder %s61, %s64
      %p70 = scmp.eq.s32.totalorder %s25, 0
      %p71 = por %p69, %p70
      %p72 = scmp.ne.s32.totalorder %s61, %s64
      %p73 = scmp.eq.s32.totalorder %s30, 1
      %p74 = por %p72, %p73
      %p75 = scmp.ne.s32.totalorder %s64, %s65
      %p76 = scmp.eq.s32.totalorder %s30, 0
      %p77 = por %p75, %p76
      %p78 = scmp.ne.s32.totalorder %s64, %s65
      %p79 = scmp.eq.s32.totalorder %s31, 1
      %p80 = por %p78, %p79
      %p82 = scmp.ne.s32.totalorder %s65, %s81
      %p83 = scmp.eq.s32.totalorder %s31, 0
      %p84 = por %p82, %p83
      %s86 = sadd.s32 %s85, 1
      %p89 = scmp.eq.s32.totalorder %s25, 1
      %p90 = scmp.ne.s32.totalorder %s85, %s87
      %p91 = scmp.eq.s32.totalorder %s25, 0
      %p92 = por %p90, %p91
      %p93 = scmp.ne.s32.totalorder %s85, %s87
      %p94 = scmp.eq.s32.totalorder %s30, 1
      %p95 = por %p93, %p94
      %p96 = scmp.ne.s32.totalorder %s87, %s88
      %p97 = scmp.eq.s32.totalorder %s30, 0
      %p98 = por %p96, %p97
      %p99 = scmp.ne.s32.totalorder %s87, %s88
      %p100 = scmp.eq.s32.totalorder %s31, 1
      %p101 = por %p99, %p100
      %p103 = scmp.ne.s32.totalorder %s88, %s102
      %p104 = scmp.eq.s32.totalorder %s31, 0
      %p105 = por %p103, %p104
      %s107 = sadd.s32 %s106, 1
      %p110 = scmp.eq.s32.totalorder %s25, 1
      %p111 = scmp.ne.s32.totalorder %s106, %s108
      %p112 = scmp.eq.s32.totalorder %s25, 0
      %p113 = por %p111, %p112
      %p114 = scmp.ne.s32.totalorder %s106, %s108
      %p115 = scmp.eq.s32.totalorder %s30, 1
      %p116 = por %p114, %p115
      %p117 = scmp.ne.s32.totalorder %s108, %s109
      %p118 = scmp.eq.s32.totalorder %s30, 0
      %p119 = por %p117, %p118
      %p120 = scmp.ne.s32.totalorder %s108, %s109
      %p121 = scmp.eq.s32.totalorder %s31, 1
      %p122 = por %p120, %p121
      %p124 = scmp.ne.s32.totalorder %s109, %s123
      %p125 = scmp.eq.s32.totalorder %s31, 0
      %p126 = por %p124, %p125
      %s128 = sadd.s32 %s127, 1
      %p131 = scmp.eq.s32.totalorder %s25, 1
      %p132 = scmp.ne.s32.totalorder %s127, %s129
      %p133 = scmp.eq.s32.totalorder %s25, 0
      %p134 = por %p132, %p133
      %p135 = scmp.ne.s32.totalorder %s127, %s129
      %p136 = scmp.eq.s32.totalorder %s30, 1
      %p137 = por %p135, %p136
      %p138 = scmp.ne.s32.totalorder %s129, %s130
      %p139 = scmp.eq.s32.totalorder %s30, 0
      %p140 = por %p138, %p139
      %p141 = scmp.ne.s32.totalorder %s129, %s130
      %p142 = scmp.eq.s32.totalorder %s31, 1
      %p143 = por %p141, %p142
      %p145 = scmp.ne.s32.totalorder %s130, %s144
      %p146 = scmp.eq.s32.totalorder %s31, 0
      %p147 = por %p145, %p146
      %s149 = sadd.s32 %s148, 1
      %p152 = scmp.eq.s32.totalorder %s25, 1
      %p153 = scmp.ne.s32.totalorder %s148, %s150
      %p154 = scmp.eq.s32.totalorder %s25, 0
      %p155 = por %p153, %p154
      %p156 = scmp.ne.s32.totalorder %s148, %s150
      %p157 = scmp.eq.s32.totalorder %s30, 1
      %p158 = por %p156, %p157
      %p159 = scmp.ne.s32.totalorder %s150, %s151
      %p160 = scmp.eq.s32.totalorder %s30, 0
      %p161 = por %p159, %p160
      %p162 = scmp.ne.s32.totalorder %s150, %s151
      %p163 = scmp.eq.s32.totalorder %s31, 1
      %p164 = por %p162, %p163
      %p166 = scmp.ne.s32.totalorder %s151, %s165
      %p167 = scmp.eq.s32.totalorder %s31, 0
      %p168 = por %p166, %p167
      %s170 = sadd.s32 %s169, 1
      %p173 = scmp.eq.s32.totalorder %s25, 1
      %p174 = scmp.ne.s32.totalorder %s169, %s171
      %p175 = scmp.eq.s32.totalorder %s25, 0
      %p176 = por %p174, %p175
      %p177 = scmp.ne.s32.totalorder %s169, %s171
      %p178 = scmp.eq.s32.totalorder %s30, 1
      %p179 = por %p177, %p178
      %p180 = scmp.ne.s32.totalorder %s171, %s172
      %p181 = scmp.eq.s32.totalorder %s30, 0
      %p182 = por %p180, %p181
      %p183 = scmp.ne.s32.totalorder %s171, %s172
      %p184 = scmp.eq.s32.totalorder %s31, 1
      %p185 = por %p183, %p184
      %p187 = scmp.ne.s32.totalorder %s172, %s186
      %p188 = scmp.eq.s32.totalorder %s31, 0
      %p189 = por %p187, %p188
      %s191 = sadd.s32 %s190, 1
      %p194 = scmp.eq.s32.totalorder %s25, 1
      %p195 = scmp.ne.s32.totalorder %s190, %s192
      %p196 = scmp.eq.s32.totalorder %s25, 0
      %p197 = por %p195, %p196
      %p198 = scmp.ne.s32.totalorder %s190, %s192
      %p199 = scmp.eq.s32.totalorder %s30, 1
      %p200 = por %p198, %p199
      %p201 = scmp.ne.s32.totalorder %s192, %s193
      %p202 = scmp.eq.s32.totalorder %s30, 0
      %p203 = por %p201, %p202
      %p204 = scmp.ne.s32.totalorder %s192, %s193
      %p205 = scmp.eq.s32.totalorder %s31, 1
      %p206 = por %p204, %p205
      %p208 = scmp.ne.s32.totalorder %s193, %s207
      %p209 = scmp.eq.s32.totalorder %s31, 0
      %p210 = por %p208, %p209
      %s212 = sadd.s32 %s211, 1
      %p215 = scmp.eq.s32.totalorder %s25, 1
      %p216 = scmp.ne.s32.totalorder %s211, %s213
      %p217 = scmp.eq.s32.totalorder %s25, 0
      %p218 = por %p216, %p217
      %p219 = scmp.ne.s32.totalorder %s211, %s213
      %p220 = scmp.eq.s32.totalorder %s30, 1
      %p221 = por %p219, %p220
      %p222 = scmp.ne.s32.totalorder %s213, %s214
      %p223 = scmp.eq.s32.totalorder %s30, 0
      %p224 = por %p222, %p223
      %p225 = scmp.ne.s32.totalorder %s213, %s214
      %p226 = scmp.eq.s32.totalorder %s31, 1
      %p227 = por %p225, %p226
      %p229 = scmp.ne.s32.totalorder %s214, %s228
      %p230 = scmp.eq.s32.totalorder %s31, 0
      %p231 = por %p229, %p230
      %s233 = sadd.s32 %s232, 1
      %p236 = scmp.eq.s32.totalorder %s25, 1
      %p237 = scmp.ne.s32.totalorder %s232, %s234
      %p238 = scmp.eq.s32.totalorder %s25, 0
      %p239 = por %p237, %p238
      %p240 = scmp.ne.s32.totalorder %s232, %s234
      %p241 = scmp.eq.s32.totalorder %s30, 1
      %p242 = por %p240, %p241
      %p243 = scmp.ne.s32.totalorder %s234, %s235
      %p244 = scmp.eq.s32.totalorder %s30, 0
      %p245 = por %p243, %p244
      %p246 = scmp.ne.s32.totalorder %s234, %s235
      %p247 = scmp.eq.s32.totalorder %s31, 1
      %p248 = por %p246, %p247
      %p250 = scmp.ne.s32.totalorder %s235, %s249
      %p251 = scmp.eq.s32.totalorder %s31, 0
      %p252 = por %p250, %p251
      %s254 = sadd.s32 %s253, 1
      %p257 = scmp.eq.s32.totalorder %s25, 1
      %p258 = scmp.ne.s32.totalorder %s253, %s255
      %p259 = scmp.eq.s32.totalorder %s25, 0
      %p260 = por %p258, %p259
      %p261 = scmp.ne.s32.totalorder %s253, %s255
      %p262 = scmp.eq.s32.totalorder %s30, 1
      %p263 = por %p261, %p262
      %p264 = scmp.ne.s32.totalorder %s255, %s256
      %p265 = scmp.eq.s32.totalorder %s30, 0
      %p266 = por %p264, %p265
      %p267 = scmp.ne.s32.totalorder %s255, %s256
      %p268 = scmp.eq.s32.totalorder %s31, 1
      %p269 = por %p267, %p268
      %p271 = scmp.ne.s32.totalorder %s256, %s270
      %p272 = scmp.eq.s32.totalorder %s31, 0
      %p273 = por %p271, %p272
      %s275 = sadd.s32 %s274, 1
      %p278 = scmp.eq.s32.totalorder %s25, 1
      %p279 = scmp.ne.s32.totalorder %s274, %s276
      %p280 = scmp.eq.s32.totalorder %s25, 0
      %p281 = por %p279, %p280
      %p282 = scmp.ne.s32.totalorder %s274, %s276
      %p283 = scmp.eq.s32.totalorder %s30, 1
      %p284 = por %p282, %p283
      %p285 = scmp.ne.s32.totalorder %s276, %s277
      %p286 = scmp.eq.s32.totalorder %s30, 0
      %p287 = por %p285, %p286
      %p288 = scmp.ne.s32.totalorder %s276, %s277
      %p289 = scmp.eq.s32.totalorder %s31, 1
      %p290 = por %p288, %p289
      %p292 = scmp.ne.s32.totalorder %s277, %s291
      %p293 = scmp.eq.s32.totalorder %s31, 0
      %p294 = por %p292, %p293
      %s296 = sadd.s32 %s295, 1
      %p299 = scmp.eq.s32.totalorder %s25, 1
      %p300 = scmp.ne.s32.totalorder %s295, %s297
      %p301 = scmp.eq.s32.totalorder %s25, 0
      %p302 = por %p300, %p301
      %p303 = scmp.ne.s32.totalorder %s295, %s297
      %p304 = scmp.eq.s32.totalorder %s30, 1
      %p305 = por %p303, %p304
      %p306 = scmp.ne.s32.totalorder %s297, %s298
      %p307 = scmp.eq.s32.totalorder %s30, 0
      %p308 = por %p306, %p307
      %p309 = scmp.ne.s32.totalorder %s297, %s298
      %p310 = scmp.eq.s32.totalorder %s31, 1
      %p311 = por %p309, %p310
      %p313 = scmp.ne.s32.totalorder %s298, %s312
      %p314 = scmp.eq.s32.totalorder %s31, 0
      %p315 = por %p313, %p314
      %s316 = ssub.s32 %s25, %s32
      %p317 = scmp.eq.s32.totalorder %s316, 0
      %s319 = sadd.s32 %s318, 1
      %s320 = scalar_select %p317, %s318, %s319
      %p323 = pneg %p317
      %p324 = scmp.eq.s32.totalorder %s25, 1
      %p325 = por %p323, %p324
      %p326 = scmp.ne.s32.totalorder %s318, %s321
      %p327 = scmp.eq.s32.totalorder %s25, 0
      %p328 = por %p326, %p327
      %p329 = scmp.ne.s32.totalorder %s318, %s321
      %p330 = scmp.eq.s32.totalorder %s30, 1
      %p331 = por %p329, %p330
      %p332 = scmp.ne.s32.totalorder %s321, %s322
      %p333 = scmp.eq.s32.totalorder %s30, 0
      %p334 = por %p332, %p333
      %p335 = scmp.ne.s32.totalorder %s321, %s322
      %p336 = scmp.eq.s32.totalorder %s31, 1
      %p337 = por %p335, %p336
      %p339 = scmp.ne.s32.totalorder %s322, %s338
      %p340 = scmp.eq.s32.totalorder %s31, 0
      %p341 = por %p339, %p340
      %p342 = scmp.le.s32.totalorder 1, %s25
      %p343 = scmp.lt.s32.totalorder %s25, 3
      %p344 = pnand %p342, %p343
      %p345 = pneg %p344
      // Predicated region
      $region9: #{tpu_custom_call.1} parent=5 // pred_check
        _
      $region10: #{tpu_custom_call.1} parent=5 // pred_check_branch
        %347 = sbr.rel (%p344) target = $region12
      $region11: #{tpu_custom_call.1} parent=5 // pred_region
        %s348 = ssub.s32 %s25, 1
        // Predicated region
        $region13: #{tpu_custom_call.1} parent=11 // pred_check
          %p349 = pneg %p98
        $region14: #{tpu_custom_call.1} parent=11 // pred_check_branch
          %351 = sbr.rel (%p349) target = $region16
        $region15: #{tpu_custom_call.1} parent=11 // pred_region
          _
        $region16: #{tpu_custom_call.1} parent=11 // pred_fallthru
          _
        // Predicated region
        $region17: #{tpu_custom_call.1} parent=11 // pred_check
          %p352 = pneg %p119
        $region18: #{tpu_custom_call.1} parent=11 // pred_check_branch
          %354 = sbr.rel (%p352) target = $region20
        $region19: #{tpu_custom_call.1} parent=11 // pred_region
          _
        $region20: #{tpu_custom_call.1} parent=11 // pred_fallthru
          _
        // Predicated region
        $region21: #{tpu_custom_call.1} parent=11 // pred_check
          %p355 = pneg %p140
        $region22: #{tpu_custom_call.1} parent=11 // pred_check_branch
          %357 = sbr.rel (%p355) target = $region24
        $region23: #{tpu_custom_call.1} parent=11 // pred_region
          _
        $region24: #{tpu_custom_call.1} parent=11 // pred_fallthru
          _
        // Predicated region
        $region25: #{tpu_custom_call.1} parent=11 // pred_check
          %p358 = pneg %p161
        $region26: #{tpu_custom_call.1} parent=11 // pred_check_branch
          %360 = sbr.rel (%p358) target = $region28
        $region27: #{tpu_custom_call.1} parent=11 // pred_region
          %s362 = ssub.s32 512, 512
          %363 = vsyncadd [#allocation3], %s362
          %s364 = sshll.u32 [#allocation2], 4
          %s365 = int_to_ptr.vmem [resolvable:$true] %s364
          %370 = dma.hbm_to_vmem [thread:$0]  %s5, 512, %s365, [#allocation3], 128, 128, 8
        $region28: #{tpu_custom_call.1} parent=11 // pred_fallthru
          _
        // Predicated region
        $region29: #{tpu_custom_call.1} parent=11 // pred_check
          %p371 = pneg %p182
        $region30: #{tpu_custom_call.1} parent=11 // pred_check_branch
          %373 = sbr.rel (%p371) target = $region32
        $region31: #{tpu_custom_call.1} parent=11 // pred_region
          _
        $region32: #{tpu_custom_call.1} parent=11 // pred_fallthru
          _
        // Predicated region
        $region33: #{tpu_custom_call.1} parent=11 // pred_check
          %p374 = pneg %p203
        $region34: #{tpu_custom_call.1} parent=11 // pred_check_branch
          %376 = sbr.rel (%p374) target = $region36
        $region35: #{tpu_custom_call.1} parent=11 // pred_region
          _
        $region36: #{tpu_custom_call.1} parent=11 // pred_fallthru
          _
        // Predicated region
        $region37: #{tpu_custom_call.1} parent=11 // pred_check
          %p377 = pneg %p224
        $region38: #{tpu_custom_call.1} parent=11 // pred_check_branch
          %379 = sbr.rel (%p377) target = $region40
        $region39: #{tpu_custom_call.1} parent=11 // pred_region
          %s381 = ssub.s32 192, 192
          %382 = vsyncadd [#allocation6], %s381
          %s384 = sshll.u32 [#allocation5], 4
          %s385 = int_to_ptr.vmem [resolvable:$true] %s384
          %387 = dma.hbm_to_vmem [thread:$0]  %s8, 192, %s385, [#allocation6]
        $region40: #{tpu_custom_call.1} parent=11 // pred_fallthru
          _
        // Predicated region
        $region41: #{tpu_custom_call.1} parent=11 // pred_check
          %p388 = pneg %p245
        $region42: #{tpu_custom_call.1} parent=11 // pred_check_branch
          %390 = sbr.rel (%p388) target = $region44
        $region43: #{tpu_custom_call.1} parent=11 // pred_region
          %s392 = ssub.s32 512, 512
          %393 = vsyncadd [#allocation6], %s392
          %s394 = sshll.u32 [#allocation7], 4
          %s395 = int_to_ptr.vmem [resolvable:$true] %s394
          %400 = dma.hbm_to_vmem [thread:$0]  %s9, 512, %s395, [#allocation6], 128, 128, 8
        $region44: #{tpu_custom_call.1} parent=11 // pred_fallthru
          _
        // Predicated region
        $region45: #{tpu_custom_call.1} parent=11 // pred_check
          %p401 = pneg %p266
        $region46: #{tpu_custom_call.1} parent=11 // pred_check_branch
          %403 = sbr.rel (%p401) target = $region48
        $region47: #{tpu_custom_call.1} parent=11 // pred_region
          %s405 = ssub.s32 512, 512
          %406 = vsyncadd [#allocation9], %s405
          %s407 = sshll.u32 [#allocation8], 4
          %s408 = int_to_ptr.vmem [resolvable:$true] %s407
          %413 = dma.hbm_to_vmem [thread:$0]  %s10, 512, %s408, [#allocation9], 256, 256, 16
        $region48: #{tpu_custom_call.1} parent=11 // pred_fallthru
          _
        // Predicated region
        $region49: #{tpu_custom_call.1} parent=11 // pred_check
          %p414 = pneg %p287
        $region50: #{tpu_custom_call.1} parent=11 // pred_check_branch
          %416 = sbr.rel (%p414) target = $region52
        $region51: #{tpu_custom_call.1} parent=11 // pred_region
          _
        $region52: #{tpu_custom_call.1} parent=11 // pred_fallthru
          _
        // Predicated region
        $region53: #{tpu_custom_call.1} parent=11 // pred_check
          %p417 = pneg %p308
        $region54: #{tpu_custom_call.1} parent=11 // pred_check_branch
          %419 = sbr.rel (%p417) target = $region56
        $region55: #{tpu_custom_call.1} parent=11 // pred_region
          _
        $region56: #{tpu_custom_call.1} parent=11 // pred_fallthru
          _
      $region12: #{tpu_custom_call.1} parent=5 // pred_fallthru
        _
      %p420 = scmp.lt.s32.totalorder %s25, 2
      // Predicated region
      $region57: #{tpu_custom_call.1} parent=5 // pred_check
        %p421 = pneg %p420
      $region58: #{tpu_custom_call.1} parent=5 // pred_check_branch
        %423 = sbr.rel (%p421) target = $region60
      $region59: #{tpu_custom_call.1} parent=5 // pred_region
        // Predicated region
        $region61: #{tpu_custom_call.1} parent=59 // pred_check
          %p424 = pneg %p45
        $region62: #{tpu_custom_call.1} parent=59 // pred_check_branch
          %426 = sbr.rel (%p424) target = $region64
        $region63: #{tpu_custom_call.1} parent=59 // pred_region
          %p427 = scmp.lt.s32.totalorder %s25, 1
          %s428 = scalar_select %p427, %s25, 1
          %s429 = smul.addr %s428, 4
          %s430 = smul.addr %s429, 8
          %s431 = scalar_lea.vmem %s0, %s430
        $region64: #{tpu_custom_call.1} parent=59 // pred_fallthru
          _
        // Predicated region
        $region65: #{tpu_custom_call.1} parent=59 // pred_check
          %p432 = pneg %p71
        $region66: #{tpu_custom_call.1} parent=59 // pred_check_branch
          %434 = sbr.rel (%p432) target = $region68
        $region67: #{tpu_custom_call.1} parent=59 // pred_region
          %p435 = scmp.lt.s32.totalorder %s25, 1
          %s436 = scalar_select %p435, %s25, 1
          %s437 = smul.addr %s436, 2
          %s438 = smul.addr %s437, 8
          %s439 = scalar_lea.vmem %s1, %s438
        $region68: #{tpu_custom_call.1} parent=59 // pred_fallthru
          _
      $region60: #{tpu_custom_call.1} parent=5 // pred_fallthru
        _
      %p440 = scmp.le.s32.totalorder 1, %s25
      %p441 = scmp.lt.s32.totalorder %s25, 3
      %p442 = pnand %p440, %p441
      %p443 = pneg %p442
      // Predicated region
      $region69: #{tpu_custom_call.1} parent=5 // pred_check
        _
      $region70: #{tpu_custom_call.1} parent=5 // pred_check_branch
        %445 = sbr.rel (%p442) target = $region72
      $region71: #{tpu_custom_call.1} parent=5 // pred_region
        %s446 = ssub.s32 %s25, 1
        // Predicated region
        $region73: #{tpu_custom_call.1} parent=71 // pred_check
          %p447 = pneg %p161
        $region74: #{tpu_custom_call.1} parent=71 // pred_check_branch
          %449 = sbr.rel (%p447) target = $region76
        $region75: #{tpu_custom_call.1} parent=71 // pred_region
          %450 = dma.done [#allocation3], 512
        $region76: #{tpu_custom_call.1} parent=71 // pred_fallthru
          _
        // Predicated region
        $region77: #{tpu_custom_call.1} parent=71 // pred_check
          %p451 = pneg %p224
        $region78: #{tpu_custom_call.1} parent=71 // pred_check_branch
          %453 = sbr.rel (%p451) target = $region80
        $region79: #{tpu_custom_call.1} parent=71 // pred_region
          %454 = dma.done [#allocation6], 192
        $region80: #{tpu_custom_call.1} parent=71 // pred_fallthru
          _
        // Predicated region
        $region81: #{tpu_custom_call.1} parent=71 // pred_check
          %p455 = pneg %p245
        $region82: #{tpu_custom_call.1} parent=71 // pred_check_branch
          %457 = sbr.rel (%p455) target = $region84
        $region83: #{tpu_custom_call.1} parent=71 // pred_region
          %458 = dma.done [#allocation6], 512
        $region84: #{tpu_custom_call.1} parent=71 // pred_fallthru
          _
        // Predicated region
        $region85: #{tpu_custom_call.1} parent=71 // pred_check
          %p459 = pneg %p266
        $region86: #{tpu_custom_call.1} parent=71 // pred_check_branch
          %461 = sbr.rel (%p459) target = $region88
        $region87: #{tpu_custom_call.1} parent=71 // pred_region
          %462 = dma.done [#allocation9], 512
        $region88: #{tpu_custom_call.1} parent=71 // pred_fallthru
          _
        %p463 = scmp.lt.s32.totalorder %s30, 1
        %s464 = scalar_select %p463, %s30, 1
        %s465 = smul.addr %s464, 4
        %s466 = smul.addr %s465, 8
        %s467 = scalar_lea.vmem %s0, %s466
        %p468 = pneg %p51
        %p469 = pneg %p48
        %p470 = scmp.lt.s32.totalorder %s30, 1
        %s471 = scalar_select %p470, %s30, 1
        %s472 = smul.addr %s471, 2
        %s473 = smul.addr %s472, 8
        %s474 = scalar_lea.vmem %s1, %s473
        %p475 = pneg %p77
        %p476 = pneg %p74
        %p477 = pneg %p98
        %p478 = pneg %p95
        %p479 = pneg %p119
        %p480 = pneg %p116
        %p481 = pneg %p140
        %p482 = pneg %p137
        %p483 = pneg %p161
        %p484 = pneg %p158
        %p485 = pneg %p182
        %p486 = pneg %p179
        %p487 = pneg %p203
        %p488 = pneg %p200
        %p489 = pneg %p224
        %p490 = pneg %p221
        %p491 = pneg %p245
        %p492 = pneg %p242
        %p493 = pneg %p266
        %p494 = pneg %p263
        %p495 = pneg %p287
        %p496 = pneg %p284
        %p497 = pneg %p308
        %p498 = pneg %p305
        %p499 = pneg %p334
        %p500 = pneg %p331
        %s501 = sand.u32 %s321, 1
        %s502 = scalar_lea.sflag [#allocation4], %s501
        %s503 = sand.u32 %s321, 1
        %s504 = smul.addr %s503, 8
        %s505 = scalar_lea.vmem [#allocation10], %s504
        %p506 = scmp.lt.s32.totalorder %s30, 1
        %s507 = scalar_select %p506, %s30, 1
        %s508 = smul.addr %s507, 4
        %s509 = smul.addr %s508, 8
        %s510 = scalar_lea.vmem %s0, %s509
        %p511 = scmp.lt.s32.totalorder %s30, 1
        %s512 = scalar_select %p511, %s30, 1
        %s513 = smul.addr %s512, 2
        %s514 = smul.addr %s513, 8
        %s515 = scalar_lea.vmem %s1, %s514
        %v516 = vld [vmem:[%s11] sm:$0xff]
        %v517 = vld [vmem:[%s11 + $0x8] sm:$0xff]
        %v518 = vld [vmem:[%s11 + $0x10] sm:$0xff]
        %v519 = vld [vmem:[%s11 + $0x18] sm:$0xff]
        %v520 = vld [vmem:[%s11] sm:$0xf]
        %v521 = vld [vmem:[%s12] sm:$0xff]
        %v522 = vld [vmem:[%s12 + $0x8] sm:$0xff]
        %v523 = vld [vmem:[%s12 + $0x10] sm:$0xff]
        %v524 = vld [vmem:[%s12 + $0x18] sm:$0xff]
        %v525 = vld [vmem:[%s12 + $0x20] sm:$0xff]
        %v526 = vld [vmem:[%s12 + $0x28] sm:$0xff]
        %v527 = vld [vmem:[%s12 + $0x30] sm:$0xff]
        %v528 = vld [vmem:[%s12 + $0x38] sm:$0xff]
        %v529 = vld [vmem:[%s12 + $0x40] sm:$0xff]
        %v530 = vld [vmem:[%s12 + $0x48] sm:$0xff]
        %v531 = vld [vmem:[%s12 + $0x50] sm:$0xff]
        %v532 = vld [vmem:[%s12 + $0x58] sm:$0xff]
        %v533 = vld [vmem:[%s12 + $0x60] sm:$0xff]
        %v534 = vld [vmem:[%s12 + $0x68] sm:$0xff]
        %v535 = vld [vmem:[%s12 + $0x70] sm:$0xff]
        %v536 = vld [vmem:[%s12 + $0x78] sm:$0xff]
        %v537 = vld [vmem:[%s510] sm:$0xff]
        %v538 = vld [vmem:[%s510 + $0x8] sm:$0xff]
        %v539 = vld [vmem:[%s510 + $0x10] sm:$0xff]
        %v540 = vld [vmem:[%s510 + $0x18] sm:$0xff]
        %542 = vset.pattern.permute.xlu0 0
        %543 = vperm.xlu0 %542, %v537
        %v544 = vpop.permute.xlu0 %543
        %547 = vset.pattern.permute.xlu0 0
        %548 = vperm.xlu0 %547, %v538
        %v549 = vpop.permute.xlu0 %548
        %552 = vset.pattern.permute.xlu0 0
        %553 = vperm.xlu0 %552, %v539
        %v554 = vpop.permute.xlu0 %553
        %557 = vset.pattern.permute.xlu0 0
        %558 = vperm.xlu0 %557, %v540
        %v559 = vpop.permute.xlu0 %558
        %v561 = vld [vmem:[%s2] sm:$0xff]
        %v562 = vld [vmem:[%s2 + $0x8] sm:$0xff]
        %v563 = vld [vmem:[%s2 + $0x10] sm:$0xff]
        %v564 = vld [vmem:[%s2 + $0x18] sm:$0xff]
        %v565 = vld [vmem:[%s2 + $0x20] sm:$0xff]
        %v566 = vld [vmem:[%s2 + $0x28] sm:$0xff]
        %v567 = vld [vmem:[%s2 + $0x30] sm:$0xff]
        %v568 = vld [vmem:[%s2 + $0x38] sm:$0xff]
        %v569 = vld [vmem:[%s2 + $0x40] sm:$0xff]
        %v570 = vld [vmem:[%s2 + $0x48] sm:$0xff]
        %v571 = vld [vmem:[%s2 + $0x50] sm:$0xff]
        %v572 = vld [vmem:[%s2 + $0x58] sm:$0xff]
        %v573 = vld [vmem:[%s2 + $0x60] sm:$0xff]
        %v574 = vld [vmem:[%s2 + $0x68] sm:$0xff]
        %v575 = vld [vmem:[%s2 + $0x70] sm:$0xff]
        %v576 = vld [vmem:[%s2 + $0x78] sm:$0xff]
        %578 = vset.pattern.permute.xlu0 0
        %579 = vperm.xlu0 %578, %v521
        %v580 = vpop.permute.xlu0 %579
        %583 = vset.pattern.permute.xlu0 0
        %584 = vperm.xlu0 %583, %v522
        %v585 = vpop.permute.xlu0 %584
        %588 = vset.pattern.permute.xlu0 0
        %589 = vperm.xlu0 %588, %v523
        %v590 = vpop.permute.xlu0 %589
        %593 = vset.pattern.permute.xlu0 0
        %594 = vperm.xlu0 %593, %v524
        %v595 = vpop.permute.xlu0 %594
        %598 = vset.pattern.permute.xlu0 0
        %599 = vperm.xlu0 %598, %v525
        %v600 = vpop.permute.xlu0 %599
        %603 = vset.pattern.permute.xlu0 0
        %604 = vperm.xlu0 %603, %v526
        %v605 = vpop.permute.xlu0 %604
        %608 = vset.pattern.permute.xlu0 0
        %609 = vperm.xlu0 %608, %v527
        %v610 = vpop.permute.xlu0 %609
        %613 = vset.pattern.permute.xlu0 0
        %614 = vperm.xlu0 %613, %v528
        %v615 = vpop.permute.xlu0 %614
        %618 = vset.pattern.permute.xlu0 0
        %619 = vperm.xlu0 %618, %v529
        %v620 = vpop.permute.xlu0 %619
        %623 = vset.pattern.permute.xlu0 0
        %624 = vperm.xlu0 %623, %v530
        %v625 = vpop.permute.xlu0 %624
        %628 = vset.pattern.permute.xlu0 0
        %629 = vperm.xlu0 %628, %v531
        %v630 = vpop.permute.xlu0 %629
        %633 = vset.pattern.permute.xlu0 0
        %634 = vperm.xlu0 %633, %v532
        %v635 = vpop.permute.xlu0 %634
        %638 = vset.pattern.permute.xlu0 0
        %639 = vperm.xlu0 %638, %v533
        %v640 = vpop.permute.xlu0 %639
        %643 = vset.pattern.permute.xlu0 0
        %644 = vperm.xlu0 %643, %v534
        %v645 = vpop.permute.xlu0 %644
        %648 = vset.pattern.permute.xlu0 0
        %649 = vperm.xlu0 %648, %v535
        %v650 = vpop.permute.xlu0 %649
        %653 = vset.pattern.permute.xlu0 0
        %654 = vperm.xlu0 %653, %v536
        %v655 = vpop.permute.xlu0 %654
        %vm657 = vcmask 261120
        %v659 = vsel %vm657, %v561, 0
        %v662 = vsel %vm657, %v562, 0
        %v665 = vsel %vm657, %v563, 0
        %v668 = vsel %vm657, %v564, 0
        %v671 = vsel %vm657, %v565, 0
        %v674 = vsel %vm657, %v566, 0
        %v677 = vsel %vm657, %v567, 0
        %v680 = vsel %vm657, %v568, 0
        %v683 = vsel %vm657, %v569, 0
        %v686 = vsel %vm657, %v570, 0
        %v689 = vsel %vm657, %v571, 0
        %v692 = vsel %vm657, %v572, 0
        %v695 = vsel %vm657, %v573, 0
        %v698 = vsel %vm657, %v574, 0
        %v701 = vsel %vm657, %v575, 0
        %v704 = vsel %vm657, %v576, 0
        %706 = vmatprep.subr.mxu0 0.0
        %707 = vmatpush1.msra.mxu0 %v544
        %708 = vmatprep.subr.mxu0 0.0
        %709 = vmatpush1.msra.mxu0 %v549
        %710 = vmatprep.subr.mxu0 0.0
        %711 = vmatpush1.msra.mxu0 %v554
        %712 = vmatprep.subr.mxu0 0.0
        %713 = vmatpush1.msra.mxu0 %v559
        %714 = vmatprep.subr.mxu0 0.0
        %715 = vmatpush1.msra.mxu0 0.0
        %716 = vmatprep.subr.mxu0 0.0
        %717 = vmatpush1.msra.mxu0 0.0
        %718 = vmatprep.subr.mxu0 0.0
        %719 = vmatpush1.msra.mxu0 0.0
        %720 = vmatprep.subr.mxu0 0.0
        %721 = vmatpush1.msra.mxu0 0.0
        %722 = vmatprep.subr.mxu0 0.0
        %723 = vmatpush1.msra.mxu0 0.0
        %724 = vmatprep.subr.mxu0 0.0
        %725 = vmatpush1.msra.mxu0 0.0
        %726 = vmatprep.subr.mxu0 0.0
        %727 = vmatpush1.msra.mxu0 0.0
        %728 = vmatprep.subr.mxu0 0.0
        %729 = vmatpush1.msra.mxu0 0.0
        %730 = vmatprep.subr.mxu0 0.0
        %731 = vmatpush1.msra.mxu0 0.0
        %732 = vmatprep.subr.mxu0 0.0
        %733 = vmatpush1.msra.mxu0 0.0
        %734 = vmatprep.subr.mxu0 0.0
        %735 = vmatpush1.msra.mxu0 0.0
        %736 = vmatprep.subr.mxu0 0.0
        %737 = vmatpush1.msra.mxu0 0.0
        %738 = vmatprep.subr.mxu0 0.0
        %739 = vmatpush1.msra.mxu0 0.0
        %740 = vmatprep.subr.mxu0 0.0
        %741 = vmatpush1.msra.mxu0 0.0
        %742 = vmatprep.subr.mxu0 0.0
        %743 = vmatpush1.msra.mxu0 0.0
        %744 = vmatprep.subr.mxu0 0.0
        %745 = vmatpush1.msra.mxu0 0.0
        %746 = vmatprep.subr.mxu0 0.0
        %747 = vmatpush1.msra.mxu0 0.0
        %748 = vmatprep.subr.mxu0 0.0
        %749 = vmatpush1.msra.mxu0 0.0
        %750 = vmatprep.subr.mxu0 0.0
        %751 = vmatpush1.msra.mxu0 0.0
        %752 = vmatprep.subr.mxu0 0.0
        %753 = vmatpush1.msra.mxu0 0.0
        %754 = vmatprep.subr.mxu0 0.0
        %755 = vmatpush1.msra.mxu0 0.0
        %756 = vmatprep.subr.mxu0 0.0
        %757 = vmatpush1.msra.mxu0 0.0
        %758 = vmatprep.subr.mxu0 0.0
        %759 = vmatpush1.msra.mxu0 0.0
        %760 = vmatprep.subr.mxu0 0.0
        %761 = vmatpush1.msra.mxu0 0.0
        %762 = vmatprep.subr.mxu0 0.0
        %763 = vmatpush1.msra.mxu0 0.0
        %764 = vmatprep.subr.mxu0 0.0
        %765 = vmatpush1.msra.mxu0 0.0
        %766 = vmatprep.subr.mxu0 0.0
        %767 = vmatpush1.msra.mxu0 0.0
        %768 = vmatprep.subr.mxu0 0.0
        %769 = vmatpush1.msra.mxu0 0.0
        %770 = vmatprep.mubr.f32.mxu0 0.0
        %771 = vmatmul.mubr.f32.gmra.mrb[0].mxu0 %v659
        %v772 = vpop.f32.mrb[0].mxu0
        %v773 = vadd.f32 %v580, %v772
        %v774 = vpop.f32.mrb[0].mxu0
        %775 = vmatprep.mubr.f32.mxu0 0.0
        %776 = vmatmul.mubr.f32.gmra.mrb[0].mxu0 %v662
        %v777 = vpop.f32.mrb[0].mxu0
        %v778 = vadd.f32 %v585, %v777
        %v779 = vpop.f32.mrb[0].mxu0
        %780 = vmatprep.mubr.f32.mxu0 0.0
        %781 = vmatmul.mubr.f32.gmra.mrb[0].mxu0 %v665
        %v782 = vpop.f32.mrb[0].mxu0
        %v783 = vadd.f32 %v590, %v782
        %v784 = vpop.f32.mrb[0].mxu0
        %785 = vmatprep.mubr.f32.mxu0 0.0
        %786 = vmatmul.mubr.f32.gmra.mrb[0].mxu0 %v668
        %v787 = vpop.f32.mrb[0].mxu0
        %v788 = vadd.f32 %v595, %v787
        %v789 = vpop.f32.mrb[0].mxu0
        %790 = vmatprep.mubr.f32.mxu0 0.0
        %791 = vmatmul.mubr.f32.gmra.mrb[0].mxu0 %v671
        %v792 = vpop.f32.mrb[0].mxu0
        %v793 = vadd.f32 %v600, %v792
        %v794 = vpop.f32.mrb[0].mxu0
        %795 = vmatprep.mubr.f32.mxu0 0.0
        %796 = vmatmul.mubr.f32.gmra.mrb[0].mxu0 %v674
        %v797 = vpop.f32.mrb[0].mxu0
        %v798 = vadd.f32 %v605, %v797
        %v799 = vpop.f32.mrb[0].mxu0
        %800 = vmatprep.mubr.f32.mxu0 0.0
        %801 = vmatmul.mubr.f32.gmra.mrb[0].mxu0 %v677
        %v802 = vpop.f32.mrb[0].mxu0
        %v803 = vadd.f32 %v610, %v802
        %v804 = vpop.f32.mrb[0].mxu0
        %805 = vmatprep.mubr.f32.mxu0 0.0
        %806 = vmatmul.mubr.f32.gmra.mrb[0].mxu0 %v680
        %v807 = vpop.f32.mrb[0].mxu0
        %v808 = vadd.f32 %v615, %v807
        %v809 = vpop.f32.mrb[0].mxu0
        %810 = vmatprep.mubr.f32.mxu0 0.0
        %811 = vmatmul.mubr.f32.gmra.mrb[0].mxu0 %v683
        %v812 = vpop.f32.mrb[0].mxu0
        %v813 = vadd.f32 %v620, %v812
        %v814 = vpop.f32.mrb[0].mxu0
        %815 = vmatprep.mubr.f32.mxu0 0.0
        %816 = vmatmul.mubr.f32.gmra.mrb[0].mxu0 %v686
        %v817 = vpop.f32.mrb[0].mxu0
        %v818 = vadd.f32 %v625, %v817
        %v819 = vpop.f32.mrb[0].mxu0
        %820 = vmatprep.mubr.f32.mxu0 0.0
        %821 = vmatmul.mubr.f32.gmra.mrb[0].mxu0 %v689
        %v822 = vpop.f32.mrb[0].mxu0
        %v823 = vadd.f32 %v630, %v822
        %v824 = vpop.f32.mrb[0].mxu0
        %825 = vmatprep.mubr.f32.mxu0 0.0
        %826 = vmatmul.mubr.f32.gmra.mrb[0].mxu0 %v692
        %v827 = vpop.f32.mrb[0].mxu0
        %v828 = vadd.f32 %v635, %v827
        %v829 = vpop.f32.mrb[0].mxu0
        %830 = vmatprep.mubr.f32.mxu0 0.0
        %831 = vmatmul.mubr.f32.gmra.mrb[0].mxu0 %v695
        %v832 = vpop.f32.mrb[0].mxu0
        %v833 = vadd.f32 %v640, %v832
        %v834 = vpop.f32.mrb[0].mxu0
        %835 = vmatprep.mubr.f32.mxu0 0.0
        %836 = vmatmul.mubr.f32.gmra.mrb[0].mxu0 %v698
        %v837 = vpop.f32.mrb[0].mxu0
        %v838 = vadd.f32 %v645, %v837
        %v839 = vpop.f32.mrb[0].mxu0
        %840 = vmatprep.mubr.f32.mxu0 0.0
        %841 = vmatmul.mubr.f32.gmra.mrb[0].mxu0 %v701
        %v842 = vpop.f32.mrb[0].mxu0
        %v843 = vadd.f32 %v650, %v842
        %v844 = vpop.f32.mrb[0].mxu0
        %845 = vmatprep.mubr.f32.mxu0 0.0
        %846 = vmatmul.mubr.f32.gmra.mrb[0].mxu0 %v704
        %v847 = vpop.f32.mrb[0].mxu0
        %v848 = vadd.f32 %v655, %v847
        %v849 = vpop.f32.mrb[0].mxu0
        %850 = vdwg.mxu0
        %v851 = vxor.u32 %v773, 2147483648
        %v852 = vxor.u32 %v778, 2147483648
        %v853 = vxor.u32 %v783, 2147483648
        %v854 = vxor.u32 %v788, 2147483648
        %v855 = vxor.u32 %v793, 2147483648
        %v856 = vxor.u32 %v798, 2147483648
        %v857 = vxor.u32 %v803, 2147483648
        %v858 = vxor.u32 %v808, 2147483648
        %v859 = vxor.u32 %v813, 2147483648
        %v860 = vxor.u32 %v818, 2147483648
        %v861 = vxor.u32 %v823, 2147483648
        %v862 = vxor.u32 %v828, 2147483648
        %v863 = vxor.u32 %v833, 2147483648
        %v864 = vxor.u32 %v838, 2147483648
        %v865 = vxor.u32 %v843, 2147483648
        %v866 = vxor.u32 %v848, 2147483648
        %v867 = vmul.f32 %v851, 1.442695
        %v868 = vpow.pop %v867
        %v869 = vmul.f32 %v852, 1.442695
        %v870 = vpow.pop %v869
        %v871 = vmul.f32 %v853, 1.442695
        %v872 = vpow.pop %v871
        %v873 = vmul.f32 %v854, 1.442695
        %v874 = vpow.pop %v873
        %v875 = vmul.f32 %v855, 1.442695
        %v876 = vpow.pop %v875
        %v877 = vmul.f32 %v856, 1.442695
        %v878 = vpow.pop %v877
        %v879 = vmul.f32 %v857, 1.442695
        %v880 = vpow.pop %v879
        %v881 = vmul.f32 %v858, 1.442695
        %v882 = vpow.pop %v881
        %v883 = vmul.f32 %v859, 1.442695
        %v884 = vpow.pop %v883
        %v885 = vmul.f32 %v860, 1.442695
        %v886 = vpow.pop %v885
        %v887 = vmul.f32 %v861, 1.442695
        %v888 = vpow.pop %v887
        %v889 = vmul.f32 %v862, 1.442695
        %v890 = vpow.pop %v889
        %v891 = vmul.f32 %v863, 1.442695
        %v892 = vpow.pop %v891
        %v893 = vmul.f32 %v864, 1.442695
        %v894 = vpow.pop %v893
        %v895 = vmul.f32 %v865, 1.442695
        %v896 = vpow.pop %v895
        %v897 = vmul.f32 %v866, 1.442695
        %v898 = vpow.pop %v897
        %v899 = vadd.f32 %v868, 1.0
        %v900 = vadd.f32 %v870, 1.0
        %v901 = vadd.f32 %v872, 1.0
        %v902 = vadd.f32 %v874, 1.0
        %v903 = vadd.f32 %v876, 1.0
        %v904 = vadd.f32 %v878, 1.0
        %v905 = vadd.f32 %v880, 1.0
        %v906 = vadd.f32 %v882, 1.0
        %v907 = vadd.f32 %v884, 1.0
        %v908 = vadd.f32 %v886, 1.0
        %v909 = vadd.f32 %v888, 1.0
        %v910 = vadd.f32 %v890, 1.0
        %v911 = vadd.f32 %v892, 1.0
        %v912 = vadd.f32 %v894, 1.0
        %v913 = vadd.f32 %v896, 1.0
        %v914 = vadd.f32 %v898, 1.0
        %v915 = vrcp.pop %v899
        %v916 = vmul.f32 1.0, %v915
        %v917 = vrcp.pop %v900
        %v918 = vmul.f32 1.0, %v917
        %v919 = vrcp.pop %v901
        %v920 = vmul.f32 1.0, %v919
        %v921 = vrcp.pop %v902
        %v922 = vmul.f32 1.0, %v921
        %v923 = vrcp.pop %v903
        %v924 = vmul.f32 1.0, %v923
        %v925 = vrcp.pop %v904
        %v926 = vmul.f32 1.0, %v925
        %v927 = vrcp.pop %v905
        %v928 = vmul.f32 1.0, %v927
        %v929 = vrcp.pop %v906
        %v930 = vmul.f32 1.0, %v929
        %v931 = vrcp.pop %v907
        %v932 = vmul.f32 1.0, %v931
        %v933 = vrcp.pop %v908
        %v934 = vmul.f32 1.0, %v933
        %v935 = vrcp.pop %v909
        %v936 = vmul.f32 1.0, %v935
        %v937 = vrcp.pop %v910
        %v938 = vmul.f32 1.0, %v937
        %v939 = vrcp.pop %v911
        %v940 = vmul.f32 1.0, %v939
        %v941 = vrcp.pop %v912
        %v942 = vmul.f32 1.0, %v941
        %v943 = vrcp.pop %v913
        %v944 = vmul.f32 1.0, %v943
        %v945 = vrcp.pop %v914
        %v946 = vmul.f32 1.0, %v945
        %v947 = vmul.f32 %v773, %v916
        %v948 = vmul.f32 %v778, %v918
        %v949 = vmul.f32 %v783, %v920
        %v950 = vmul.f32 %v788, %v922
        %v951 = vmul.f32 %v793, %v924
        %v952 = vmul.f32 %v798, %v926
        %v953 = vmul.f32 %v803, %v928
        %v954 = vmul.f32 %v808, %v930
        %v955 = vmul.f32 %v813, %v932
        %v956 = vmul.f32 %v818, %v934
        %v957 = vmul.f32 %v823, %v936
        %v958 = vmul.f32 %v828, %v938
        %v959 = vmul.f32 %v833, %v940
        %v960 = vmul.f32 %v838, %v942
        %v961 = vmul.f32 %v843, %v944
        %v962 = vmul.f32 %v848, %v946
        %v963 = vld [vmem:[%s3] sm:$0xff]
        %v964 = vld [vmem:[%s3 + $0x8] sm:$0xff]
        %v965 = vld [vmem:[%s3 + $0x10] sm:$0xff]
        %v966 = vld [vmem:[%s3 + $0x18] sm:$0xff]
        %v967 = vld [vmem:[%s3 + $0x20] sm:$0xff]
        %v968 = vld [vmem:[%s3 + $0x28] sm:$0xff]
        %v969 = vld [vmem:[%s3 + $0x30] sm:$0xff]
        %v970 = vld [vmem:[%s3 + $0x38] sm:$0xff]
        %v971 = vld [vmem:[%s3 + $0x40] sm:$0xff]
        %v972 = vld [vmem:[%s3 + $0x48] sm:$0xff]
        %v973 = vld [vmem:[%s3 + $0x50] sm:$0xff]
        %v974 = vld [vmem:[%s3 + $0x58] sm:$0xff]
        %v975 = vld [vmem:[%s3 + $0x60] sm:$0xff]
        %v976 = vld [vmem:[%s3 + $0x68] sm:$0xff]
        %v977 = vld [vmem:[%s3 + $0x70] sm:$0xff]
        %v978 = vld [vmem:[%s3 + $0x78] sm:$0xff]
        %979 = vset.pattern.permute.xlu0 1
        %980 = vperm.xlu0 %979, %v521
        %v981 = vpop.permute.xlu0 %980
        %983 = vset.pattern.permute.xlu0 1
        %984 = vperm.xlu0 %983, %v522
        %v985 = vpop.permute.xlu0 %984
        %987 = vset.pattern.permute.xlu0 1
        %988 = vperm.xlu0 %987, %v523
        %v989 = vpop.permute.xlu0 %988
        %991 = vset.pattern.permute.xlu0 1
        %992 = vperm.xlu0 %991, %v524
        %v993 = vpop.permute.xlu0 %992
        %995 = vset.pattern.permute.xlu0 1
        %996 = vperm.xlu0 %995, %v525
        %v997 = vpop.permute.xlu0 %996
        %999 = vset.pattern.permute.xlu0 1
        %1000 = vperm.xlu0 %999, %v526
        %v1001 = vpop.permute.xlu0 %1000
        %1003 = vset.pattern.permute.xlu0 1
        %1004 = vperm.xlu0 %1003, %v527
        %v1005 = vpop.permute.xlu0 %1004
        %1007 = vset.pattern.permute.xlu0 1
        %1008 = vperm.xlu0 %1007, %v528
        %v1009 = vpop.permute.xlu0 %1008
        %1011 = vset.pattern.permute.xlu0 1
        %1012 = vperm.xlu0 %1011, %v529
        %v1013 = vpop.permute.xlu0 %1012
        %1015 = vset.pattern.permute.xlu0 1
        %1016 = vperm.xlu0 %1015, %v530
        %v1017 = vpop.permute.xlu0 %1016
        %1019 = vset.pattern.permute.xlu0 1
        %1020 = vperm.xlu0 %1019, %v531
        %v1021 = vpop.permute.xlu0 %1020
        %1023 = vset.pattern.permute.xlu0 1
        %1024 = vperm.xlu0 %1023, %v532
        %v1025 = vpop.permute.xlu0 %1024
        %1027 = vset.pattern.permute.xlu0 1
        %1028 = vperm.xlu0 %1027, %v533
        %v1029 = vpop.permute.xlu0 %1028
        %1031 = vset.pattern.permute.xlu0 1
        %1032 = vperm.xlu0 %1031, %v534
        %v1033 = vpop.permute.xlu0 %1032
        %1035 = vset.pattern.permute.xlu0 1
        %1036 = vperm.xlu0 %1035, %v535
        %v1037 = vpop.permute.xlu0 %1036
        %1039 = vset.pattern.permute.xlu0 1
        %1040 = vperm.xlu0 %1039, %v536
        %v1041 = vpop.permute.xlu0 %1040
        %1043 = vmatprep.subr.mxu0 0.0
        %1044 = vmatpush1.msra.mxu0 %v947
        %1045 = vmatprep.subr.mxu0 0.0
        %1046 = vmatpush1.msra.mxu0 %v948
        %1047 = vmatprep.subr.mxu0 0.0
        %1048 = vmatpush1.msra.mxu0 %v949
        %1049 = vmatprep.subr.mxu0 0.0
        %1050 = vmatpush1.msra.mxu0 %v950
        %1051 = vmatprep.subr.mxu0 0.0
        %1052 = vmatpush1.msra.mxu0 %v951
        %1053 = vmatprep.subr.mxu0 0.0
        %1054 = vmatpush1.msra.mxu0 %v952
        %1055 = vmatprep.subr.mxu0 0.0
        %1056 = vmatpush1.msra.mxu0 %v953
        %1057 = vmatprep.subr.mxu0 0.0
        %1058 = vmatpush1.msra.mxu0 %v954
        %1059 = vmatprep.subr.mxu0 0.0
        %1060 = vmatpush1.msra.mxu0 %v955
        %1061 = vmatprep.subr.mxu0 0.0
        %1062 = vmatpush1.msra.mxu0 %v956
        %1063 = vmatprep.subr.mxu0 0.0
        %1064 = vmatpush1.msra.mxu0 %v957
        %1065 = vmatprep.subr.mxu0 0.0
        %1066 = vmatpush1.msra.mxu0 %v958
        %1067 = vmatprep.subr.mxu0 0.0
        %1068 = vmatpush1.msra.mxu0 %v959
        %1069 = vmatprep.subr.mxu0 0.0
        %1070 = vmatpush1.msra.mxu0 %v960
        %1071 = vmatprep.subr.mxu0 0.0
        %1072 = vmatpush1.msra.mxu0 %v961
        %1073 = vmatprep.subr.mxu0 0.0
        %1074 = vmatpush1.msra.mxu0 %v962
        %1075 = vmatprep.subr.mxu0 0.0
        %1076 = vmatpush1.msra.mxu0 0.0
        %1077 = vmatprep.subr.mxu0 0.0
        %1078 = vmatpush1.msra.mxu0 0.0
        %1079 = vmatprep.subr.mxu0 0.0
        %1080 = vmatpush1.msra.mxu0 0.0
        %1081 = vmatprep.subr.mxu0 0.0
        %1082 = vmatpush1.msra.mxu0 0.0
        %1083 = vmatprep.subr.mxu0 0.0
        %1084 = vmatpush1.msra.mxu0 0.0
        %1085 = vmatprep.subr.mxu0 0.0
        %1086 = vmatpush1.msra.mxu0 0.0
        %1087 = vmatprep.subr.mxu0 0.0
        %1088 = vmatpush1.msra.mxu0 0.0
        %1089 = vmatprep.subr.mxu0 0.0
        %1090 = vmatpush1.msra.mxu0 0.0
        %1091 = vmatprep.subr.mxu0 0.0
        %1092 = vmatpush1.msra.mxu0 0.0
        %1093 = vmatprep.subr.mxu0 0.0
        %1094 = vmatpush1.msra.mxu0 0.0
        %1095 = vmatprep.subr.mxu0 0.0
        %1096 = vmatpush1.msra.mxu0 0.0
        %1097 = vmatprep.subr.mxu0 0.0
        %1098 = vmatpush1.msra.mxu0 0.0
        %1099 = vmatprep.subr.mxu0 0.0
        %1100 = vmatpush1.msra.mxu0 0.0
        %1101 = vmatprep.subr.mxu0 0.0
        %1102 = vmatpush1.msra.mxu0 0.0
        %1103 = vmatprep.subr.mxu0 0.0
        %1104 = vmatpush1.msra.mxu0 0.0
        %1105 = vmatprep.subr.mxu0 0.0
        %1106 = vmatpush1.msra.mxu0 0.0
        %1107 = vmatprep.mubr.f32.mxu0 0.0
        %1108 = vmatmul.mubr.f32.gmra.mrb[0].mxu0 %v963
        %v1109 = vpop.f32.mrb[0].mxu0
        %v1110 = vadd.f32 %v981, %v1109
        %v1111 = vpop.f32.mrb[0].mxu0
        %1112 = vmatprep.mubr.f32.mxu0 0.0
        %1113 = vmatmul.mubr.f32.gmra.mrb[0].mxu0 %v964
        %v1114 = vpop.f32.mrb[0].mxu0
        %v1115 = vadd.f32 %v985, %v1114
        %v1116 = vpop.f32.mrb[0].mxu0
        %1117 = vmatprep.mubr.f32.mxu0 0.0
        %1118 = vmatmul.mubr.f32.gmra.mrb[0].mxu0 %v965
        %v1119 = vpop.f32.mrb[0].mxu0
        %v1120 = vadd.f32 %v989, %v1119
        %v1121 = vpop.f32.mrb[0].mxu0
        %1122 = vmatprep.mubr.f32.mxu0 0.0
        %1123 = vmatmul.mubr.f32.gmra.mrb[0].mxu0 %v966
        %v1124 = vpop.f32.mrb[0].mxu0
        %v1125 = vadd.f32 %v993, %v1124
        %v1126 = vpop.f32.mrb[0].mxu0
        %1127 = vmatprep.mubr.f32.mxu0 0.0
        %1128 = vmatmul.mubr.f32.gmra.mrb[0].mxu0 %v967
        %v1129 = vpop.f32.mrb[0].mxu0
        %v1130 = vadd.f32 %v997, %v1129
        %v1131 = vpop.f32.mrb[0].mxu0
        %1132 = vmatprep.mubr.f32.mxu0 0.0
        %1133 = vmatmul.mubr.f32.gmra.mrb[0].mxu0 %v968
        %v1134 = vpop.f32.mrb[0].mxu0
        %v1135 = vadd.f32 %v1001, %v1134
        %v1136 = vpop.f32.mrb[0].mxu0
        %1137 = vmatprep.mubr.f32.mxu0 0.0
        %1138 = vmatmul.mubr.f32.gmra.mrb[0].mxu0 %v969
        %v1139 = vpop.f32.mrb[0].mxu0
        %v1140 = vadd.f32 %v1005, %v1139
        %v1141 = vpop.f32.mrb[0].mxu0
        %1142 = vmatprep.mubr.f32.mxu0 0.0
        %1143 = vmatmul.mubr.f32.gmra.mrb[0].mxu0 %v970
        %v1144 = vpop.f32.mrb[0].mxu0
        %v1145 = vadd.f32 %v1009, %v1144
        %v1146 = vpop.f32.mrb[0].mxu0
        %1147 = vmatprep.mubr.f32.mxu0 0.0
        %1148 = vmatmul.mubr.f32.gmra.mrb[0].mxu0 %v971
        %v1149 = vpop.f32.mrb[0].mxu0
        %v1150 = vadd.f32 %v1013, %v1149
        %v1151 = vpop.f32.mrb[0].mxu0
        %1152 = vmatprep.mubr.f32.mxu0 0.0
        %1153 = vmatmul.mubr.f32.gmra.mrb[0].mxu0 %v972
        %v1154 = vpop.f32.mrb[0].mxu0
        %v1155 = vadd.f32 %v1017, %v1154
        %v1156 = vpop.f32.mrb[0].mxu0
        %1157 = vmatprep.mubr.f32.mxu0 0.0
        %1158 = vmatmul.mubr.f32.gmra.mrb[0].mxu0 %v973
        %v1159 = vpop.f32.mrb[0].mxu0
        %v1160 = vadd.f32 %v1021, %v1159
        %v1161 = vpop.f32.mrb[0].mxu0
        %1162 = vmatprep.mubr.f32.mxu0 0.0
        %1163 = vmatmul.mubr.f32.gmra.mrb[0].mxu0 %v974
        %v1164 = vpop.f32.mrb[0].mxu0
        %v1165 = vadd.f32 %v1025, %v1164
        %v1166 = vpop.f32.mrb[0].mxu0
        %1167 = vmatprep.mubr.f32.mxu0 0.0
        %1168 = vmatmul.mubr.f32.gmra.mrb[0].mxu0 %v975
        %v1169 = vpop.f32.mrb[0].mxu0
        %v1170 = vadd.f32 %v1029, %v1169
        %v1171 = vpop.f32.mrb[0].mxu0
        %1172 = vmatprep.mubr.f32.mxu0 0.0
        %1173 = vmatmul.mubr.f32.gmra.mrb[0].mxu0 %v976
        %v1174 = vpop.f32.mrb[0].mxu0
        %v1175 = vadd.f32 %v1033, %v1174
        %v1176 = vpop.f32.mrb[0].mxu0
        %1177 = vmatprep.mubr.f32.mxu0 0.0
        %1178 = vmatmul.mubr.f32.gmra.mrb[0].mxu0 %v977
        %v1179 = vpop.f32.mrb[0].mxu0
        %v1180 = vadd.f32 %v1037, %v1179
        %v1181 = vpop.f32.mrb[0].mxu0
        %1182 = vmatprep.mubr.f32.mxu0 0.0
        %1183 = vmatmul.mubr.f32.gmra.mrb[0].mxu0 %v978
        %v1184 = vpop.f32.mrb[0].mxu0
        %v1185 = vadd.f32 %v1041, %v1184
        %v1186 = vpop.f32.mrb[0].mxu0
        %1187 = vdwg.mxu0
        %v1188 = vxor.u32 %v1110, 2147483648
        %v1189 = vxor.u32 %v1115, 2147483648
        %v1190 = vxor.u32 %v1120, 2147483648
        %v1191 = vxor.u32 %v1125, 2147483648
        %v1192 = vxor.u32 %v1130, 2147483648
        %v1193 = vxor.u32 %v1135, 2147483648
        %v1194 = vxor.u32 %v1140, 2147483648
        %v1195 = vxor.u32 %v1145, 2147483648
        %v1196 = vxor.u32 %v1150, 2147483648
        %v1197 = vxor.u32 %v1155, 2147483648
        %v1198 = vxor.u32 %v1160, 2147483648
        %v1199 = vxor.u32 %v1165, 2147483648
        %v1200 = vxor.u32 %v1170, 2147483648
        %v1201 = vxor.u32 %v1175, 2147483648
        %v1202 = vxor.u32 %v1180, 2147483648
        %v1203 = vxor.u32 %v1185, 2147483648
        %v1204 = vmul.f32 %v1188, 1.442695
        %v1205 = vpow.pop %v1204
        %v1206 = vmul.f32 %v1189, 1.442695
        %v1207 = vpow.pop %v1206
        %v1208 = vmul.f32 %v1190, 1.442695
        %v1209 = vpow.pop %v1208
        %v1210 = vmul.f32 %v1191, 1.442695
        %v1211 = vpow.pop %v1210
        %v1212 = vmul.f32 %v1192, 1.442695
        %v1213 = vpow.pop %v1212
        %v1214 = vmul.f32 %v1193, 1.442695
        %v1215 = vpow.pop %v1214
        %v1216 = vmul.f32 %v1194, 1.442695
        %v1217 = vpow.pop %v1216
        %v1218 = vmul.f32 %v1195, 1.442695
        %v1219 = vpow.pop %v1218
        %v1220 = vmul.f32 %v1196, 1.442695
        %v1221 = vpow.pop %v1220
        %v1222 = vmul.f32 %v1197, 1.442695
        %v1223 = vpow.pop %v1222
        %v1224 = vmul.f32 %v1198, 1.442695
        %v1225 = vpow.pop %v1224
        %v1226 = vmul.f32 %v1199, 1.442695
        %v1227 = vpow.pop %v1226
        %v1228 = vmul.f32 %v1200, 1.442695
        %v1229 = vpow.pop %v1228
        %v1230 = vmul.f32 %v1201, 1.442695
        %v1231 = vpow.pop %v1230
        %v1232 = vmul.f32 %v1202, 1.442695
        %v1233 = vpow.pop %v1232
        %v1234 = vmul.f32 %v1203, 1.442695
        %v1235 = vpow.pop %v1234
        %v1236 = vadd.f32 %v1205, 1.0
        %v1237 = vadd.f32 %v1207, 1.0
        %v1238 = vadd.f32 %v1209, 1.0
        %v1239 = vadd.f32 %v1211, 1.0
        %v1240 = vadd.f32 %v1213, 1.0
        %v1241 = vadd.f32 %v1215, 1.0
        %v1242 = vadd.f32 %v1217, 1.0
        %v1243 = vadd.f32 %v1219, 1.0
        %v1244 = vadd.f32 %v1221, 1.0
        %v1245 = vadd.f32 %v1223, 1.0
        %v1246 = vadd.f32 %v1225, 1.0
        %v1247 = vadd.f32 %v1227, 1.0
        %v1248 = vadd.f32 %v1229, 1.0
        %v1249 = vadd.f32 %v1231, 1.0
        %v1250 = vadd.f32 %v1233, 1.0
        %v1251 = vadd.f32 %v1235, 1.0
        %v1252 = vrcp.pop %v1236
        %v1253 = vmul.f32 1.0, %v1252
        %v1254 = vrcp.pop %v1237
        %v1255 = vmul.f32 1.0, %v1254
        %v1256 = vrcp.pop %v1238
        %v1257 = vmul.f32 1.0, %v1256
        %v1258 = vrcp.pop %v1239
        %v1259 = vmul.f32 1.0, %v1258
        %v1260 = vrcp.pop %v1240
        %v1261 = vmul.f32 1.0, %v1260
        %v1262 = vrcp.pop %v1241
        %v1263 = vmul.f32 1.0, %v1262
        %v1264 = vrcp.pop %v1242
        %v1265 = vmul.f32 1.0, %v1264
        %v1266 = vrcp.pop %v1243
        %v1267 = vmul.f32 1.0, %v1266
        %v1268 = vrcp.pop %v1244
        %v1269 = vmul.f32 1.0, %v1268
        %v1270 = vrcp.pop %v1245
        %v1271 = vmul.f32 1.0, %v1270
        %v1272 = vrcp.pop %v1246
        %v1273 = vmul.f32 1.0, %v1272
        %v1274 = vrcp.pop %v1247
        %v1275 = vmul.f32 1.0, %v1274
        %v1276 = vrcp.pop %v1248
        %v1277 = vmul.f32 1.0, %v1276
        %v1278 = vrcp.pop %v1249
        %v1279 = vmul.f32 1.0, %v1278
        %v1280 = vrcp.pop %v1250
        %v1281 = vmul.f32 1.0, %v1280
        %v1282 = vrcp.pop %v1251
        %v1283 = vmul.f32 1.0, %v1282
        %v1284 = vmul.f32 %v1110, %v1253
        %v1285 = vmul.f32 %v1115, %v1255
        %v1286 = vmul.f32 %v1120, %v1257
        %v1287 = vmul.f32 %v1125, %v1259
        %v1288 = vmul.f32 %v1130, %v1261
        %v1289 = vmul.f32 %v1135, %v1263
        %v1290 = vmul.f32 %v1140, %v1265
        %v1291 = vmul.f32 %v1145, %v1267
        %v1292 = vmul.f32 %v1150, %v1269
        %v1293 = vmul.f32 %v1155, %v1271
        %v1294 = vmul.f32 %v1160, %v1273
        %v1295 = vmul.f32 %v1165, %v1275
        %v1296 = vmul.f32 %v1170, %v1277
        %v1297 = vmul.f32 %v1175, %v1279
        %v1298 = vmul.f32 %v1180, %v1281
        %v1299 = vmul.f32 %v1185, %v1283
        %v1300 = vld [vmem:[%s4] sm:$0xff]
        %v1301 = vld [vmem:[%s4 + $0x8] sm:$0xff]
        %v1302 = vld [vmem:[%s4 + $0x10] sm:$0xff]
        %v1303 = vld [vmem:[%s4 + $0x18] sm:$0xff]
        %1304 = vmatprep.subr.mxu0 0.0
        %1305 = vmatpush1.msra.mxu0 %v1284
        %1306 = vmatprep.subr.mxu0 0.0
        %1307 = vmatpush1.msra.mxu0 %v1285
        %1308 = vmatprep.subr.mxu0 0.0
        %1309 = vmatpush1.msra.mxu0 %v1286
        %1310 = vmatprep.subr.mxu0 0.0
        %1311 = vmatpush1.msra.mxu0 %v1287
        %1312 = vmatprep.subr.mxu0 0.0
        %1313 = vmatpush1.msra.mxu0 %v1288
        %1314 = vmatprep.subr.mxu0 0.0
        %1315 = vmatpush1.msra.mxu0 %v1289
        %1316 = vmatprep.subr.mxu0 0.0
        %1317 = vmatpush1.msra.mxu0 %v1290
        %1318 = vmatprep.subr.mxu0 0.0
        %1319 = vmatpush1.msra.mxu0 %v1291
        %1320 = vmatprep.subr.mxu0 0.0
        %1321 = vmatpush1.msra.mxu0 %v1292
        %1322 = vmatprep.subr.mxu0 0.0
        %1323 = vmatpush1.msra.mxu0 %v1293
        %1324 = vmatprep.subr.mxu0 0.0
        %1325 = vmatpush1.msra.mxu0 %v1294
        %1326 = vmatprep.subr.mxu0 0.0
        %1327 = vmatpush1.msra.mxu0 %v1295
        %1328 = vmatprep.subr.mxu0 0.0
        %1329 = vmatpush1.msra.mxu0 %v1296
        %1330 = vmatprep.subr.mxu0 0.0
        %1331 = vmatpush1.msra.mxu0 %v1297
        %1332 = vmatprep.subr.mxu0 0.0
        %1333 = vmatpush1.msra.mxu0 %v1298
        %1334 = vmatprep.subr.mxu0 0.0
        %1335 = vmatpush1.msra.mxu0 %v1299
        %1336 = vmatprep.subr.mxu0 0.0
        %1337 = vmatpush1.msra.mxu0 0.0
        %1338 = vmatprep.subr.mxu0 0.0
        %1339 = vmatpush1.msra.mxu0 0.0
        %1340 = vmatprep.subr.mxu0 0.0
        %1341 = vmatpush1.msra.mxu0 0.0
        %1342 = vmatprep.subr.mxu0 0.0
        %1343 = vmatpush1.msra.mxu0 0.0
        %1344 = vmatprep.subr.mxu0 0.0
        %1345 = vmatpush1.msra.mxu0 0.0
        %1346 = vmatprep.subr.mxu0 0.0
        %1347 = vmatpush1.msra.mxu0 0.0
        %1348 = vmatprep.subr.mxu0 0.0
        %1349 = vmatpush1.msra.mxu0 0.0
        %1350 = vmatprep.subr.mxu0 0.0
        %1351 = vmatpush1.msra.mxu0 0.0
        %1352 = vmatprep.subr.mxu0 0.0
        %1353 = vmatpush1.msra.mxu0 0.0
        %1354 = vmatprep.subr.mxu0 0.0
        %1355 = vmatpush1.msra.mxu0 0.0
        %1356 = vmatprep.subr.mxu0 0.0
        %1357 = vmatpush1.msra.mxu0 0.0
        %1358 = vmatprep.subr.mxu0 0.0
        %1359 = vmatpush1.msra.mxu0 0.0
        %1360 = vmatprep.subr.mxu0 0.0
        %1361 = vmatpush1.msra.mxu0 0.0
        %1362 = vmatprep.subr.mxu0 0.0
        %1363 = vmatpush1.msra.mxu0 0.0
        %1364 = vmatprep.subr.mxu0 0.0
        %1365 = vmatpush1.msra.mxu0 0.0
        %1366 = vmatprep.subr.mxu0 0.0
        %1367 = vmatpush1.msra.mxu0 0.0
        %1368 = vmatprep.mubr.f32.mxu0 0.0
        %1369 = vmatmul.mubr.f32.gmra.mrb[0].mxu0 %v1300
        %v1370 = vpop.f32.mrb[0].mxu0
        %v1371 = vadd.f32 0.0, %v1370
        %v1372 = vpop.f32.mrb[0].mxu0
        %1373 = vmatprep.mubr.f32.mxu0 0.0
        %1374 = vmatmul.mubr.f32.gmra.mrb[0].mxu0 %v1301
        %v1375 = vpop.f32.mrb[0].mxu0
        %v1376 = vadd.f32 0.0, %v1375
        %v1377 = vpop.f32.mrb[0].mxu0
        %1378 = vmatprep.mubr.f32.mxu0 0.0
        %1379 = vmatmul.mubr.f32.gmra.mrb[0].mxu0 %v1302
        %v1380 = vpop.f32.mrb[0].mxu0
        %v1381 = vadd.f32 0.0, %v1380
        %v1382 = vpop.f32.mrb[0].mxu0
        %1383 = vmatprep.mubr.f32.mxu0 0.0
        %1384 = vmatmul.mubr.f32.gmra.mrb[0].mxu0 %v1303
        %v1385 = vpop.f32.mrb[0].mxu0
        %v1386 = vadd.f32 0.0, %v1385
        %v1387 = vpop.f32.mrb[0].mxu0
        %1388 = vdwg.mxu0
        %1393 = vrot.lane.b32.xlu0 %v516, 119
        %v1394 = vpop.permute.xlu0 %1393
        %1395 = vrot.lane.b32.xlu0 %v517, 119
        %v1396 = vpop.permute.xlu0 %1395
        %1397 = vrot.lane.b32.xlu0 %v518, 119
        %v1398 = vpop.permute.xlu0 %1397
        %1399 = vrot.lane.b32.xlu0 %v519, 119
        %v1400 = vpop.permute.xlu0 %1399
        %v1405 = vadd.f32 %v1371, %v1394
        %v1406 = vadd.f32 %v1376, %v1396
        %v1407 = vadd.f32 %v1381, %v1398
        %v1408 = vadd.f32 %v1386, %v1400
        %v1409 = vld [vmem:[%s515] sm:$0xff]
        %v1410 = vld [vmem:[%s515 + $0x8] sm:$0xff]
        %1411 = vrot.lane.b32.xlu0 %v1409, 17
        %v1412 = vpop.permute.xlu0 %1411
        %1413 = vrot.lane.b32.xlu0 %v1410, 17
        %v1414 = vpop.permute.xlu0 %1413
        %v1415 = vlaneseq
        %v1416 = vand.u32 %v1415, 127
        %vm1417 = vcmp.lt.s32.totalorder %v1416, 17
        %v1418 = vsel %vm1417, %v1412, %v1414
        %v1419 = vsel %vm1417, %v1414, %v1412
        %v1420 = vld [vmem:[#allocation8] ss:$8 sm:$0x3]
        %v1422 = vlaneseq
        %v1423 = vshrl.u32 %v1422, 7
        %v1424 = vsub.s32 0, %v1423
        %v1425 = vrot.slane %v1420, %v1424
        %v1426 = vlaneseq
        %v1427 = vshrl.u32 %v1426, 7
        %v1428 = vsub.s32 1, %v1427
        %v1429 = vrot.slane %v1420, %v1428
        %v1432 = vmul.f32 %v1419, %v1425
        %v1433 = vmul.f32 %v1418, %v1429
        %1434 = vrot.lane.b32.xlu0 %v1409, 16
        %v1435 = vpop.permute.xlu0 %1434
        %1436 = vrot.lane.b32.xlu0 %v1410, 16
        %v1437 = vpop.permute.xlu0 %1436
        %vm1438 = vcmp.lt.s32.totalorder %v1416, 16
        %v1439 = vsel %vm1438, %v1435, %v1437
        %v1440 = vsel %vm1438, %v1437, %v1435
        %s1441 = scalar_lea.vmem [#allocation8], 1
        %v1442 = vld [vmem:[%s1441] ss:$8 sm:$0x3]
        %v1444 = vlaneseq
        %v1445 = vshrl.u32 %v1444, 7
        %v1446 = vsub.s32 0, %v1445
        %v1447 = vrot.slane %v1442, %v1446
        %v1448 = vlaneseq
        %v1449 = vshrl.u32 %v1448, 7
        %v1450 = vsub.s32 1, %v1449
        %v1451 = vrot.slane %v1442, %v1450
        %v1454 = vmul.f32 %v1440, %v1447
        %v1455 = vmul.f32 %v1439, %v1451
        %1456 = vrot.lane.b32.xlu0 %v1409, 15
        %v1457 = vpop.permute.xlu0 %1456
        %1458 = vrot.lane.b32.xlu0 %v1410, 15
        %v1459 = vpop.permute.xlu0 %1458
        %vm1460 = vcmp.lt.s32.totalorder %v1416, 15
        %v1461 = vsel %vm1460, %v1457, %v1459
        %v1462 = vsel %vm1460, %v1459, %v1457
        %s1463 = scalar_lea.vmem [#allocation8], 2
        %v1464 = vld [vmem:[%s1463] ss:$8 sm:$0x3]
        %v1466 = vlaneseq
        %v1467 = vshrl.u32 %v1466, 7
        %v1468 = vsub.s32 0, %v1467
        %v1469 = vrot.slane %v1464, %v1468
        %v1470 = vlaneseq
        %v1471 = vshrl.u32 %v1470, 7
        %v1472 = vsub.s32 1, %v1471
        %v1473 = vrot.slane %v1464, %v1472
        %v1476 = vmul.f32 %v1462, %v1469
        %v1477 = vmul.f32 %v1461, %v1473
        %1478 = vrot.lane.b32.xlu0 %v1409, 1
        %v1479 = vpop.permute.xlu0 %1478
        %1480 = vrot.lane.b32.xlu0 %v1410, 1
        %v1481 = vpop.permute.xlu0 %1480
        %vm1482 = vcmp.lt.s32.totalorder %v1416, 1
        %v1483 = vsel %vm1482, %v1479, %v1481
        %v1484 = vsel %vm1482, %v1481, %v1479
        %s1485 = scalar_lea.vmem [#allocation8], 3
        %v1486 = vld [vmem:[%s1485] ss:$8 sm:$0x3]
        %v1488 = vlaneseq
        %v1489 = vshrl.u32 %v1488, 7
        %v1490 = vsub.s32 0, %v1489
        %v1491 = vrot.slane %v1486, %v1490
        %v1492 = vlaneseq
        %v1493 = vshrl.u32 %v1492, 7
        %v1494 = vsub.s32 1, %v1493
        %v1495 = vrot.slane %v1486, %v1494
        %v1498 = vmul.f32 %v1484, %v1491
        %v1499 = vmul.f32 %v1483, %v1495
        %1500 = vrot.lane.b32.xlu0 %v1409, 127
        %v1501 = vpop.permute.xlu0 %1500
        %1502 = vrot.lane.b32.xlu0 %v1410, 127
        %v1503 = vpop.permute.xlu0 %1502
        %vm1504 = vcmp.lt.s32.totalorder %v1416, 127
        %v1505 = vsel %vm1504, %v1501, %v1503
        %v1506 = vsel %vm1504, %v1503, %v1501
        %s1507 = scalar_lea.vmem [#allocation8], 5
        %v1508 = vld [vmem:[%s1507] ss:$8 sm:$0x3]
        %v1510 = vlaneseq
        %v1511 = vshrl.u32 %v1510, 7
        %v1512 = vsub.s32 0, %v1511
        %v1513 = vrot.slane %v1508, %v1512
        %v1514 = vlaneseq
        %v1515 = vshrl.u32 %v1514, 7
        %v1516 = vsub.s32 1, %v1515
        %v1517 = vrot.slane %v1508, %v1516
        %v1520 = vmul.f32 %v1505, %v1513
        %v1521 = vmul.f32 %v1506, %v1517
        %1522 = vrot.lane.b32.xlu0 %v1409, 113
        %v1523 = vpop.permute.xlu0 %1522
        %1524 = vrot.lane.b32.xlu0 %v1410, 113
        %v1525 = vpop.permute.xlu0 %1524
        %vm1526 = vcmp.lt.s32.totalorder %v1416, 113
        %v1527 = vsel %vm1526, %v1523, %v1525
        %v1528 = vsel %vm1526, %v1525, %v1523
        %s1529 = scalar_lea.vmem [#allocation8], 6
        %v1530 = vld [vmem:[%s1529] ss:$8 sm:$0x3]
        %v1532 = vlaneseq
        %v1533 = vshrl.u32 %v1532, 7
        %v1534 = vsub.s32 0, %v1533
        %v1535 = vrot.slane %v1530, %v1534
        %v1536 = vlaneseq
        %v1537 = vshrl.u32 %v1536, 7
        %v1538 = vsub.s32 1, %v1537
        %v1539 = vrot.slane %v1530, %v1538
        %v1542 = vmul.f32 %v1527, %v1535
        %v1543 = vmul.f32 %v1528, %v1539
        %1544 = vrot.lane.b32.xlu0 %v1409, 112
        %v1545 = vpop.permute.xlu0 %1544
        %1546 = vrot.lane.b32.xlu0 %v1410, 112
        %v1547 = vpop.permute.xlu0 %1546
        %vm1548 = vcmp.lt.s32.totalorder %v1416, 112
        %v1549 = vsel %vm1548, %v1545, %v1547
        %v1550 = vsel %vm1548, %v1547, %v1545
        %s1551 = scalar_lea.vmem [#allocation8], 7
        %v1552 = vld [vmem:[%s1551] ss:$8 sm:$0x3]
        %v1554 = vlaneseq
        %v1555 = vshrl.u32 %v1554, 7
        %v1556 = vsub.s32 0, %v1555
        %v1557 = vrot.slane %v1552, %v1556
        %v1558 = vlaneseq
        %v1559 = vshrl.u32 %v1558, 7
        %v1560 = vsub.s32 1, %v1559
        %v1561 = vrot.slane %v1552, %v1560
        %v1564 = vmul.f32 %v1549, %v1557
        %v1565 = vmul.f32 %v1550, %v1561
        %1566 = vrot.lane.b32.xlu0 %v1409, 111
        %v1567 = vpop.permute.xlu0 %1566
        %1568 = vrot.lane.b32.xlu0 %v1410, 111
        %v1569 = vpop.permute.xlu0 %1568
        %vm1570 = vcmp.lt.s32.totalorder %v1416, 111
        %v1571 = vsel %vm1570, %v1567, %v1569
        %v1572 = vsel %vm1570, %v1569, %v1567
        %s1573 = scalar_lea.vmem [#allocation8], 16
        %v1574 = vld [vmem:[%s1573] ss:$8 sm:$0x3]
        %v1576 = vlaneseq
        %v1577 = vshrl.u32 %v1576, 7
        %v1578 = vsub.s32 0, %v1577
        %v1579 = vrot.slane %v1574, %v1578
        %v1580 = vlaneseq
        %v1581 = vshrl.u32 %v1580, 7
        %v1582 = vsub.s32 1, %v1581
        %v1583 = vrot.slane %v1574, %v1582
        %v1586 = vmul.f32 %v1571, %v1579
        %v1587 = vmul.f32 %v1572, %v1583
        %v1588 = vld [vmem:[#allocation2] sm:$0xff]
        %v1589 = vld [vmem:[#allocation2 + $0x8] sm:$0xff]
        %v1590 = vld [vmem:[#allocation2 + $0x10] sm:$0xff]
        %v1591 = vld [vmem:[#allocation2 + $0x18] sm:$0xff]
        %1592 = vset.pattern.permute.xlu0 0
        %1593 = vperm.xlu0 %1592, %v516
        %v1594 = vpop.permute.xlu0 %1593
        %1596 = vset.pattern.permute.xlu0 0
        %1597 = vperm.xlu0 %1596, %v517
        %v1598 = vpop.permute.xlu0 %1597
        %1600 = vset.pattern.permute.xlu0 0
        %1601 = vperm.xlu0 %1600, %v518
        %v1602 = vpop.permute.xlu0 %1601
        %1604 = vset.pattern.permute.xlu0 0
        %1605 = vperm.xlu0 %1604, %v519
        %v1606 = vpop.permute.xlu0 %1605
        %vm1608 = vcmask 588800
        %v1610 = vsel %vm1608, %v1588, 0
        %v1613 = vsel %vm1608, %v1589, 0
        %v1616 = vsel %vm1608, %v1590, 0
        %v1619 = vsel %vm1608, %v1591, 0
        %1621 = vmatprep.subr.mxu0 %v1433
        %1622 = vmatpush1.msra.mxu0 %v1432
        %1623 = vmatprep.subr.mxu0 %v1455
        %1624 = vmatpush1.msra.mxu0 %v1454
        %1625 = vmatprep.subr.mxu0 %v1477
        %1626 = vmatpush1.msra.mxu0 %v1476
        %1627 = vmatprep.subr.mxu0 %v1499
        %1628 = vmatpush1.msra.mxu0 %v1498
        %1629 = vmatprep.subr.mxu0 %v1410
        %1630 = vmatpush1.msra.mxu0 %v1409
        %1631 = vmatprep.subr.mxu0 %v1521
        %1632 = vmatpush1.msra.mxu0 %v1520
        %1633 = vmatprep.subr.mxu0 %v1543
        %1634 = vmatpush1.msra.mxu0 %v1542
        %1635 = vmatprep.subr.mxu0 %v1565
        %1636 = vmatpush1.msra.mxu0 %v1564
        %1637 = vmatprep.subr.mxu0 %v1587
        %1638 = vmatpush1.msra.mxu0 %v1586
        %1639 = vmatprep.subr.mxu0 0.0
        %1640 = vmatpush1.msra.mxu0 0.0
        %1641 = vmatprep.subr.mxu0 0.0
        %1642 = vmatpush1.msra.mxu0 0.0
        %1643 = vmatprep.subr.mxu0 0.0
        %1644 = vmatpush1.msra.mxu0 0.0
        %1645 = vmatprep.subr.mxu0 0.0
        %1646 = vmatpush1.msra.mxu0 0.0
        %1647 = vmatprep.subr.mxu0 0.0
        %1648 = vmatpush1.msra.mxu0 0.0
        %1649 = vmatprep.subr.mxu0 0.0
        %1650 = vmatpush1.msra.mxu0 0.0
        %1651 = vmatprep.subr.mxu0 0.0
        %1652 = vmatpush1.msra.mxu0 0.0
        %1653 = vmatprep.subr.mxu0 0.0
        %1654 = vmatpush1.msra.mxu0 0.0
        %1655 = vmatprep.subr.mxu0 0.0
        %1656 = vmatpush1.msra.mxu0 0.0
        %1657 = vmatprep.subr.mxu0 0.0
        %1658 = vmatpush1.msra.mxu0 0.0
        %1659 = vmatprep.subr.mxu0 0.0
        %1660 = vmatpush1.msra.mxu0 0.0
        %1661 = vmatprep.subr.mxu0 0.0
        %1662 = vmatpush1.msra.mxu0 0.0
        %1663 = vmatprep.subr.mxu0 0.0
        %1664 = vmatpush1.msra.mxu0 0.0
        %1665 = vmatprep.subr.mxu0 0.0
        %1666 = vmatpush1.msra.mxu0 0.0
        %1667 = vmatprep.subr.mxu0 0.0
        %1668 = vmatpush1.msra.mxu0 0.0
        %1669 = vmatprep.subr.mxu0 0.0
        %1670 = vmatpush1.msra.mxu0 0.0
        %1671 = vmatprep.subr.mxu0 0.0
        %1672 = vmatpush1.msra.mxu0 0.0
        %1673 = vmatprep.subr.mxu0 0.0
        %1674 = vmatpush1.msra.mxu0 0.0
        %1675 = vmatprep.subr.mxu0 0.0
        %1676 = vmatpush1.msra.mxu0 0.0
        %1677 = vmatprep.subr.mxu0 0.0
        %1678 = vmatpush1.msra.mxu0 0.0
        %1679 = vmatprep.subr.mxu0 0.0
        %1680 = vmatpush1.msra.mxu0 0.0
        %1681 = vmatprep.subr.mxu0 0.0
        %1682 = vmatpush1.msra.mxu0 0.0
        %1683 = vmatprep.subr.mxu0 0.0
        %1684 = vmatpush1.msra.mxu0 0.0
        %1685 = vmatprep.mubr.f32.mxu0 0.0
        %1686 = vmatmul.mubr.f32.gmra.mrb[0].mxu0 %v1610
        %v1687 = vpop.f32.mrb[0].mxu0
        %v1688 = vadd.f32 %v1594, %v1687
        %v1689 = vpop.f32.mrb[0].mxu0
        %v1690 = vadd.f32 %v1594, %v1689
        %1691 = vmatprep.mubr.f32.mxu0 0.0
        %1692 = vmatmul.mubr.f32.gmra.mrb[0].mxu0 %v1613
        %v1693 = vpop.f32.mrb[0].mxu0
        %v1694 = vadd.f32 %v1598, %v1693
        %v1695 = vpop.f32.mrb[0].mxu0
        %v1696 = vadd.f32 %v1598, %v1695
        %1697 = vmatprep.mubr.f32.mxu0 0.0
        %1698 = vmatmul.mubr.f32.gmra.mrb[0].mxu0 %v1616
        %v1699 = vpop.f32.mrb[0].mxu0
        %v1700 = vadd.f32 %v1602, %v1699
        %v1701 = vpop.f32.mrb[0].mxu0
        %v1702 = vadd.f32 %v1602, %v1701
        %1703 = vmatprep.mubr.f32.mxu0 0.0
        %1704 = vmatmul.mubr.f32.gmra.mrb[0].mxu0 %v1619
        %v1705 = vpop.f32.mrb[0].mxu0
        %v1706 = vadd.f32 %v1606, %v1705
        %v1707 = vpop.f32.mrb[0].mxu0
        %v1708 = vadd.f32 %v1606, %v1707
        %1709 = vdwg.mxu0
        %v1710 = vld [vmem:[#allocation7] sm:$0xff]
        %v1711 = vld [vmem:[#allocation7 + $0x8] sm:$0xff]
        %v1712 = vld [vmem:[#allocation7 + $0x10] sm:$0xff]
        %v1713 = vld [vmem:[#allocation7 + $0x18] sm:$0xff]
        %v1715 = vsel %vm657, %v1710, 0
        %v1718 = vsel %vm657, %v1711, 0
        %v1721 = vsel %vm657, %v1712, 0
        %v1724 = vsel %vm657, %v1713, 0
        %1726 = vmatprep.subr.mxu0 %v1690
        %1727 = vmatpush1.msra.mxu0 %v1688
        %1728 = vmatprep.subr.mxu0 %v1696
        %1729 = vmatpush1.msra.mxu0 %v1694
        %1730 = vmatprep.subr.mxu0 %v1702
        %1731 = vmatpush1.msra.mxu0 %v1700
        %1732 = vmatprep.subr.mxu0 %v1708
        %1733 = vmatpush1.msra.mxu0 %v1706
        %1734 = vmatprep.subr.mxu0 0.0
        %1735 = vmatpush1.msra.mxu0 0.0
        %1736 = vmatprep.subr.mxu0 0.0
        %1737 = vmatpush1.msra.mxu0 0.0
        %1738 = vmatprep.subr.mxu0 0.0
        %1739 = vmatpush1.msra.mxu0 0.0
        %1740 = vmatprep.subr.mxu0 0.0
        %1741 = vmatpush1.msra.mxu0 0.0
        %1742 = vmatprep.subr.mxu0 0.0
        %1743 = vmatpush1.msra.mxu0 0.0
        %1744 = vmatprep.subr.mxu0 0.0
        %1745 = vmatpush1.msra.mxu0 0.0
        %1746 = vmatprep.subr.mxu0 0.0
        %1747 = vmatpush1.msra.mxu0 0.0
        %1748 = vmatprep.subr.mxu0 0.0
        %1749 = vmatpush1.msra.mxu0 0.0
        %1750 = vmatprep.subr.mxu0 0.0
        %1751 = vmatpush1.msra.mxu0 0.0
        %1752 = vmatprep.subr.mxu0 0.0
        %1753 = vmatpush1.msra.mxu0 0.0
        %1754 = vmatprep.subr.mxu0 0.0
        %1755 = vmatpush1.msra.mxu0 0.0
        %1756 = vmatprep.subr.mxu0 0.0
        %1757 = vmatpush1.msra.mxu0 0.0
        %1758 = vmatprep.subr.mxu0 0.0
        %1759 = vmatpush1.msra.mxu0 0.0
        %1760 = vmatprep.subr.mxu0 0.0
        %1761 = vmatpush1.msra.mxu0 0.0
        %1762 = vmatprep.subr.mxu0 0.0
        %1763 = vmatpush1.msra.mxu0 0.0
        %1764 = vmatprep.subr.mxu0 0.0
        %1765 = vmatpush1.msra.mxu0 0.0
        %1766 = vmatprep.subr.mxu0 0.0
        %1767 = vmatpush1.msra.mxu0 0.0
        %1768 = vmatprep.subr.mxu0 0.0
        %1769 = vmatpush1.msra.mxu0 0.0
        %1770 = vmatprep.subr.mxu0 0.0
        %1771 = vmatpush1.msra.mxu0 0.0
        %1772 = vmatprep.subr.mxu0 0.0
        %1773 = vmatpush1.msra.mxu0 0.0
        %1774 = vmatprep.subr.mxu0 0.0
        %1775 = vmatpush1.msra.mxu0 0.0
        %1776 = vmatprep.subr.mxu0 0.0
        %1777 = vmatpush1.msra.mxu0 0.0
        %1778 = vmatprep.subr.mxu0 0.0
        %1779 = vmatpush1.msra.mxu0 0.0
        %1780 = vmatprep.subr.mxu0 0.0
        %1781 = vmatpush1.msra.mxu0 0.0
        %1782 = vmatprep.subr.mxu0 0.0
        %1783 = vmatpush1.msra.mxu0 0.0
        %1784 = vmatprep.subr.mxu0 0.0
        %1785 = vmatpush1.msra.mxu0 0.0
        %1786 = vmatprep.subr.mxu0 0.0
        %1787 = vmatpush1.msra.mxu0 0.0
        %1788 = vmatprep.subr.mxu0 0.0
        %1789 = vmatpush1.msra.mxu0 0.0
        %1790 = vmatprep.mubr.f32.mxu0 0.0
        %1791 = vmatmul.mubr.f32.gmra.mrb[0].mxu0 %v1715
        %v1792 = vpop.f32.mrb[0].mxu0
        %v1793 = vadd.f32 0.0, %v1792
        %v1794 = vpop.f32.mrb[0].mxu0
        %v1795 = vadd.f32 0.0, %v1794
        %1796 = vmatprep.mubr.f32.mxu0 0.0
        %1797 = vmatmul.mubr.f32.gmra.mrb[0].mxu0 %v1718
        %v1798 = vpop.f32.mrb[0].mxu0
        %v1799 = vadd.f32 0.0, %v1798
        %v1800 = vpop.f32.mrb[0].mxu0
        %v1801 = vadd.f32 0.0, %v1800
        %1802 = vmatprep.mubr.f32.mxu0 0.0
        %1803 = vmatmul.mubr.f32.gmra.mrb[0].mxu0 %v1721
        %v1804 = vpop.f32.mrb[0].mxu0
        %v1805 = vadd.f32 0.0, %v1804
        %v1806 = vpop.f32.mrb[0].mxu0
        %v1807 = vadd.f32 0.0, %v1806
        %1808 = vmatprep.mubr.f32.mxu0 0.0
        %1809 = vmatmul.mubr.f32.gmra.mrb[0].mxu0 %v1724
        %v1810 = vpop.f32.mrb[0].mxu0
        %v1811 = vadd.f32 0.0, %v1810
        %v1812 = vpop.f32.mrb[0].mxu0
        %v1813 = vadd.f32 0.0, %v1812
        %1814 = vdwg.mxu0
        %v1815 = vmul.f32 %v1688, %v1688
        %v1816 = vmul.f32 %v1690, %v1690
        %v1817 = vmul.f32 %v1694, %v1694
        %v1818 = vmul.f32 %v1696, %v1696
        %v1819 = vmul.f32 %v1700, %v1700
        %v1820 = vmul.f32 %v1702, %v1702
        %v1821 = vmul.f32 %v1706, %v1706
        %v1822 = vmul.f32 %v1708, %v1708
        %1823 = vmatprep.subr.mxu0 %v1816
        %1824 = vmatpush1.msra.mxu0 %v1815
        %1825 = vmatprep.subr.mxu0 %v1818
        %1826 = vmatpush1.msra.mxu0 %v1817
        %1827 = vmatprep.subr.mxu0 %v1820
        %1828 = vmatpush1.msra.mxu0 %v1819
        %1829 = vmatprep.subr.mxu0 %v1822
        %1830 = vmatpush1.msra.mxu0 %v1821
        %1831 = vmatprep.subr.mxu0 0.0
        %1832 = vmatpush1.msra.mxu0 0.0
        %1833 = vmatprep.subr.mxu0 0.0
        %1834 = vmatpush1.msra.mxu0 0.0
        %1835 = vmatprep.subr.mxu0 0.0
        %1836 = vmatpush1.msra.mxu0 0.0
        %1837 = vmatprep.subr.mxu0 0.0
        %1838 = vmatpush1.msra.mxu0 0.0
        %1839 = vmatprep.subr.mxu0 0.0
        %1840 = vmatpush1.msra.mxu0 0.0
        %1841 = vmatprep.subr.mxu0 0.0
        %1842 = vmatpush1.msra.mxu0 0.0
        %1843 = vmatprep.subr.mxu0 0.0
        %1844 = vmatpush1.msra.mxu0 0.0
        %1845 = vmatprep.subr.mxu0 0.0
        %1846 = vmatpush1.msra.mxu0 0.0
        %1847 = vmatprep.subr.mxu0 0.0
        %1848 = vmatpush1.msra.mxu0 0.0
        %1849 = vmatprep.subr.mxu0 0.0
        %1850 = vmatpush1.msra.mxu0 0.0
        %1851 = vmatprep.subr.mxu0 0.0
        %1852 = vmatpush1.msra.mxu0 0.0
        %1853 = vmatprep.subr.mxu0 0.0
        %1854 = vmatpush1.msra.mxu0 0.0
        %1855 = vmatprep.subr.mxu0 0.0
        %1856 = vmatpush1.msra.mxu0 0.0
        %1857 = vmatprep.subr.mxu0 0.0
        %1858 = vmatpush1.msra.mxu0 0.0
        %1859 = vmatprep.subr.mxu0 0.0
        %1860 = vmatpush1.msra.mxu0 0.0
        %1861 = vmatprep.subr.mxu0 0.0
        %1862 = vmatpush1.msra.mxu0 0.0
        %1863 = vmatprep.subr.mxu0 0.0
        %1864 = vmatpush1.msra.mxu0 0.0
        %1865 = vmatprep.subr.mxu0 0.0
        %1866 = vmatpush1.msra.mxu0 0.0
        %1867 = vmatprep.subr.mxu0 0.0
        %1868 = vmatpush1.msra.mxu0 0.0
        %1869 = vmatprep.subr.mxu0 0.0
        %1870 = vmatpush1.msra.mxu0 0.0
        %1871 = vmatprep.subr.mxu0 0.0
        %1872 = vmatpush1.msra.mxu0 0.0
        %1873 = vmatprep.subr.mxu0 0.0
        %1874 = vmatpush1.msra.mxu0 0.0
        %1875 = vmatprep.subr.mxu0 0.0
        %1876 = vmatpush1.msra.mxu0 0.0
        %1877 = vmatprep.subr.mxu0 0.0
        %1878 = vmatpush1.msra.mxu0 0.0
        %1879 = vmatprep.subr.mxu0 0.0
        %1880 = vmatpush1.msra.mxu0 0.0
        %1881 = vmatprep.subr.mxu0 0.0
        %1882 = vmatpush1.msra.mxu0 0.0
        %1883 = vmatprep.subr.mxu0 0.0
        %1884 = vmatpush1.msra.mxu0 0.0
        %1885 = vmatprep.subr.mxu0 0.0
        %1886 = vmatpush1.msra.mxu0 0.0
        %1887 = vmatprep.mubr.f32.mxu0 0.0
        %1888 = vmatmul.mubr.f32.gmra.mrb[0].mxu0 %v1715
        %v1889 = vpop.f32.mrb[0].mxu0
        %v1890 = vadd.f32 0.0, %v1889
        %v1891 = vpop.f32.mrb[0].mxu0
        %v1892 = vadd.f32 0.0, %v1891
        %1893 = vmatprep.mubr.f32.mxu0 0.0
        %1894 = vmatmul.mubr.f32.gmra.mrb[0].mxu0 %v1718
        %v1895 = vpop.f32.mrb[0].mxu0
        %v1896 = vadd.f32 0.0, %v1895
        %v1897 = vpop.f32.mrb[0].mxu0
        %v1898 = vadd.f32 0.0, %v1897
        %1899 = vmatprep.mubr.f32.mxu0 0.0
        %1900 = vmatmul.mubr.f32.gmra.mrb[0].mxu0 %v1721
        %v1901 = vpop.f32.mrb[0].mxu0
        %v1902 = vadd.f32 0.0, %v1901
        %v1903 = vpop.f32.mrb[0].mxu0
        %v1904 = vadd.f32 0.0, %v1903
        %1905 = vmatprep.mubr.f32.mxu0 0.0
        %1906 = vmatmul.mubr.f32.gmra.mrb[0].mxu0 %v1724
        %v1907 = vpop.f32.mrb[0].mxu0
        %v1908 = vadd.f32 0.0, %v1907
        %v1909 = vpop.f32.mrb[0].mxu0
        %v1910 = vadd.f32 0.0, %v1909
        %1911 = vdwg.mxu0
        %v1912 = vadd.f32 %v1793, %v1795
        %1913 = vadd.xlane.f32.xlu0 %v1912
        %v1914 = vpop.xlane.xlu0 %1913
        %v1915 = vadd.f32 %v1799, %v1801
        %1916 = vadd.xlane.f32.xlu0 %v1915
        %v1917 = vpop.xlane.xlu0 %1916
        %v1918 = vadd.f32 %v1805, %v1807
        %1919 = vadd.xlane.f32.xlu0 %v1918
        %v1920 = vpop.xlane.xlu0 %1919
        %v1921 = vadd.f32 %v1811, %v1813
        %1922 = vadd.xlane.f32.xlu0 %v1921
        %v1923 = vpop.xlane.xlu0 %1922
        %v1924 = vmul.f32 %v1914, 0.0009765625
        %v1925 = vmul.f32 %v1917, 0.0009765625
        %v1926 = vmul.f32 %v1920, 0.0009765625
        %v1927 = vmul.f32 %v1923, 0.0009765625
        %v1928 = vadd.f32 %v1890, %v1892
        %1929 = vadd.xlane.f32.xlu0 %v1928
        %v1930 = vpop.xlane.xlu0 %1929
        %v1931 = vadd.f32 %v1896, %v1898
        %1932 = vadd.xlane.f32.xlu0 %v1931
        %v1933 = vpop.xlane.xlu0 %1932
        %v1934 = vadd.f32 %v1902, %v1904
        %1935 = vadd.xlane.f32.xlu0 %v1934
        %v1936 = vpop.xlane.xlu0 %1935
        %v1937 = vadd.f32 %v1908, %v1910
        %1938 = vadd.xlane.f32.xlu0 %v1937
        %v1939 = vpop.xlane.xlu0 %1938
        %v1940 = vmul.f32 %v1930, 0.0009765625
        %v1941 = vmul.f32 %v1933, 0.0009765625
        %v1942 = vmul.f32 %v1936, 0.0009765625
        %v1943 = vmul.f32 %v1939, 0.0009765625
        %v1944 = vmul.f32 %v1924, %v1924
        %v1945 = vmul.f32 %v1925, %v1925
        %v1946 = vmul.f32 %v1926, %v1926
        %v1947 = vmul.f32 %v1927, %v1927
        %v1948 = vsub.f32 %v1940, %v1944
        %v1949 = vsub.f32 %v1941, %v1945
        %v1950 = vsub.f32 %v1942, %v1946
        %v1951 = vsub.f32 %v1943, %v1947
        %v1952 = vmax.f32 %v1948, 0.0
        %v1953 = vmax.f32 %v1949, 0.0
        %v1954 = vmax.f32 %v1950, 0.0
        %v1955 = vmax.f32 %v1951, 0.0
        %v1956 = vsub.f32 %v1688, %v1924
        %v1957 = vsub.f32 %v1690, %v1924
        %v1958 = vsub.f32 %v1694, %v1925
        %v1959 = vsub.f32 %v1696, %v1925
        %v1960 = vsub.f32 %v1700, %v1926
        %v1961 = vsub.f32 %v1702, %v1926
        %v1962 = vsub.f32 %v1706, %v1927
        %v1963 = vsub.f32 %v1708, %v1927
        %v1964 = vadd.f32 %v1952, 1e-05
        %v1965 = vadd.f32 %v1953, 1e-05
        %v1966 = vadd.f32 %v1954, 1e-05
        %v1967 = vadd.f32 %v1955, 1e-05
        %v1968 = vrsqrt.pop %v1964
        %v1969 = vrsqrt.pop %v1965
        %v1970 = vrsqrt.pop %v1966
        %v1971 = vrsqrt.pop %v1967
        %v1972 = vmul.f32 %v1956, %v1968
        %v1973 = vmul.f32 %v1957, %v1968
        %v1974 = vmul.f32 %v1958, %v1969
        %v1975 = vmul.f32 %v1959, %v1969
        %v1976 = vmul.f32 %v1960, %v1970
        %v1977 = vmul.f32 %v1961, %v1970
        %v1978 = vmul.f32 %v1962, %v1971
        %v1979 = vmul.f32 %v1963, %v1971
        %1980 = vset.pattern.permute.xlu0 1
        %1981 = vperm.xlu0 %1980, %v516
        %v1982 = vpop.permute.xlu0 %1981
        %1984 = vset.pattern.permute.xlu0 1
        %1985 = vperm.xlu0 %1984, %v517
        %v1986 = vpop.permute.xlu0 %1985
        %1988 = vset.pattern.permute.xlu0 1
        %1989 = vperm.xlu0 %1988, %v518
        %v1990 = vpop.permute.xlu0 %1989
        %1992 = vset.pattern.permute.xlu0 1
        %1993 = vperm.xlu0 %1992, %v519
        %v1994 = vpop.permute.xlu0 %1993
        %v1996 = vmul.f32 %v1972, %v1982
        %v1997 = vmul.f32 %v1973, %v1982
        %v1998 = vmul.f32 %v1974, %v1986
        %v1999 = vmul.f32 %v1975, %v1986
        %v2000 = vmul.f32 %v1976, %v1990
        %v2001 = vmul.f32 %v1977, %v1990
        %v2002 = vmul.f32 %v1978, %v1994
        %v2003 = vmul.f32 %v1979, %v1994
        %2004 = vset.pattern.permute.xlu0 2
        %2005 = vperm.xlu0 %2004, %v516
        %v2006 = vpop.permute.xlu0 %2005
        %2008 = vset.pattern.permute.xlu0 2
        %2009 = vperm.xlu0 %2008, %v517
        %v2010 = vpop.permute.xlu0 %2009
        %2012 = vset.pattern.permute.xlu0 2
        %2013 = vperm.xlu0 %2012, %v518
        %v2014 = vpop.permute.xlu0 %2013
        %2016 = vset.pattern.permute.xlu0 2
        %2017 = vperm.xlu0 %2016, %v519
        %v2018 = vpop.permute.xlu0 %2017
        %v2020 = vadd.f32 %v1996, %v2006
        %v2021 = vadd.f32 %v1997, %v2006
        %v2022 = vadd.f32 %v1998, %v2010
        %v2023 = vadd.f32 %v1999, %v2010
        %v2024 = vadd.f32 %v2000, %v2014
        %v2025 = vadd.f32 %v2001, %v2014
        %v2026 = vadd.f32 %v2002, %v2018
        %v2027 = vadd.f32 %v2003, %v2018
        %v2028 = vxor.u32 %v2020, 2147483648
        %v2029 = vxor.u32 %v2021, 2147483648
        %v2030 = vxor.u32 %v2022, 2147483648
        %v2031 = vxor.u32 %v2023, 2147483648
        %v2032 = vxor.u32 %v2024, 2147483648
        %v2033 = vxor.u32 %v2025, 2147483648
        %v2034 = vxor.u32 %v2026, 2147483648
        %v2035 = vxor.u32 %v2027, 2147483648
        %v2036 = vmul.f32 %v2028, 1.442695
        %v2037 = vpow.pop %v2036
        %v2038 = vmul.f32 %v2029, 1.442695
        %v2039 = vpow.pop %v2038
        %v2040 = vmul.f32 %v2030, 1.442695
        %v2041 = vpow.pop %v2040
        %v2042 = vmul.f32 %v2031, 1.442695
        %v2043 = vpow.pop %v2042
        %v2044 = vmul.f32 %v2032, 1.442695
        %v2045 = vpow.pop %v2044
        %v2046 = vmul.f32 %v2033, 1.442695
        %v2047 = vpow.pop %v2046
        %v2048 = vmul.f32 %v2034, 1.442695
        %v2049 = vpow.pop %v2048
        %v2050 = vmul.f32 %v2035, 1.442695
        %v2051 = vpow.pop %v2050
        %v2052 = vadd.f32 %v2037, 1.0
        %v2053 = vadd.f32 %v2039, 1.0
        %v2054 = vadd.f32 %v2041, 1.0
        %v2055 = vadd.f32 %v2043, 1.0
        %v2056 = vadd.f32 %v2045, 1.0
        %v2057 = vadd.f32 %v2047, 1.0
        %v2058 = vadd.f32 %v2049, 1.0
        %v2059 = vadd.f32 %v2051, 1.0
        %v2060 = vrcp.pop %v2052
        %v2061 = vmul.f32 1.0, %v2060
        %v2062 = vrcp.pop %v2053
        %v2063 = vmul.f32 1.0, %v2062
        %v2064 = vrcp.pop %v2054
        %v2065 = vmul.f32 1.0, %v2064
        %v2066 = vrcp.pop %v2055
        %v2067 = vmul.f32 1.0, %v2066
        %v2068 = vrcp.pop %v2056
        %v2069 = vmul.f32 1.0, %v2068
        %v2070 = vrcp.pop %v2057
        %v2071 = vmul.f32 1.0, %v2070
        %v2072 = vrcp.pop %v2058
        %v2073 = vmul.f32 1.0, %v2072
        %v2074 = vrcp.pop %v2059
        %v2075 = vmul.f32 1.0, %v2074
        %v2076 = vmul.f32 %v2020, %v2061
        %v2077 = vmul.f32 %v2021, %v2063
        %v2078 = vmul.f32 %v2022, %v2065
        %v2079 = vmul.f32 %v2023, %v2067
        %v2080 = vmul.f32 %v2024, %v2069
        %v2081 = vmul.f32 %v2025, %v2071
        %v2082 = vmul.f32 %v2026, %v2073
        %v2083 = vmul.f32 %v2027, %v2075
        %2084 = vrot.lane.b32.xlu0 %v2076, 17
        %v2085 = vpop.permute.xlu0 %2084
        %2086 = vrot.lane.b32.xlu0 %v2078, 17
        %v2087 = vpop.permute.xlu0 %2086
        %2088 = vrot.lane.b32.xlu0 %v2080, 17
        %v2089 = vpop.permute.xlu0 %2088
        %2090 = vrot.lane.b32.xlu0 %v2082, 17
        %v2091 = vpop.permute.xlu0 %2090
        %2092 = vrot.lane.b32.xlu0 %v2077, 17
        %v2093 = vpop.permute.xlu0 %2092
        %2094 = vrot.lane.b32.xlu0 %v2079, 17
        %v2095 = vpop.permute.xlu0 %2094
        %2096 = vrot.lane.b32.xlu0 %v2081, 17
        %v2097 = vpop.permute.xlu0 %2096
        %2098 = vrot.lane.b32.xlu0 %v2083, 17
        %v2099 = vpop.permute.xlu0 %2098
        %v2100 = vsel %vm1417, %v2085, %v2093
        %v2101 = vsel %vm1417, %v2087, %v2095
        %v2102 = vsel %vm1417, %v2089, %v2097
        %v2103 = vsel %vm1417, %v2091, %v2099
        %v2104 = vsel %vm1417, %v2093, %v2085
        %v2105 = vsel %vm1417, %v2095, %v2087
        %v2106 = vsel %vm1417, %v2097, %v2089
        %v2107 = vsel %vm1417, %v2099, %v2091
        %v2108 = vmul.f32 %v2104, %v1425
        %v2109 = vmul.f32 %v2100, %v1429
        %v2110 = vmul.f32 %v2105, %v1425
        %v2111 = vmul.f32 %v2101, %v1429
        %v2112 = vmul.f32 %v2106, %v1425
        %v2113 = vmul.f32 %v2102, %v1429
        %v2114 = vmul.f32 %v2107, %v1425
        %v2115 = vmul.f32 %v2103, %v1429
        %2116 = vrot.lane.b32.xlu0 %v2076, 16
        %v2117 = vpop.permute.xlu0 %2116
        %2118 = vrot.lane.b32.xlu0 %v2078, 16
        %v2119 = vpop.permute.xlu0 %2118
        %2120 = vrot.lane.b32.xlu0 %v2080, 16
        %v2121 = vpop.permute.xlu0 %2120
        %2122 = vrot.lane.b32.xlu0 %v2082, 16
        %v2123 = vpop.permute.xlu0 %2122
        %2124 = vrot.lane.b32.xlu0 %v2077, 16
        %v2125 = vpop.permute.xlu0 %2124
        %2126 = vrot.lane.b32.xlu0 %v2079, 16
        %v2127 = vpop.permute.xlu0 %2126
        %2128 = vrot.lane.b32.xlu0 %v2081, 16
        %v2129 = vpop.permute.xlu0 %2128
        %2130 = vrot.lane.b32.xlu0 %v2083, 16
        %v2131 = vpop.permute.xlu0 %2130
        %v2132 = vsel %vm1438, %v2117, %v2125
        %v2133 = vsel %vm1438, %v2119, %v2127
        %v2134 = vsel %vm1438, %v2121, %v2129
        %v2135 = vsel %vm1438, %v2123, %v2131
        %v2136 = vsel %vm1438, %v2125, %v2117
        %v2137 = vsel %vm1438, %v2127, %v2119
        %v2138 = vsel %vm1438, %v2129, %v2121
        %v2139 = vsel %vm1438, %v2131, %v2123
        %v2140 = vmul.f32 %v2136, %v1447
        %v2141 = vmul.f32 %v2132, %v1451
        %v2142 = vmul.f32 %v2137, %v1447
        %v2143 = vmul.f32 %v2133, %v1451
        %v2144 = vmul.f32 %v2138, %v1447
        %v2145 = vmul.f32 %v2134, %v1451
        %v2146 = vmul.f32 %v2139, %v1447
        %v2147 = vmul.f32 %v2135, %v1451
        %2148 = vrot.lane.b32.xlu0 %v2076, 15
        %v2149 = vpop.permute.xlu0 %2148
        %2150 = vrot.lane.b32.xlu0 %v2078, 15
        %v2151 = vpop.permute.xlu0 %2150
        %2152 = vrot.lane.b32.xlu0 %v2080, 15
        %v2153 = vpop.permute.xlu0 %2152
        %2154 = vrot.lane.b32.xlu0 %v2082, 15
        %v2155 = vpop.permute.xlu0 %2154
        %2156 = vrot.lane.b32.xlu0 %v2077, 15
        %v2157 = vpop.permute.xlu0 %2156
        %2158 = vrot.lane.b32.xlu0 %v2079, 15
        %v2159 = vpop.permute.xlu0 %2158
        %2160 = vrot.lane.b32.xlu0 %v2081, 15
        %v2161 = vpop.permute.xlu0 %2160
        %2162 = vrot.lane.b32.xlu0 %v2083, 15
        %v2163 = vpop.permute.xlu0 %2162
        %v2164 = vsel %vm1460, %v2149, %v2157
        %v2165 = vsel %vm1460, %v2151, %v2159
        %v2166 = vsel %vm1460, %v2153, %v2161
        %v2167 = vsel %vm1460, %v2155, %v2163
        %v2168 = vsel %vm1460, %v2157, %v2149
        %v2169 = vsel %vm1460, %v2159, %v2151
        %v2170 = vsel %vm1460, %v2161, %v2153
        %v2171 = vsel %vm1460, %v2163, %v2155
        %v2172 = vmul.f32 %v2168, %v1469
        %v2173 = vmul.f32 %v2164, %v1473
        %v2174 = vmul.f32 %v2169, %v1469
        %v2175 = vmul.f32 %v2165, %v1473
        %v2176 = vmul.f32 %v2170, %v1469
        %v2177 = vmul.f32 %v2166, %v1473
        %v2178 = vmul.f32 %v2171, %v1469
        %v2179 = vmul.f32 %v2167, %v1473
        %2180 = vrot.lane.b32.xlu0 %v2076, 1
        %v2181 = vpop.permute.xlu0 %2180
        %2182 = vrot.lane.b32.xlu0 %v2078, 1
        %v2183 = vpop.permute.xlu0 %2182
        %2184 = vrot.lane.b32.xlu0 %v2080, 1
        %v2185 = vpop.permute.xlu0 %2184
        %2186 = vrot.lane.b32.xlu0 %v2082, 1
        %v2187 = vpop.permute.xlu0 %2186
        %2188 = vrot.lane.b32.xlu0 %v2077, 1
        %v2189 = vpop.permute.xlu0 %2188
        %2190 = vrot.lane.b32.xlu0 %v2079, 1
        %v2191 = vpop.permute.xlu0 %2190
        %2192 = vrot.lane.b32.xlu0 %v2081, 1
        %v2193 = vpop.permute.xlu0 %2192
        %2194 = vrot.lane.b32.xlu0 %v2083, 1
        %v2195 = vpop.permute.xlu0 %2194
        %v2196 = vsel %vm1482, %v2181, %v2189
        %v2197 = vsel %vm1482, %v2183, %v2191
        %v2198 = vsel %vm1482, %v2185, %v2193
        %v2199 = vsel %vm1482, %v2187, %v2195
        %v2200 = vsel %vm1482, %v2189, %v2181
        %v2201 = vsel %vm1482, %v2191, %v2183
        %v2202 = vsel %vm1482, %v2193, %v2185
        %v2203 = vsel %vm1482, %v2195, %v2187
        %v2204 = vmul.f32 %v2200, %v1491
        %v2205 = vmul.f32 %v2196, %v1495
        %v2206 = vmul.f32 %v2201, %v1491
        %v2207 = vmul.f32 %v2197, %v1495
        %v2208 = vmul.f32 %v2202, %v1491
        %v2209 = vmul.f32 %v2198, %v1495
        %v2210 = vmul.f32 %v2203, %v1491
        %v2211 = vmul.f32 %v2199, %v1495
        %2212 = vrot.lane.b32.xlu0 %v2076, 127
        %v2213 = vpop.permute.xlu0 %2212
        %2214 = vrot.lane.b32.xlu0 %v2078, 127
        %v2215 = vpop.permute.xlu0 %2214
        %2216 = vrot.lane.b32.xlu0 %v2080, 127
        %v2217 = vpop.permute.xlu0 %2216
        %2218 = vrot.lane.b32.xlu0 %v2082, 127
        %v2219 = vpop.permute.xlu0 %2218
        %2220 = vrot.lane.b32.xlu0 %v2077, 127
        %v2221 = vpop.permute.xlu0 %2220
        %2222 = vrot.lane.b32.xlu0 %v2079, 127
        %v2223 = vpop.permute.xlu0 %2222
        %2224 = vrot.lane.b32.xlu0 %v2081, 127
        %v2225 = vpop.permute.xlu0 %2224
        %2226 = vrot.lane.b32.xlu0 %v2083, 127
        %v2227 = vpop.permute.xlu0 %2226
        %v2228 = vsel %vm1504, %v2213, %v2221
        %v2229 = vsel %vm1504, %v2215, %v2223
        %v2230 = vsel %vm1504, %v2217, %v2225
        %v2231 = vsel %vm1504, %v2219, %v2227
        %v2232 = vsel %vm1504, %v2221, %v2213
        %v2233 = vsel %vm1504, %v2223, %v2215
        %v2234 = vsel %vm1504, %v2225, %v2217
        %v2235 = vsel %vm1504, %v2227, %v2219
        %v2236 = vmul.f32 %v2228, %v1513
        %v2237 = vmul.f32 %v2232, %v1517
        %v2238 = vmul.f32 %v2229, %v1513
        %v2239 = vmul.f32 %v2233, %v1517
        %v2240 = vmul.f32 %v2230, %v1513
        %v2241 = vmul.f32 %v2234, %v1517
        %v2242 = vmul.f32 %v2231, %v1513
        %v2243 = vmul.f32 %v2235, %v1517
        %2244 = vrot.lane.b32.xlu0 %v2076, 113
        %v2245 = vpop.permute.xlu0 %2244
        %2246 = vrot.lane.b32.xlu0 %v2078, 113
        %v2247 = vpop.permute.xlu0 %2246
        %2248 = vrot.lane.b32.xlu0 %v2080, 113
        %v2249 = vpop.permute.xlu0 %2248
        %2250 = vrot.lane.b32.xlu0 %v2082, 113
        %v2251 = vpop.permute.xlu0 %2250
        %2252 = vrot.lane.b32.xlu0 %v2077, 113
        %v2253 = vpop.permute.xlu0 %2252
        %2254 = vrot.lane.b32.xlu0 %v2079, 113
        %v2255 = vpop.permute.xlu0 %2254
        %2256 = vrot.lane.b32.xlu0 %v2081, 113
        %v2257 = vpop.permute.xlu0 %2256
        %2258 = vrot.lane.b32.xlu0 %v2083, 113
        %v2259 = vpop.permute.xlu0 %2258
        %v2260 = vsel %vm1526, %v2245, %v2253
        %v2261 = vsel %vm1526, %v2247, %v2255
        %v2262 = vsel %vm1526, %v2249, %v2257
        %v2263 = vsel %vm1526, %v2251, %v2259
        %v2264 = vsel %vm1526, %v2253, %v2245
        %v2265 = vsel %vm1526, %v2255, %v2247
        %v2266 = vsel %vm1526, %v2257, %v2249
        %v2267 = vsel %vm1526, %v2259, %v2251
        %v2268 = vmul.f32 %v2260, %v1535
        %v2269 = vmul.f32 %v2264, %v1539
        %v2270 = vmul.f32 %v2261, %v1535
        %v2271 = vmul.f32 %v2265, %v1539
        %v2272 = vmul.f32 %v2262, %v1535
        %v2273 = vmul.f32 %v2266, %v1539
        %v2274 = vmul.f32 %v2263, %v1535
        %v2275 = vmul.f32 %v2267, %v1539
        %2276 = vrot.lane.b32.xlu0 %v2076, 112
        %v2277 = vpop.permute.xlu0 %2276
        %2278 = vrot.lane.b32.xlu0 %v2078, 112
        %v2279 = vpop.permute.xlu0 %2278
        %2280 = vrot.lane.b32.xlu0 %v2080, 112
        %v2281 = vpop.permute.xlu0 %2280
        %2282 = vrot.lane.b32.xlu0 %v2082, 112
        %v2283 = vpop.permute.xlu0 %2282
        %2284 = vrot.lane.b32.xlu0 %v2077, 112
        %v2285 = vpop.permute.xlu0 %2284
        %2286 = vrot.lane.b32.xlu0 %v2079, 112
        %v2287 = vpop.permute.xlu0 %2286
        %2288 = vrot.lane.b32.xlu0 %v2081, 112
        %v2289 = vpop.permute.xlu0 %2288
        %2290 = vrot.lane.b32.xlu0 %v2083, 112
        %v2291 = vpop.permute.xlu0 %2290
        %v2292 = vsel %vm1548, %v2277, %v2285
        %v2293 = vsel %vm1548, %v2279, %v2287
        %v2294 = vsel %vm1548, %v2281, %v2289
        %v2295 = vsel %vm1548, %v2283, %v2291
        %v2296 = vsel %vm1548, %v2285, %v2277
        %v2297 = vsel %vm1548, %v2287, %v2279
        %v2298 = vsel %vm1548, %v2289, %v2281
        %v2299 = vsel %vm1548, %v2291, %v2283
        %v2300 = vmul.f32 %v2292, %v1557
        %v2301 = vmul.f32 %v2296, %v1561
        %v2302 = vmul.f32 %v2293, %v1557
        %v2303 = vmul.f32 %v2297, %v1561
        %v2304 = vmul.f32 %v2294, %v1557
        %v2305 = vmul.f32 %v2298, %v1561
        %v2306 = vmul.f32 %v2295, %v1557
        %v2307 = vmul.f32 %v2299, %v1561
        %2308 = vrot.lane.b32.xlu0 %v2076, 111
        %v2309 = vpop.permute.xlu0 %2308
        %2310 = vrot.lane.b32.xlu0 %v2078, 111
        %v2311 = vpop.permute.xlu0 %2310
        %2312 = vrot.lane.b32.xlu0 %v2080, 111
        %v2313 = vpop.permute.xlu0 %2312
        %2314 = vrot.lane.b32.xlu0 %v2082, 111
        %v2315 = vpop.permute.xlu0 %2314
        %2316 = vrot.lane.b32.xlu0 %v2077, 111
        %v2317 = vpop.permute.xlu0 %2316
        %2318 = vrot.lane.b32.xlu0 %v2079, 111
        %v2319 = vpop.permute.xlu0 %2318
        %2320 = vrot.lane.b32.xlu0 %v2081, 111
        %v2321 = vpop.permute.xlu0 %2320
        %2322 = vrot.lane.b32.xlu0 %v2083, 111
        %v2323 = vpop.permute.xlu0 %2322
        %v2324 = vsel %vm1570, %v2309, %v2317
        %v2325 = vsel %vm1570, %v2311, %v2319
        %v2326 = vsel %vm1570, %v2313, %v2321
        %v2327 = vsel %vm1570, %v2315, %v2323
        %v2328 = vsel %vm1570, %v2317, %v2309
        %v2329 = vsel %vm1570, %v2319, %v2311
        %v2330 = vsel %vm1570, %v2321, %v2313
        %v2331 = vsel %vm1570, %v2323, %v2315
        %v2332 = vmul.f32 %v2324, %v1579
        %v2333 = vmul.f32 %v2328, %v1583
        %v2334 = vmul.f32 %v2325, %v1579
        %v2335 = vmul.f32 %v2329, %v1583
        %v2336 = vmul.f32 %v2326, %v1579
        %v2337 = vmul.f32 %v2330, %v1583
        %v2338 = vmul.f32 %v2327, %v1579
        %v2339 = vmul.f32 %v2331, %v1583
        %v2340 = vld [vmem:[%s6] sm:$0xff]
        %v2341 = vld [vmem:[%s6 + $0x8] sm:$0xff]
        %v2342 = vld [vmem:[%s6 + $0x10] sm:$0xff]
        %v2343 = vld [vmem:[%s6 + $0x18] sm:$0xff]
        %v2344 = vld [vmem:[%s6 + $0x20] sm:$0xff]
        %v2345 = vld [vmem:[%s6 + $0x28] sm:$0xff]
        %v2346 = vld [vmem:[%s6 + $0x30] sm:$0xff]
        %v2347 = vld [vmem:[%s6 + $0x38] sm:$0xff]
        %v2348 = vld [vmem:[%s6 + $0x40] sm:$0xff]
        %v2349 = vld [vmem:[%s6 + $0x48] sm:$0xff]
        %v2350 = vld [vmem:[%s6 + $0x50] sm:$0xff]
        %v2351 = vld [vmem:[%s6 + $0x58] sm:$0xff]
        %2352 = vset.pattern.permute.xlu0 3
        %2353 = vperm.xlu0 %2352, %v516
        %v2354 = vpop.permute.xlu0 %2353
        %2356 = vset.pattern.permute.xlu0 3
        %2357 = vperm.xlu0 %2356, %v517
        %v2358 = vpop.permute.xlu0 %2357
        %2360 = vset.pattern.permute.xlu0 3
        %2361 = vperm.xlu0 %2360, %v518
        %v2362 = vpop.permute.xlu0 %2361
        %2364 = vset.pattern.permute.xlu0 3
        %2365 = vperm.xlu0 %2364, %v519
        %v2366 = vpop.permute.xlu0 %2365
        %v2369 = vsel %vm657, %v2342, 0
        %v2372 = vsel %vm657, %v2345, 0
        %v2375 = vsel %vm657, %v2348, 0
        %v2378 = vsel %vm657, %v2351, 0
        %2380 = vmatprep.subr.mxu0 %v2109
        %2381 = vmatpush1.msra.mxu0 %v2108
        %2382 = vmatprep.subr.mxu0 %v2111
        %2383 = vmatpush1.msra.mxu0 %v2110
        %2384 = vmatprep.subr.mxu0 %v2113
        %2385 = vmatpush1.msra.mxu0 %v2112
        %2386 = vmatprep.subr.mxu0 %v2115
        %2387 = vmatpush1.msra.mxu0 %v2114
        %2388 = vmatprep.subr.mxu0 %v2141
        %2389 = vmatpush1.msra.mxu0 %v2140
        %2390 = vmatprep.subr.mxu0 %v2143
        %2391 = vmatpush1.msra.mxu0 %v2142
        %2392 = vmatprep.subr.mxu0 %v2145
        %2393 = vmatpush1.msra.mxu0 %v2144
        %2394 = vmatprep.subr.mxu0 %v2147
        %2395 = vmatpush1.msra.mxu0 %v2146
        %2396 = vmatprep.subr.mxu0 %v2173
        %2397 = vmatpush1.msra.mxu0 %v2172
        %2398 = vmatprep.subr.mxu0 %v2175
        %2399 = vmatpush1.msra.mxu0 %v2174
        %2400 = vmatprep.subr.mxu0 %v2177
        %2401 = vmatpush1.msra.mxu0 %v2176
        %2402 = vmatprep.subr.mxu0 %v2179
        %2403 = vmatpush1.msra.mxu0 %v2178
        %2404 = vmatprep.subr.mxu0 %v2205
        %2405 = vmatpush1.msra.mxu0 %v2204
        %2406 = vmatprep.subr.mxu0 %v2207
        %2407 = vmatpush1.msra.mxu0 %v2206
        %2408 = vmatprep.subr.mxu0 %v2209
        %2409 = vmatpush1.msra.mxu0 %v2208
        %2410 = vmatprep.subr.mxu0 %v2211
        %2411 = vmatpush1.msra.mxu0 %v2210
        %2412 = vmatprep.subr.mxu0 %v2077
        %2413 = vmatpush1.msra.mxu0 %v2076
        %2414 = vmatprep.subr.mxu0 %v2079
        %2415 = vmatpush1.msra.mxu0 %v2078
        %2416 = vmatprep.subr.mxu0 %v2081
        %2417 = vmatpush1.msra.mxu0 %v2080
        %2418 = vmatprep.subr.mxu0 %v2083
        %2419 = vmatpush1.msra.mxu0 %v2082
        %2420 = vmatprep.subr.mxu0 %v2237
        %2421 = vmatpush1.msra.mxu0 %v2236
        %2422 = vmatprep.subr.mxu0 %v2239
        %2423 = vmatpush1.msra.mxu0 %v2238
        %2424 = vmatprep.subr.mxu0 %v2241
        %2425 = vmatpush1.msra.mxu0 %v2240
        %2426 = vmatprep.subr.mxu0 %v2243
        %2427 = vmatpush1.msra.mxu0 %v2242
        %2428 = vmatprep.subr.mxu0 %v2269
        %2429 = vmatpush1.msra.mxu0 %v2268
        %2430 = vmatprep.subr.mxu0 %v2271
        %2431 = vmatpush1.msra.mxu0 %v2270
        %2432 = vmatprep.subr.mxu0 %v2273
        %2433 = vmatpush1.msra.mxu0 %v2272
        %2434 = vmatprep.subr.mxu0 %v2275
        %2435 = vmatpush1.msra.mxu0 %v2274
        %2436 = vmatprep.subr.mxu0 %v2301
        %2437 = vmatpush1.msra.mxu0 %v2300
        %2438 = vmatprep.subr.mxu0 %v2303
        %2439 = vmatpush1.msra.mxu0 %v2302
        %2440 = vmatprep.subr.mxu0 %v2305
        %2441 = vmatpush1.msra.mxu0 %v2304
        %2442 = vmatprep.subr.mxu0 %v2307
        %2443 = vmatpush1.msra.mxu0 %v2306
        %2444 = vmatprep.mubr.f32.mxu0 %v2341
        %2445 = vmatmul.mubr.f32.gmra.mrb[0].mxu0 %v2340
        %v2446 = vpop.f32.mrb[0].mxu0
        %v2447 = vadd.f32 %v2354, %v2446
        %v2448 = vpop.f32.mrb[0].mxu0
        %v2449 = vadd.f32 %v2354, %v2448
        %2450 = vmatprep.mubr.f32.mxu0 %v2344
        %2451 = vmatmul.mubr.f32.gmra.mrb[0].mxu0 %v2343
        %v2452 = vpop.f32.mrb[0].mxu0
        %v2453 = vadd.f32 %v2358, %v2452
        %v2454 = vpop.f32.mrb[0].mxu0
        %v2455 = vadd.f32 %v2358, %v2454
        %2456 = vmatprep.mubr.f32.mxu0 %v2347
        %2457 = vmatmul.mubr.f32.gmra.mrb[0].mxu0 %v2346
        %v2458 = vpop.f32.mrb[0].mxu0
        %v2459 = vadd.f32 %v2362, %v2458
        %v2460 = vpop.f32.mrb[0].mxu0
        %v2461 = vadd.f32 %v2362, %v2460
        %2462 = vmatprep.mubr.f32.mxu0 %v2350
        %2463 = vmatmul.mubr.f32.gmra.mrb[0].mxu0 %v2349
        %v2464 = vpop.f32.mrb[0].mxu0
        %v2465 = vadd.f32 %v2366, %v2464
        %v2466 = vpop.f32.mrb[0].mxu0
        %v2467 = vadd.f32 %v2366, %v2466
        %2468 = vdwg.mxu0
        %2469 = vmatprep.subr.mxu0 %v2333
        %2470 = vmatpush1.msra.mxu0 %v2332
        %2471 = vmatprep.subr.mxu0 %v2335
        %2472 = vmatpush1.msra.mxu0 %v2334
        %2473 = vmatprep.subr.mxu0 %v2337
        %2474 = vmatpush1.msra.mxu0 %v2336
        %2475 = vmatprep.subr.mxu0 %v2339
        %2476 = vmatpush1.msra.mxu0 %v2338
        %2477 = vmatprep.subr.mxu0 0.0
        %2478 = vmatpush1.msra.mxu0 0.0
        %2479 = vmatprep.subr.mxu0 0.0
        %2480 = vmatpush1.msra.mxu0 0.0
        %2481 = vmatprep.subr.mxu0 0.0
        %2482 = vmatpush1.msra.mxu0 0.0
        %2483 = vmatprep.subr.mxu0 0.0
        %2484 = vmatpush1.msra.mxu0 0.0
        %2485 = vmatprep.subr.mxu0 0.0
        %2486 = vmatpush1.msra.mxu0 0.0
        %2487 = vmatprep.subr.mxu0 0.0
        %2488 = vmatpush1.msra.mxu0 0.0
        %2489 = vmatprep.subr.mxu0 0.0
        %2490 = vmatpush1.msra.mxu0 0.0
        %2491 = vmatprep.subr.mxu0 0.0
        %2492 = vmatpush1.msra.mxu0 0.0
        %2493 = vmatprep.subr.mxu0 0.0
        %2494 = vmatpush1.msra.mxu0 0.0
        %2495 = vmatprep.subr.mxu0 0.0
        %2496 = vmatpush1.msra.mxu0 0.0
        %2497 = vmatprep.subr.mxu0 0.0
        %2498 = vmatpush1.msra.mxu0 0.0
        %2499 = vmatprep.subr.mxu0 0.0
        %2500 = vmatpush1.msra.mxu0 0.0
        %2501 = vmatprep.subr.mxu0 0.0
        %2502 = vmatpush1.msra.mxu0 0.0
        %2503 = vmatprep.subr.mxu0 0.0
        %2504 = vmatpush1.msra.mxu0 0.0
        %2505 = vmatprep.subr.mxu0 0.0
        %2506 = vmatpush1.msra.mxu0 0.0
        %2507 = vmatprep.subr.mxu0 0.0
        %2508 = vmatpush1.msra.mxu0 0.0
        %2509 = vmatprep.subr.mxu0 0.0
        %2510 = vmatpush1.msra.mxu0 0.0
        %2511 = vmatprep.subr.mxu0 0.0
        %2512 = vmatpush1.msra.mxu0 0.0
        %2513 = vmatprep.subr.mxu0 0.0
        %2514 = vmatpush1.msra.mxu0 0.0
        %2515 = vmatprep.subr.mxu0 0.0
        %2516 = vmatpush1.msra.mxu0 0.0
        %2517 = vmatprep.subr.mxu0 0.0
        %2518 = vmatpush1.msra.mxu0 0.0
        %2519 = vmatprep.subr.mxu0 0.0
        %2520 = vmatpush1.msra.mxu0 0.0
        %2521 = vmatprep.subr.mxu0 0.0
        %2522 = vmatpush1.msra.mxu0 0.0
        %2523 = vmatprep.subr.mxu0 0.0
        %2524 = vmatpush1.msra.mxu0 0.0
        %2525 = vmatprep.subr.mxu0 0.0
        %2526 = vmatpush1.msra.mxu0 0.0
        %2527 = vmatprep.subr.mxu0 0.0
        %2528 = vmatpush1.msra.mxu0 0.0
        %2529 = vmatprep.subr.mxu0 0.0
        %2530 = vmatpush1.msra.mxu0 0.0
        %2531 = vmatprep.subr.mxu0 0.0
        %2532 = vmatpush1.msra.mxu0 0.0
        %2533 = vmatprep.mubr.f32.mxu0 0.0
        %2534 = vmatmul.mubr.f32.gmra.mrb[0].mxu0 %v2369
        %v2535 = vpop.f32.mrb[0].mxu0
        %v2536 = vadd.f32 %v2447, %v2535
        %v2537 = vpop.f32.mrb[0].mxu0
        %v2538 = vadd.f32 %v2449, %v2537
        %2539 = vmatprep.mubr.f32.mxu0 0.0
        %2540 = vmatmul.mubr.f32.gmra.mrb[0].mxu0 %v2372
        %v2541 = vpop.f32.mrb[0].mxu0
        %v2542 = vadd.f32 %v2453, %v2541
        %v2543 = vpop.f32.mrb[0].mxu0
        %v2544 = vadd.f32 %v2455, %v2543
        %2545 = vmatprep.mubr.f32.mxu0 0.0
        %2546 = vmatmul.mubr.f32.gmra.mrb[0].mxu0 %v2375
        %v2547 = vpop.f32.mrb[0].mxu0
        %v2548 = vadd.f32 %v2459, %v2547
        %v2549 = vpop.f32.mrb[0].mxu0
        %v2550 = vadd.f32 %v2461, %v2549
        %2551 = vmatprep.mubr.f32.mxu0 0.0
        %2552 = vmatmul.mubr.f32.gmra.mrb[0].mxu0 %v2378
        %v2553 = vpop.f32.mrb[0].mxu0
        %v2554 = vadd.f32 %v2465, %v2553
        %v2555 = vpop.f32.mrb[0].mxu0
        %v2556 = vadd.f32 %v2467, %v2555
        %2557 = vdwg.mxu0
        %2559 = vset.pattern.permute.xlu0 0
        %2560 = vperm.xlu0 %2559, %v1405
        %v2561 = vpop.permute.xlu0 %2560
        %2564 = vset.pattern.permute.xlu0 0
        %2565 = vperm.xlu0 %2564, %v1406
        %v2566 = vpop.permute.xlu0 %2565
        %2569 = vset.pattern.permute.xlu0 0
        %2570 = vperm.xlu0 %2569, %v1407
        %v2571 = vpop.permute.xlu0 %2570
        %2574 = vset.pattern.permute.xlu0 0
        %2575 = vperm.xlu0 %2574, %v1408
        %v2576 = vpop.permute.xlu0 %2575
        %v2578 = vadd.f32 %v2536, %v2561
        %v2579 = vadd.f32 %v2538, %v2561
        %v2580 = vadd.f32 %v2542, %v2566
        %v2581 = vadd.f32 %v2544, %v2566
        %v2582 = vadd.f32 %v2548, %v2571
        %v2583 = vadd.f32 %v2550, %v2571
        %v2584 = vadd.f32 %v2554, %v2576
        %v2585 = vadd.f32 %v2556, %v2576
        %2586 = vmatprep.subr.mxu0 %v2579
        %2587 = vmatpush1.msra.mxu0 %v2578
        %2588 = vmatprep.subr.mxu0 %v2581
        %2589 = vmatpush1.msra.mxu0 %v2580
        %2590 = vmatprep.subr.mxu0 %v2583
        %2591 = vmatpush1.msra.mxu0 %v2582
        %2592 = vmatprep.subr.mxu0 %v2585
        %2593 = vmatpush1.msra.mxu0 %v2584
        %2594 = vmatprep.subr.mxu0 0.0
        %2595 = vmatpush1.msra.mxu0 0.0
        %2596 = vmatprep.subr.mxu0 0.0
        %2597 = vmatpush1.msra.mxu0 0.0
        %2598 = vmatprep.subr.mxu0 0.0
        %2599 = vmatpush1.msra.mxu0 0.0
        %2600 = vmatprep.subr.mxu0 0.0
        %2601 = vmatpush1.msra.mxu0 0.0
        %2602 = vmatprep.subr.mxu0 0.0
        %2603 = vmatpush1.msra.mxu0 0.0
        %2604 = vmatprep.subr.mxu0 0.0
        %2605 = vmatpush1.msra.mxu0 0.0
        %2606 = vmatprep.subr.mxu0 0.0
        %2607 = vmatpush1.msra.mxu0 0.0
        %2608 = vmatprep.subr.mxu0 0.0
        %2609 = vmatpush1.msra.mxu0 0.0
        %2610 = vmatprep.subr.mxu0 0.0
        %2611 = vmatpush1.msra.mxu0 0.0
        %2612 = vmatprep.subr.mxu0 0.0
        %2613 = vmatpush1.msra.mxu0 0.0
        %2614 = vmatprep.subr.mxu0 0.0
        %2615 = vmatpush1.msra.mxu0 0.0
        %2616 = vmatprep.subr.mxu0 0.0
        %2617 = vmatpush1.msra.mxu0 0.0
        %2618 = vmatprep.subr.mxu0 0.0
        %2619 = vmatpush1.msra.mxu0 0.0
        %2620 = vmatprep.subr.mxu0 0.0
        %2621 = vmatpush1.msra.mxu0 0.0
        %2622 = vmatprep.subr.mxu0 0.0
        %2623 = vmatpush1.msra.mxu0 0.0
        %2624 = vmatprep.subr.mxu0 0.0
        %2625 = vmatpush1.msra.mxu0 0.0
        %2626 = vmatprep.subr.mxu0 0.0
        %2627 = vmatpush1.msra.mxu0 0.0
        %2628 = vmatprep.subr.mxu0 0.0
        %2629 = vmatpush1.msra.mxu0 0.0
        %2630 = vmatprep.subr.mxu0 0.0
        %2631 = vmatpush1.msra.mxu0 0.0
        %2632 = vmatprep.subr.mxu0 0.0
        %2633 = vmatpush1.msra.mxu0 0.0
        %2634 = vmatprep.subr.mxu0 0.0
        %2635 = vmatpush1.msra.mxu0 0.0
        %2636 = vmatprep.subr.mxu0 0.0
        %2637 = vmatpush1.msra.mxu0 0.0
        %2638 = vmatprep.subr.mxu0 0.0
        %2639 = vmatpush1.msra.mxu0 0.0
        %2640 = vmatprep.subr.mxu0 0.0
        %2641 = vmatpush1.msra.mxu0 0.0
        %2642 = vmatprep.subr.mxu0 0.0
        %2643 = vmatpush1.msra.mxu0 0.0
        %2644 = vmatprep.subr.mxu0 0.0
        %2645 = vmatpush1.msra.mxu0 0.0
        %2646 = vmatprep.subr.mxu0 0.0
        %2647 = vmatpush1.msra.mxu0 0.0
        %2648 = vmatprep.subr.mxu0 0.0
        %2649 = vmatpush1.msra.mxu0 0.0
        %2650 = vmatprep.mubr.f32.mxu0 0.0
        %2651 = vmatmul.mubr.f32.gmra.mrb[0].mxu0 %v1715
        %v2652 = vpop.f32.mrb[0].mxu0
        %v2653 = vadd.f32 0.0, %v2652
        %v2654 = vpop.f32.mrb[0].mxu0
        %v2655 = vadd.f32 0.0, %v2654
        %2656 = vmatprep.mubr.f32.mxu0 0.0
        %2657 = vmatmul.mubr.f32.gmra.mrb[0].mxu0 %v1718
        %v2658 = vpop.f32.mrb[0].mxu0
        %v2659 = vadd.f32 0.0, %v2658
        %v2660 = vpop.f32.mrb[0].mxu0
        %v2661 = vadd.f32 0.0, %v2660
        %2662 = vmatprep.mubr.f32.mxu0 0.0
        %2663 = vmatmul.mubr.f32.gmra.mrb[0].mxu0 %v1721
        %v2664 = vpop.f32.mrb[0].mxu0
        %v2665 = vadd.f32 0.0, %v2664
        %v2666 = vpop.f32.mrb[0].mxu0
        %v2667 = vadd.f32 0.0, %v2666
        %2668 = vmatprep.mubr.f32.mxu0 0.0
        %2669 = vmatmul.mubr.f32.gmra.mrb[0].mxu0 %v1724
        %v2670 = vpop.f32.mrb[0].mxu0
        %v2671 = vadd.f32 0.0, %v2670
        %v2672 = vpop.f32.mrb[0].mxu0
        %v2673 = vadd.f32 0.0, %v2672
        %2674 = vdwg.mxu0
        %v2675 = vmul.f32 %v2578, %v2578
        %v2676 = vmul.f32 %v2579, %v2579
        %v2677 = vmul.f32 %v2580, %v2580
        %v2678 = vmul.f32 %v2581, %v2581
        %v2679 = vmul.f32 %v2582, %v2582
        %v2680 = vmul.f32 %v2583, %v2583
        %v2681 = vmul.f32 %v2584, %v2584
        %v2682 = vmul.f32 %v2585, %v2585
        %2683 = vmatprep.subr.mxu0 %v2676
        %2684 = vmatpush1.msra.mxu0 %v2675
        %2685 = vmatprep.subr.mxu0 %v2678
        %2686 = vmatpush1.msra.mxu0 %v2677
        %2687 = vmatprep.subr.mxu0 %v2680
        %2688 = vmatpush1.msra.mxu0 %v2679
        %2689 = vmatprep.subr.mxu0 %v2682
        %2690 = vmatpush1.msra.mxu0 %v2681
        %2691 = vmatprep.subr.mxu0 0.0
        %2692 = vmatpush1.msra.mxu0 0.0
        %2693 = vmatprep.subr.mxu0 0.0
        %2694 = vmatpush1.msra.mxu0 0.0
        %2695 = vmatprep.subr.mxu0 0.0
        %2696 = vmatpush1.msra.mxu0 0.0
        %2697 = vmatprep.subr.mxu0 0.0
        %2698 = vmatpush1.msra.mxu0 0.0
        %2699 = vmatprep.subr.mxu0 0.0
        %2700 = vmatpush1.msra.mxu0 0.0
        %2701 = vmatprep.subr.mxu0 0.0
        %2702 = vmatpush1.msra.mxu0 0.0
        %2703 = vmatprep.subr.mxu0 0.0
        %2704 = vmatpush1.msra.mxu0 0.0
        %2705 = vmatprep.subr.mxu0 0.0
        %2706 = vmatpush1.msra.mxu0 0.0
        %2707 = vmatprep.subr.mxu0 0.0
        %2708 = vmatpush1.msra.mxu0 0.0
        %2709 = vmatprep.subr.mxu0 0.0
        %2710 = vmatpush1.msra.mxu0 0.0
        %2711 = vmatprep.subr.mxu0 0.0
        %2712 = vmatpush1.msra.mxu0 0.0
        %2713 = vmatprep.subr.mxu0 0.0
        %2714 = vmatpush1.msra.mxu0 0.0
        %2715 = vmatprep.subr.mxu0 0.0
        %2716 = vmatpush1.msra.mxu0 0.0
        %2717 = vmatprep.subr.mxu0 0.0
        %2718 = vmatpush1.msra.mxu0 0.0
        %2719 = vmatprep.subr.mxu0 0.0
        %2720 = vmatpush1.msra.mxu0 0.0
        %2721 = vmatprep.subr.mxu0 0.0
        %2722 = vmatpush1.msra.mxu0 0.0
        %2723 = vmatprep.subr.mxu0 0.0
        %2724 = vmatpush1.msra.mxu0 0.0
        %2725 = vmatprep.subr.mxu0 0.0
        %2726 = vmatpush1.msra.mxu0 0.0
        %2727 = vmatprep.subr.mxu0 0.0
        %2728 = vmatpush1.msra.mxu0 0.0
        %2729 = vmatprep.subr.mxu0 0.0
        %2730 = vmatpush1.msra.mxu0 0.0
        %2731 = vmatprep.subr.mxu0 0.0
        %2732 = vmatpush1.msra.mxu0 0.0
        %2733 = vmatprep.subr.mxu0 0.0
        %2734 = vmatpush1.msra.mxu0 0.0
        %2735 = vmatprep.subr.mxu0 0.0
        %2736 = vmatpush1.msra.mxu0 0.0
        %2737 = vmatprep.subr.mxu0 0.0
        %2738 = vmatpush1.msra.mxu0 0.0
        %2739 = vmatprep.subr.mxu0 0.0
        %2740 = vmatpush1.msra.mxu0 0.0
        %2741 = vmatprep.subr.mxu0 0.0
        %2742 = vmatpush1.msra.mxu0 0.0
        %2743 = vmatprep.subr.mxu0 0.0
        %2744 = vmatpush1.msra.mxu0 0.0
        %2745 = vmatprep.subr.mxu0 0.0
        %2746 = vmatpush1.msra.mxu0 0.0
        %2747 = vmatprep.mubr.f32.mxu0 0.0
        %2748 = vmatmul.mubr.f32.gmra.mrb[0].mxu0 %v1715
        %v2749 = vpop.f32.mrb[0].mxu0
        %v2750 = vadd.f32 0.0, %v2749
        %v2751 = vpop.f32.mrb[0].mxu0
        %v2752 = vadd.f32 0.0, %v2751
        %2753 = vmatprep.mubr.f32.mxu0 0.0
        %2754 = vmatmul.mubr.f32.gmra.mrb[0].mxu0 %v1718
        %v2755 = vpop.f32.mrb[0].mxu0
        %v2756 = vadd.f32 0.0, %v2755
        %v2757 = vpop.f32.mrb[0].mxu0
        %v2758 = vadd.f32 0.0, %v2757
        %2759 = vmatprep.mubr.f32.mxu0 0.0
        %2760 = vmatmul.mubr.f32.gmra.mrb[0].mxu0 %v1721
        %v2761 = vpop.f32.mrb[0].mxu0
        %v2762 = vadd.f32 0.0, %v2761
        %v2763 = vpop.f32.mrb[0].mxu0
        %v2764 = vadd.f32 0.0, %v2763
        %2765 = vmatprep.mubr.f32.mxu0 0.0
        %2766 = vmatmul.mubr.f32.gmra.mrb[0].mxu0 %v1724
        %v2767 = vpop.f32.mrb[0].mxu0
        %v2768 = vadd.f32 0.0, %v2767
        %v2769 = vpop.f32.mrb[0].mxu0
        %v2770 = vadd.f32 0.0, %v2769
        %2771 = vdwg.mxu0
        %v2772 = vadd.f32 %v2653, %v2655
        %2773 = vadd.xlane.f32.xlu0 %v2772
        %v2774 = vpop.xlane.xlu0 %2773
        %v2775 = vadd.f32 %v2659, %v2661
        %2776 = vadd.xlane.f32.xlu0 %v2775
        %v2777 = vpop.xlane.xlu0 %2776
        %v2778 = vadd.f32 %v2665, %v2667
        %2779 = vadd.xlane.f32.xlu0 %v2778
        %v2780 = vpop.xlane.xlu0 %2779
        %v2781 = vadd.f32 %v2671, %v2673
        %2782 = vadd.xlane.f32.xlu0 %v2781
        %v2783 = vpop.xlane.xlu0 %2782
        %v2784 = vmul.f32 %v2774, 0.0009765625
        %v2785 = vmul.f32 %v2777, 0.0009765625
        %v2786 = vmul.f32 %v2780, 0.0009765625
        %v2787 = vmul.f32 %v2783, 0.0009765625
        %v2788 = vadd.f32 %v2750, %v2752
        %2789 = vadd.xlane.f32.xlu0 %v2788
        %v2790 = vpop.xlane.xlu0 %2789
        %v2791 = vadd.f32 %v2756, %v2758
        %2792 = vadd.xlane.f32.xlu0 %v2791
        %v2793 = vpop.xlane.xlu0 %2792
        %v2794 = vadd.f32 %v2762, %v2764
        %2795 = vadd.xlane.f32.xlu0 %v2794
        %v2796 = vpop.xlane.xlu0 %2795
        %v2797 = vadd.f32 %v2768, %v2770
        %2798 = vadd.xlane.f32.xlu0 %v2797
        %v2799 = vpop.xlane.xlu0 %2798
        %v2800 = vmul.f32 %v2790, 0.0009765625
        %v2801 = vmul.f32 %v2793, 0.0009765625
        %v2802 = vmul.f32 %v2796, 0.0009765625
        %v2803 = vmul.f32 %v2799, 0.0009765625
        %v2804 = vmul.f32 %v2784, %v2784
        %v2805 = vmul.f32 %v2785, %v2785
        %v2806 = vmul.f32 %v2786, %v2786
        %v2807 = vmul.f32 %v2787, %v2787
        %v2808 = vsub.f32 %v2800, %v2804
        %v2809 = vsub.f32 %v2801, %v2805
        %v2810 = vsub.f32 %v2802, %v2806
        %v2811 = vsub.f32 %v2803, %v2807
        %v2812 = vmax.f32 %v2808, 0.0
        %v2813 = vmax.f32 %v2809, 0.0
        %v2814 = vmax.f32 %v2810, 0.0
        %v2815 = vmax.f32 %v2811, 0.0
        %v2816 = vsub.f32 %v2578, %v2784
        %v2817 = vsub.f32 %v2579, %v2784
        %v2818 = vsub.f32 %v2580, %v2785
        %v2819 = vsub.f32 %v2581, %v2785
        %v2820 = vsub.f32 %v2582, %v2786
        %v2821 = vsub.f32 %v2583, %v2786
        %v2822 = vsub.f32 %v2584, %v2787
        %v2823 = vsub.f32 %v2585, %v2787
        %v2824 = vadd.f32 %v2812, 1e-05
        %v2825 = vadd.f32 %v2813, 1e-05
        %v2826 = vadd.f32 %v2814, 1e-05
        %v2827 = vadd.f32 %v2815, 1e-05
        %v2828 = vrsqrt.pop %v2824
        %v2829 = vrsqrt.pop %v2825
        %v2830 = vrsqrt.pop %v2826
        %v2831 = vrsqrt.pop %v2827
        %v2832 = vmul.f32 %v2816, %v2828
        %v2833 = vmul.f32 %v2817, %v2828
        %v2834 = vmul.f32 %v2818, %v2829
        %v2835 = vmul.f32 %v2819, %v2829
        %v2836 = vmul.f32 %v2820, %v2830
        %v2837 = vmul.f32 %v2821, %v2830
        %v2838 = vmul.f32 %v2822, %v2831
        %v2839 = vmul.f32 %v2823, %v2831
        %2840 = vset.pattern.permute.xlu0 4
        %2841 = vperm.xlu0 %2840, %v516
        %v2842 = vpop.permute.xlu0 %2841
        %2844 = vset.pattern.permute.xlu0 4
        %2845 = vperm.xlu0 %2844, %v517
        %v2846 = vpop.permute.xlu0 %2845
        %2848 = vset.pattern.permute.xlu0 4
        %2849 = vperm.xlu0 %2848, %v518
        %v2850 = vpop.permute.xlu0 %2849
        %2852 = vset.pattern.permute.xlu0 4
        %2853 = vperm.xlu0 %2852, %v519
        %v2854 = vpop.permute.xlu0 %2853
        %v2856 = vmul.f32 %v2832, %v2842
        %v2857 = vmul.f32 %v2833, %v2842
        %v2858 = vmul.f32 %v2834, %v2846
        %v2859 = vmul.f32 %v2835, %v2846
        %v2860 = vmul.f32 %v2836, %v2850
        %v2861 = vmul.f32 %v2837, %v2850
        %v2862 = vmul.f32 %v2838, %v2854
        %v2863 = vmul.f32 %v2839, %v2854
        %2864 = vset.pattern.permute.xlu0 5
        %2865 = vperm.xlu0 %2864, %v516
        %v2866 = vpop.permute.xlu0 %2865
        %2868 = vset.pattern.permute.xlu0 5
        %2869 = vperm.xlu0 %2868, %v517
        %v2870 = vpop.permute.xlu0 %2869
        %2872 = vset.pattern.permute.xlu0 5
        %2873 = vperm.xlu0 %2872, %v518
        %v2874 = vpop.permute.xlu0 %2873
        %2876 = vset.pattern.permute.xlu0 5
        %2877 = vperm.xlu0 %2876, %v519
        %v2878 = vpop.permute.xlu0 %2877
        %v2880 = vadd.f32 %v2856, %v2866
        %v2881 = vadd.f32 %v2857, %v2866
        %v2882 = vadd.f32 %v2858, %v2870
        %v2883 = vadd.f32 %v2859, %v2870
        %v2884 = vadd.f32 %v2860, %v2874
        %v2885 = vadd.f32 %v2861, %v2874
        %v2886 = vadd.f32 %v2862, %v2878
        %v2887 = vadd.f32 %v2863, %v2878
        %v2888 = vxor.u32 %v2880, 2147483648
        %v2889 = vxor.u32 %v2881, 2147483648
        %v2890 = vxor.u32 %v2882, 2147483648
        %v2891 = vxor.u32 %v2883, 2147483648
        %v2892 = vxor.u32 %v2884, 2147483648
        %v2893 = vxor.u32 %v2885, 2147483648
        %v2894 = vxor.u32 %v2886, 2147483648
        %v2895 = vxor.u32 %v2887, 2147483648
        %v2896 = vmul.f32 %v2888, 1.442695
        %v2897 = vpow.pop %v2896
        %v2898 = vmul.f32 %v2889, 1.442695
        %v2899 = vpow.pop %v2898
        %v2900 = vmul.f32 %v2890, 1.442695
        %v2901 = vpow.pop %v2900
        %v2902 = vmul.f32 %v2891, 1.442695
        %v2903 = vpow.pop %v2902
        %v2904 = vmul.f32 %v2892, 1.442695
        %v2905 = vpow.pop %v2904
        %v2906 = vmul.f32 %v2893, 1.442695
        %v2907 = vpow.pop %v2906
        %v2908 = vmul.f32 %v2894, 1.442695
        %v2909 = vpow.pop %v2908
        %v2910 = vmul.f32 %v2895, 1.442695
        %v2911 = vpow.pop %v2910
        %v2912 = vadd.f32 %v2897, 1.0
        %v2913 = vadd.f32 %v2899, 1.0
        %v2914 = vadd.f32 %v2901, 1.0
        %v2915 = vadd.f32 %v2903, 1.0
        %v2916 = vadd.f32 %v2905, 1.0
        %v2917 = vadd.f32 %v2907, 1.0
        %v2918 = vadd.f32 %v2909, 1.0
        %v2919 = vadd.f32 %v2911, 1.0
        %v2920 = vrcp.pop %v2912
        %v2921 = vmul.f32 1.0, %v2920
        %v2922 = vrcp.pop %v2913
        %v2923 = vmul.f32 1.0, %v2922
        %v2924 = vrcp.pop %v2914
        %v2925 = vmul.f32 1.0, %v2924
        %v2926 = vrcp.pop %v2915
        %v2927 = vmul.f32 1.0, %v2926
        %v2928 = vrcp.pop %v2916
        %v2929 = vmul.f32 1.0, %v2928
        %v2930 = vrcp.pop %v2917
        %v2931 = vmul.f32 1.0, %v2930
        %v2932 = vrcp.pop %v2918
        %v2933 = vmul.f32 1.0, %v2932
        %v2934 = vrcp.pop %v2919
        %v2935 = vmul.f32 1.0, %v2934
        %v2936 = vmul.f32 %v2880, %v2921
        %v2937 = vmul.f32 %v2881, %v2923
        %v2938 = vmul.f32 %v2882, %v2925
        %v2939 = vmul.f32 %v2883, %v2927
        %v2940 = vmul.f32 %v2884, %v2929
        %v2941 = vmul.f32 %v2885, %v2931
        %v2942 = vmul.f32 %v2886, %v2933
        %v2943 = vmul.f32 %v2887, %v2935
        %2944 = vrot.lane.b32.xlu0 %v2936, 17
        %v2945 = vpop.permute.xlu0 %2944
        %2946 = vrot.lane.b32.xlu0 %v2938, 17
        %v2947 = vpop.permute.xlu0 %2946
        %2948 = vrot.lane.b32.xlu0 %v2940, 17
        %v2949 = vpop.permute.xlu0 %2948
        %2950 = vrot.lane.b32.xlu0 %v2942, 17
        %v2951 = vpop.permute.xlu0 %2950
        %2952 = vrot.lane.b32.xlu0 %v2937, 17
        %v2953 = vpop.permute.xlu0 %2952
        %2954 = vrot.lane.b32.xlu0 %v2939, 17
        %v2955 = vpop.permute.xlu0 %2954
        %2956 = vrot.lane.b32.xlu0 %v2941, 17
        %v2957 = vpop.permute.xlu0 %2956
        %2958 = vrot.lane.b32.xlu0 %v2943, 17
        %v2959 = vpop.permute.xlu0 %2958
        %v2960 = vsel %vm1417, %v2945, %v2953
        %v2961 = vsel %vm1417, %v2947, %v2955
        %v2962 = vsel %vm1417, %v2949, %v2957
        %v2963 = vsel %vm1417, %v2951, %v2959
        %v2964 = vsel %vm1417, %v2953, %v2945
        %v2965 = vsel %vm1417, %v2955, %v2947
        %v2966 = vsel %vm1417, %v2957, %v2949
        %v2967 = vsel %vm1417, %v2959, %v2951
        %v2968 = vmul.f32 %v2964, %v1425
        %v2969 = vmul.f32 %v2960, %v1429
        %v2970 = vmul.f32 %v2965, %v1425
        %v2971 = vmul.f32 %v2961, %v1429
        %v2972 = vmul.f32 %v2966, %v1425
        %v2973 = vmul.f32 %v2962, %v1429
        %v2974 = vmul.f32 %v2967, %v1425
        %v2975 = vmul.f32 %v2963, %v1429
        %2976 = vrot.lane.b32.xlu0 %v2936, 16
        %v2977 = vpop.permute.xlu0 %2976
        %2978 = vrot.lane.b32.xlu0 %v2938, 16
        %v2979 = vpop.permute.xlu0 %2978
        %2980 = vrot.lane.b32.xlu0 %v2940, 16
        %v2981 = vpop.permute.xlu0 %2980
        %2982 = vrot.lane.b32.xlu0 %v2942, 16
        %v2983 = vpop.permute.xlu0 %2982
        %2984 = vrot.lane.b32.xlu0 %v2937, 16
        %v2985 = vpop.permute.xlu0 %2984
        %2986 = vrot.lane.b32.xlu0 %v2939, 16
        %v2987 = vpop.permute.xlu0 %2986
        %2988 = vrot.lane.b32.xlu0 %v2941, 16
        %v2989 = vpop.permute.xlu0 %2988
        %2990 = vrot.lane.b32.xlu0 %v2943, 16
        %v2991 = vpop.permute.xlu0 %2990
        %v2992 = vsel %vm1438, %v2977, %v2985
        %v2993 = vsel %vm1438, %v2979, %v2987
        %v2994 = vsel %vm1438, %v2981, %v2989
        %v2995 = vsel %vm1438, %v2983, %v2991
        %v2996 = vsel %vm1438, %v2985, %v2977
        %v2997 = vsel %vm1438, %v2987, %v2979
        %v2998 = vsel %vm1438, %v2989, %v2981
        %v2999 = vsel %vm1438, %v2991, %v2983
        %v3000 = vmul.f32 %v2996, %v1447
        %v3001 = vmul.f32 %v2992, %v1451
        %v3002 = vmul.f32 %v2997, %v1447
        %v3003 = vmul.f32 %v2993, %v1451
        %v3004 = vmul.f32 %v2998, %v1447
        %v3005 = vmul.f32 %v2994, %v1451
        %v3006 = vmul.f32 %v2999, %v1447
        %v3007 = vmul.f32 %v2995, %v1451
        %3008 = vrot.lane.b32.xlu0 %v2936, 15
        %v3009 = vpop.permute.xlu0 %3008
        %3010 = vrot.lane.b32.xlu0 %v2938, 15
        %v3011 = vpop.permute.xlu0 %3010
        %3012 = vrot.lane.b32.xlu0 %v2940, 15
        %v3013 = vpop.permute.xlu0 %3012
        %3014 = vrot.lane.b32.xlu0 %v2942, 15
        %v3015 = vpop.permute.xlu0 %3014
        %3016 = vrot.lane.b32.xlu0 %v2937, 15
        %v3017 = vpop.permute.xlu0 %3016
        %3018 = vrot.lane.b32.xlu0 %v2939, 15
        %v3019 = vpop.permute.xlu0 %3018
        %3020 = vrot.lane.b32.xlu0 %v2941, 15
        %v3021 = vpop.permute.xlu0 %3020
        %3022 = vrot.lane.b32.xlu0 %v2943, 15
        %v3023 = vpop.permute.xlu0 %3022
        %v3024 = vsel %vm1460, %v3009, %v3017
        %v3025 = vsel %vm1460, %v3011, %v3019
        %v3026 = vsel %vm1460, %v3013, %v3021
        %v3027 = vsel %vm1460, %v3015, %v3023
        %v3028 = vsel %vm1460, %v3017, %v3009
        %v3029 = vsel %vm1460, %v3019, %v3011
        %v3030 = vsel %vm1460, %v3021, %v3013
        %v3031 = vsel %vm1460, %v3023, %v3015
        %v3032 = vmul.f32 %v3028, %v1469
        %v3033 = vmul.f32 %v3024, %v1473
        %v3034 = vmul.f32 %v3029, %v1469
        %v3035 = vmul.f32 %v3025, %v1473
        %v3036 = vmul.f32 %v3030, %v1469
        %v3037 = vmul.f32 %v3026, %v1473
        %v3038 = vmul.f32 %v3031, %v1469
        %v3039 = vmul.f32 %v3027, %v1473
        %3040 = vrot.lane.b32.xlu0 %v2936, 1
        %v3041 = vpop.permute.xlu0 %3040
        %3042 = vrot.lane.b32.xlu0 %v2938, 1
        %v3043 = vpop.permute.xlu0 %3042
        %3044 = vrot.lane.b32.xlu0 %v2940, 1
        %v3045 = vpop.permute.xlu0 %3044
        %3046 = vrot.lane.b32.xlu0 %v2942, 1
        %v3047 = vpop.permute.xlu0 %3046
        %3048 = vrot.lane.b32.xlu0 %v2937, 1
        %v3049 = vpop.permute.xlu0 %3048
        %3050 = vrot.lane.b32.xlu0 %v2939, 1
        %v3051 = vpop.permute.xlu0 %3050
        %3052 = vrot.lane.b32.xlu0 %v2941, 1
        %v3053 = vpop.permute.xlu0 %3052
        %3054 = vrot.lane.b32.xlu0 %v2943, 1
        %v3055 = vpop.permute.xlu0 %3054
        %v3056 = vsel %vm1482, %v3041, %v3049
        %v3057 = vsel %vm1482, %v3043, %v3051
        %v3058 = vsel %vm1482, %v3045, %v3053
        %v3059 = vsel %vm1482, %v3047, %v3055
        %v3060 = vsel %vm1482, %v3049, %v3041
        %v3061 = vsel %vm1482, %v3051, %v3043
        %v3062 = vsel %vm1482, %v3053, %v3045
        %v3063 = vsel %vm1482, %v3055, %v3047
        %v3064 = vmul.f32 %v3060, %v1491
        %v3065 = vmul.f32 %v3056, %v1495
        %v3066 = vmul.f32 %v3061, %v1491
        %v3067 = vmul.f32 %v3057, %v1495
        %v3068 = vmul.f32 %v3062, %v1491
        %v3069 = vmul.f32 %v3058, %v1495
        %v3070 = vmul.f32 %v3063, %v1491
        %v3071 = vmul.f32 %v3059, %v1495
        %3072 = vrot.lane.b32.xlu0 %v2936, 127
        %v3073 = vpop.permute.xlu0 %3072
        %3074 = vrot.lane.b32.xlu0 %v2938, 127
        %v3075 = vpop.permute.xlu0 %3074
        %3076 = vrot.lane.b32.xlu0 %v2940, 127
        %v3077 = vpop.permute.xlu0 %3076
        %3078 = vrot.lane.b32.xlu0 %v2942, 127
        %v3079 = vpop.permute.xlu0 %3078
        %3080 = vrot.lane.b32.xlu0 %v2937, 127
        %v3081 = vpop.permute.xlu0 %3080
        %3082 = vrot.lane.b32.xlu0 %v2939, 127
        %v3083 = vpop.permute.xlu0 %3082
        %3084 = vrot.lane.b32.xlu0 %v2941, 127
        %v3085 = vpop.permute.xlu0 %3084
        %3086 = vrot.lane.b32.xlu0 %v2943, 127
        %v3087 = vpop.permute.xlu0 %3086
        %v3088 = vsel %vm1504, %v3073, %v3081
        %v3089 = vsel %vm1504, %v3075, %v3083
        %v3090 = vsel %vm1504, %v3077, %v3085
        %v3091 = vsel %vm1504, %v3079, %v3087
        %v3092 = vsel %vm1504, %v3081, %v3073
        %v3093 = vsel %vm1504, %v3083, %v3075
        %v3094 = vsel %vm1504, %v3085, %v3077
        %v3095 = vsel %vm1504, %v3087, %v3079
        %v3096 = vmul.f32 %v3088, %v1513
        %v3097 = vmul.f32 %v3092, %v1517
        %v3098 = vmul.f32 %v3089, %v1513
        %v3099 = vmul.f32 %v3093, %v1517
        %v3100 = vmul.f32 %v3090, %v1513
        %v3101 = vmul.f32 %v3094, %v1517
        %v3102 = vmul.f32 %v3091, %v1513
        %v3103 = vmul.f32 %v3095, %v1517
        %3104 = vrot.lane.b32.xlu0 %v2936, 113
        %v3105 = vpop.permute.xlu0 %3104
        %3106 = vrot.lane.b32.xlu0 %v2938, 113
        %v3107 = vpop.permute.xlu0 %3106
        %3108 = vrot.lane.b32.xlu0 %v2940, 113
        %v3109 = vpop.permute.xlu0 %3108
        %3110 = vrot.lane.b32.xlu0 %v2942, 113
        %v3111 = vpop.permute.xlu0 %3110
        %3112 = vrot.lane.b32.xlu0 %v2937, 113
        %v3113 = vpop.permute.xlu0 %3112
        %3114 = vrot.lane.b32.xlu0 %v2939, 113
        %v3115 = vpop.permute.xlu0 %3114
        %3116 = vrot.lane.b32.xlu0 %v2941, 113
        %v3117 = vpop.permute.xlu0 %3116
        %3118 = vrot.lane.b32.xlu0 %v2943, 113
        %v3119 = vpop.permute.xlu0 %3118
        %v3120 = vsel %vm1526, %v3105, %v3113
        %v3121 = vsel %vm1526, %v3107, %v3115
        %v3122 = vsel %vm1526, %v3109, %v3117
        %v3123 = vsel %vm1526, %v3111, %v3119
        %v3124 = vsel %vm1526, %v3113, %v3105
        %v3125 = vsel %vm1526, %v3115, %v3107
        %v3126 = vsel %vm1526, %v3117, %v3109
        %v3127 = vsel %vm1526, %v3119, %v3111
        %v3128 = vmul.f32 %v3120, %v1535
        %v3129 = vmul.f32 %v3124, %v1539
        %v3130 = vmul.f32 %v3121, %v1535
        %v3131 = vmul.f32 %v3125, %v1539
        %v3132 = vmul.f32 %v3122, %v1535
        %v3133 = vmul.f32 %v3126, %v1539
        %v3134 = vmul.f32 %v3123, %v1535
        %v3135 = vmul.f32 %v3127, %v1539
        %3136 = vrot.lane.b32.xlu0 %v2936, 112
        %v3137 = vpop.permute.xlu0 %3136
        %3138 = vrot.lane.b32.xlu0 %v2938, 112
        %v3139 = vpop.permute.xlu0 %3138
        %3140 = vrot.lane.b32.xlu0 %v2940, 112
        %v3141 = vpop.permute.xlu0 %3140
        %3142 = vrot.lane.b32.xlu0 %v2942, 112
        %v3143 = vpop.permute.xlu0 %3142
        %3144 = vrot.lane.b32.xlu0 %v2937, 112
        %v3145 = vpop.permute.xlu0 %3144
        %3146 = vrot.lane.b32.xlu0 %v2939, 112
        %v3147 = vpop.permute.xlu0 %3146
        %3148 = vrot.lane.b32.xlu0 %v2941, 112
        %v3149 = vpop.permute.xlu0 %3148
        %3150 = vrot.lane.b32.xlu0 %v2943, 112
        %v3151 = vpop.permute.xlu0 %3150
        %v3152 = vsel %vm1548, %v3137, %v3145
        %v3153 = vsel %vm1548, %v3139, %v3147
        %v3154 = vsel %vm1548, %v3141, %v3149
        %v3155 = vsel %vm1548, %v3143, %v3151
        %v3156 = vsel %vm1548, %v3145, %v3137
        %v3157 = vsel %vm1548, %v3147, %v3139
        %v3158 = vsel %vm1548, %v3149, %v3141
        %v3159 = vsel %vm1548, %v3151, %v3143
        %v3160 = vmul.f32 %v3152, %v1557
        %v3161 = vmul.f32 %v3156, %v1561
        %v3162 = vmul.f32 %v3153, %v1557
        %v3163 = vmul.f32 %v3157, %v1561
        %v3164 = vmul.f32 %v3154, %v1557
        %v3165 = vmul.f32 %v3158, %v1561
        %v3166 = vmul.f32 %v3155, %v1557
        %v3167 = vmul.f32 %v3159, %v1561
        %3168 = vrot.lane.b32.xlu0 %v2936, 111
        %v3169 = vpop.permute.xlu0 %3168
        %3170 = vrot.lane.b32.xlu0 %v2938, 111
        %v3171 = vpop.permute.xlu0 %3170
        %3172 = vrot.lane.b32.xlu0 %v2940, 111
        %v3173 = vpop.permute.xlu0 %3172
        %3174 = vrot.lane.b32.xlu0 %v2942, 111
        %v3175 = vpop.permute.xlu0 %3174
        %3176 = vrot.lane.b32.xlu0 %v2937, 111
        %v3177 = vpop.permute.xlu0 %3176
        %3178 = vrot.lane.b32.xlu0 %v2939, 111
        %v3179 = vpop.permute.xlu0 %3178
        %3180 = vrot.lane.b32.xlu0 %v2941, 111
        %v3181 = vpop.permute.xlu0 %3180
        %3182 = vrot.lane.b32.xlu0 %v2943, 111
        %v3183 = vpop.permute.xlu0 %3182
        %v3184 = vsel %vm1570, %v3169, %v3177
        %v3185 = vsel %vm1570, %v3171, %v3179
        %v3186 = vsel %vm1570, %v3173, %v3181
        %v3187 = vsel %vm1570, %v3175, %v3183
        %v3188 = vsel %vm1570, %v3177, %v3169
        %v3189 = vsel %vm1570, %v3179, %v3171
        %v3190 = vsel %vm1570, %v3181, %v3173
        %v3191 = vsel %vm1570, %v3183, %v3175
        %v3192 = vmul.f32 %v3184, %v1579
        %v3193 = vmul.f32 %v3188, %v1583
        %v3194 = vmul.f32 %v3185, %v1579
        %v3195 = vmul.f32 %v3189, %v1583
        %v3196 = vmul.f32 %v3186, %v1579
        %v3197 = vmul.f32 %v3190, %v1583
        %v3198 = vmul.f32 %v3187, %v1579
        %v3199 = vmul.f32 %v3191, %v1583
        %v3200 = vld [vmem:[%s7] sm:$0xff]
        %v3201 = vld [vmem:[%s7 + $0x8] sm:$0xff]
        %v3202 = vld [vmem:[%s7 + $0x10] sm:$0xff]
        %v3203 = vld [vmem:[%s7 + $0x18] sm:$0xff]
        %v3204 = vld [vmem:[%s7 + $0x20] sm:$0xff]
        %v3205 = vld [vmem:[%s7 + $0x28] sm:$0xff]
        %v3206 = vld [vmem:[%s7 + $0x30] sm:$0xff]
        %v3207 = vld [vmem:[%s7 + $0x38] sm:$0xff]
        %v3208 = vld [vmem:[%s7 + $0x40] sm:$0xff]
        %v3209 = vld [vmem:[%s7 + $0x48] sm:$0xff]
        %v3210 = vld [vmem:[%s7 + $0x50] sm:$0xff]
        %v3211 = vld [vmem:[%s7 + $0x58] sm:$0xff]
        %3212 = vset.pattern.permute.xlu0 6
        %3213 = vperm.xlu0 %3212, %v516
        %v3214 = vpop.permute.xlu0 %3213
        %3216 = vset.pattern.permute.xlu0 6
        %3217 = vperm.xlu0 %3216, %v517
        %v3218 = vpop.permute.xlu0 %3217
        %3220 = vset.pattern.permute.xlu0 6
        %3221 = vperm.xlu0 %3220, %v518
        %v3222 = vpop.permute.xlu0 %3221
        %3224 = vset.pattern.permute.xlu0 6
        %3225 = vperm.xlu0 %3224, %v519
        %v3226 = vpop.permute.xlu0 %3225
        %v3229 = vsel %vm657, %v3202, 0
        %v3232 = vsel %vm657, %v3205, 0
        %v3235 = vsel %vm657, %v3208, 0
        %v3238 = vsel %vm657, %v3211, 0
        %3240 = vmatprep.subr.mxu0 %v2969
        %3241 = vmatpush1.msra.mxu0 %v2968
        %3242 = vmatprep.subr.mxu0 %v2971
        %3243 = vmatpush1.msra.mxu0 %v2970
        %3244 = vmatprep.subr.mxu0 %v2973
        %3245 = vmatpush1.msra.mxu0 %v2972
        %3246 = vmatprep.subr.mxu0 %v2975
        %3247 = vmatpush1.msra.mxu0 %v2974
        %3248 = vmatprep.subr.mxu0 %v3001
        %3249 = vmatpush1.msra.mxu0 %v3000
        %3250 = vmatprep.subr.mxu0 %v3003
        %3251 = vmatpush1.msra.mxu0 %v3002
        %3252 = vmatprep.subr.mxu0 %v3005
        %3253 = vmatpush1.msra.mxu0 %v3004
        %3254 = vmatprep.subr.mxu0 %v3007
        %3255 = vmatpush1.msra.mxu0 %v3006
        %3256 = vmatprep.subr.mxu0 %v3033
        %3257 = vmatpush1.msra.mxu0 %v3032
        %3258 = vmatprep.subr.mxu0 %v3035
        %3259 = vmatpush1.msra.mxu0 %v3034
        %3260 = vmatprep.subr.mxu0 %v3037
        %3261 = vmatpush1.msra.mxu0 %v3036
        %3262 = vmatprep.subr.mxu0 %v3039
        %3263 = vmatpush1.msra.mxu0 %v3038
        %3264 = vmatprep.subr.mxu0 %v3065
        %3265 = vmatpush1.msra.mxu0 %v3064
        %3266 = vmatprep.subr.mxu0 %v3067
        %3267 = vmatpush1.msra.mxu0 %v3066
        %3268 = vmatprep.subr.mxu0 %v3069
        %3269 = vmatpush1.msra.mxu0 %v3068
        %3270 = vmatprep.subr.mxu0 %v3071
        %3271 = vmatpush1.msra.mxu0 %v3070
        %3272 = vmatprep.subr.mxu0 %v2937
        %3273 = vmatpush1.msra.mxu0 %v2936
        %3274 = vmatprep.subr.mxu0 %v2939
        %3275 = vmatpush1.msra.mxu0 %v2938
        %3276 = vmatprep.subr.mxu0 %v2941
        %3277 = vmatpush1.msra.mxu0 %v2940
        %3278 = vmatprep.subr.mxu0 %v2943
        %3279 = vmatpush1.msra.mxu0 %v2942
        %3280 = vmatprep.subr.mxu0 %v3097
        %3281 = vmatpush1.msra.mxu0 %v3096
        %3282 = vmatprep.subr.mxu0 %v3099
        %3283 = vmatpush1.msra.mxu0 %v3098
        %3284 = vmatprep.subr.mxu0 %v3101
        %3285 = vmatpush1.msra.mxu0 %v3100
        %3286 = vmatprep.subr.mxu0 %v3103
        %3287 = vmatpush1.msra.mxu0 %v3102
        %3288 = vmatprep.subr.mxu0 %v3129
        %3289 = vmatpush1.msra.mxu0 %v3128
        %3290 = vmatprep.subr.mxu0 %v3131
        %3291 = vmatpush1.msra.mxu0 %v3130
        %3292 = vmatprep.subr.mxu0 %v3133
        %3293 = vmatpush1.msra.mxu0 %v3132
        %3294 = vmatprep.subr.mxu0 %v3135
        %3295 = vmatpush1.msra.mxu0 %v3134
        %3296 = vmatprep.subr.mxu0 %v3161
        %3297 = vmatpush1.msra.mxu0 %v3160
        %3298 = vmatprep.subr.mxu0 %v3163
        %3299 = vmatpush1.msra.mxu0 %v3162
        %3300 = vmatprep.subr.mxu0 %v3165
        %3301 = vmatpush1.msra.mxu0 %v3164
        %3302 = vmatprep.subr.mxu0 %v3167
        %3303 = vmatpush1.msra.mxu0 %v3166
        %3304 = vmatprep.mubr.f32.mxu0 %v3201
        %3305 = vmatmul.mubr.f32.gmra.mrb[0].mxu0 %v3200
        %v3306 = vpop.f32.mrb[0].mxu0
        %v3307 = vadd.f32 %v3214, %v3306
        %v3308 = vpop.f32.mrb[0].mxu0
        %v3309 = vadd.f32 %v3214, %v3308
        %3310 = vmatprep.mubr.f32.mxu0 %v3204
        %3311 = vmatmul.mubr.f32.gmra.mrb[0].mxu0 %v3203
        %v3312 = vpop.f32.mrb[0].mxu0
        %v3313 = vadd.f32 %v3218, %v3312
        %v3314 = vpop.f32.mrb[0].mxu0
        %v3315 = vadd.f32 %v3218, %v3314
        %3316 = vmatprep.mubr.f32.mxu0 %v3207
        %3317 = vmatmul.mubr.f32.gmra.mrb[0].mxu0 %v3206
        %v3318 = vpop.f32.mrb[0].mxu0
        %v3319 = vadd.f32 %v3222, %v3318
        %v3320 = vpop.f32.mrb[0].mxu0
        %v3321 = vadd.f32 %v3222, %v3320
        %3322 = vmatprep.mubr.f32.mxu0 %v3210
        %3323 = vmatmul.mubr.f32.gmra.mrb[0].mxu0 %v3209
        %v3324 = vpop.f32.mrb[0].mxu0
        %v3325 = vadd.f32 %v3226, %v3324
        %v3326 = vpop.f32.mrb[0].mxu0
        %v3327 = vadd.f32 %v3226, %v3326
        %3328 = vdwg.mxu0
        %3329 = vmatprep.subr.mxu0 %v3193
        %3330 = vmatpush1.msra.mxu0 %v3192
        %3331 = vmatprep.subr.mxu0 %v3195
        %3332 = vmatpush1.msra.mxu0 %v3194
        %3333 = vmatprep.subr.mxu0 %v3197
        %3334 = vmatpush1.msra.mxu0 %v3196
        %3335 = vmatprep.subr.mxu0 %v3199
        %3336 = vmatpush1.msra.mxu0 %v3198
        %3337 = vmatprep.subr.mxu0 0.0
        %3338 = vmatpush1.msra.mxu0 0.0
        %3339 = vmatprep.subr.mxu0 0.0
        %3340 = vmatpush1.msra.mxu0 0.0
        %3341 = vmatprep.subr.mxu0 0.0
        %3342 = vmatpush1.msra.mxu0 0.0
        %3343 = vmatprep.subr.mxu0 0.0
        %3344 = vmatpush1.msra.mxu0 0.0
        %3345 = vmatprep.subr.mxu0 0.0
        %3346 = vmatpush1.msra.mxu0 0.0
        %3347 = vmatprep.subr.mxu0 0.0
        %3348 = vmatpush1.msra.mxu0 0.0
        %3349 = vmatprep.subr.mxu0 0.0
        %3350 = vmatpush1.msra.mxu0 0.0
        %3351 = vmatprep.subr.mxu0 0.0
        %3352 = vmatpush1.msra.mxu0 0.0
        %3353 = vmatprep.subr.mxu0 0.0
        %3354 = vmatpush1.msra.mxu0 0.0
        %3355 = vmatprep.subr.mxu0 0.0
        %3356 = vmatpush1.msra.mxu0 0.0
        %3357 = vmatprep.subr.mxu0 0.0
        %3358 = vmatpush1.msra.mxu0 0.0
        %3359 = vmatprep.subr.mxu0 0.0
        %3360 = vmatpush1.msra.mxu0 0.0
        %3361 = vmatprep.subr.mxu0 0.0
        %3362 = vmatpush1.msra.mxu0 0.0
        %3363 = vmatprep.subr.mxu0 0.0
        %3364 = vmatpush1.msra.mxu0 0.0
        %3365 = vmatprep.subr.mxu0 0.0
        %3366 = vmatpush1.msra.mxu0 0.0
        %3367 = vmatprep.subr.mxu0 0.0
        %3368 = vmatpush1.msra.mxu0 0.0
        %3369 = vmatprep.subr.mxu0 0.0
        %3370 = vmatpush1.msra.mxu0 0.0
        %3371 = vmatprep.subr.mxu0 0.0
        %3372 = vmatpush1.msra.mxu0 0.0
        %3373 = vmatprep.subr.mxu0 0.0
        %3374 = vmatpush1.msra.mxu0 0.0
        %3375 = vmatprep.subr.mxu0 0.0
        %3376 = vmatpush1.msra.mxu0 0.0
        %3377 = vmatprep.subr.mxu0 0.0
        %3378 = vmatpush1.msra.mxu0 0.0
        %3379 = vmatprep.subr.mxu0 0.0
        %3380 = vmatpush1.msra.mxu0 0.0
        %3381 = vmatprep.subr.mxu0 0.0
        %3382 = vmatpush1.msra.mxu0 0.0
        %3383 = vmatprep.subr.mxu0 0.0
        %3384 = vmatpush1.msra.mxu0 0.0
        %3385 = vmatprep.subr.mxu0 0.0
        %3386 = vmatpush1.msra.mxu0 0.0
        %3387 = vmatprep.subr.mxu0 0.0
        %3388 = vmatpush1.msra.mxu0 0.0
        %3389 = vmatprep.subr.mxu0 0.0
        %3390 = vmatpush1.msra.mxu0 0.0
        %3391 = vmatprep.subr.mxu0 0.0
        %3392 = vmatpush1.msra.mxu0 0.0
        %3393 = vmatprep.mubr.f32.mxu0 0.0
        %3394 = vmatmul.mubr.f32.gmra.mrb[0].mxu0 %v3229
        %v3395 = vpop.f32.mrb[0].mxu0
        %v3396 = vadd.f32 %v3307, %v3395
        %v3397 = vpop.f32.mrb[0].mxu0
        %v3398 = vadd.f32 %v3309, %v3397
        %3399 = vmatprep.mubr.f32.mxu0 0.0
        %3400 = vmatmul.mubr.f32.gmra.mrb[0].mxu0 %v3232
        %v3401 = vpop.f32.mrb[0].mxu0
        %v3402 = vadd.f32 %v3313, %v3401
        %v3403 = vpop.f32.mrb[0].mxu0
        %v3404 = vadd.f32 %v3315, %v3403
        %3405 = vmatprep.mubr.f32.mxu0 0.0
        %3406 = vmatmul.mubr.f32.gmra.mrb[0].mxu0 %v3235
        %v3407 = vpop.f32.mrb[0].mxu0
        %v3408 = vadd.f32 %v3319, %v3407
        %v3409 = vpop.f32.mrb[0].mxu0
        %v3410 = vadd.f32 %v3321, %v3409
        %3411 = vmatprep.mubr.f32.mxu0 0.0
        %3412 = vmatmul.mubr.f32.gmra.mrb[0].mxu0 %v3238
        %v3413 = vpop.f32.mrb[0].mxu0
        %v3414 = vadd.f32 %v3325, %v3413
        %v3415 = vpop.f32.mrb[0].mxu0
        %v3416 = vadd.f32 %v3327, %v3415
        %3417 = vdwg.mxu0
        %v3418 = vadd.f32 %v3396, %v1688
        %v3419 = vadd.f32 %v3398, %v1690
        %v3420 = vadd.f32 %v3402, %v1694
        %v3421 = vadd.f32 %v3404, %v1696
        %v3422 = vadd.f32 %v3408, %v1700
        %v3423 = vadd.f32 %v3410, %v1702
        %v3424 = vadd.f32 %v3414, %v1706
        %v3425 = vadd.f32 %v3416, %v1708
        %3426 = vmatprep.subr.mxu0 %v3419
        %3427 = vmatpush1.msra.mxu0 %v3418
        %3428 = vmatprep.subr.mxu0 %v3421
        %3429 = vmatpush1.msra.mxu0 %v3420
        %3430 = vmatprep.subr.mxu0 %v3423
        %3431 = vmatpush1.msra.mxu0 %v3422
        %3432 = vmatprep.subr.mxu0 %v3425
        %3433 = vmatpush1.msra.mxu0 %v3424
        %3434 = vmatprep.subr.mxu0 0.0
        %3435 = vmatpush1.msra.mxu0 0.0
        %3436 = vmatprep.subr.mxu0 0.0
        %3437 = vmatpush1.msra.mxu0 0.0
        %3438 = vmatprep.subr.mxu0 0.0
        %3439 = vmatpush1.msra.mxu0 0.0
        %3440 = vmatprep.subr.mxu0 0.0
        %3441 = vmatpush1.msra.mxu0 0.0
        %3442 = vmatprep.subr.mxu0 0.0
        %3443 = vmatpush1.msra.mxu0 0.0
        %3444 = vmatprep.subr.mxu0 0.0
        %3445 = vmatpush1.msra.mxu0 0.0
        %3446 = vmatprep.subr.mxu0 0.0
        %3447 = vmatpush1.msra.mxu0 0.0
        %3448 = vmatprep.subr.mxu0 0.0
        %3449 = vmatpush1.msra.mxu0 0.0
        %3450 = vmatprep.subr.mxu0 0.0
        %3451 = vmatpush1.msra.mxu0 0.0
        %3452 = vmatprep.subr.mxu0 0.0
        %3453 = vmatpush1.msra.mxu0 0.0
        %3454 = vmatprep.subr.mxu0 0.0
        %3455 = vmatpush1.msra.mxu0 0.0
        %3456 = vmatprep.subr.mxu0 0.0
        %3457 = vmatpush1.msra.mxu0 0.0
        %3458 = vmatprep.subr.mxu0 0.0
        %3459 = vmatpush1.msra.mxu0 0.0
        %3460 = vmatprep.subr.mxu0 0.0
        %3461 = vmatpush1.msra.mxu0 0.0
        %3462 = vmatprep.subr.mxu0 0.0
        %3463 = vmatpush1.msra.mxu0 0.0
        %3464 = vmatprep.subr.mxu0 0.0
        %3465 = vmatpush1.msra.mxu0 0.0
        %3466 = vmatprep.subr.mxu0 0.0
        %3467 = vmatpush1.msra.mxu0 0.0
        %3468 = vmatprep.subr.mxu0 0.0
        %3469 = vmatpush1.msra.mxu0 0.0
        %3470 = vmatprep.subr.mxu0 0.0
        %3471 = vmatpush1.msra.mxu0 0.0
        %3472 = vmatprep.subr.mxu0 0.0
        %3473 = vmatpush1.msra.mxu0 0.0
        %3474 = vmatprep.subr.mxu0 0.0
        %3475 = vmatpush1.msra.mxu0 0.0
        %3476 = vmatprep.subr.mxu0 0.0
        %3477 = vmatpush1.msra.mxu0 0.0
        %3478 = vmatprep.subr.mxu0 0.0
        %3479 = vmatpush1.msra.mxu0 0.0
        %3480 = vmatprep.subr.mxu0 0.0
        %3481 = vmatpush1.msra.mxu0 0.0
        %3482 = vmatprep.subr.mxu0 0.0
        %3483 = vmatpush1.msra.mxu0 0.0
        %3484 = vmatprep.subr.mxu0 0.0
        %3485 = vmatpush1.msra.mxu0 0.0
        %3486 = vmatprep.subr.mxu0 0.0
        %3487 = vmatpush1.msra.mxu0 0.0
        %3488 = vmatprep.subr.mxu0 0.0
        %3489 = vmatpush1.msra.mxu0 0.0
        %3490 = vmatprep.mubr.f32.mxu0 0.0
        %3491 = vmatmul.mubr.f32.gmra.mrb[0].mxu0 %v1715
        %v3492 = vpop.f32.mrb[0].mxu0
        %v3493 = vadd.f32 0.0, %v3492
        %v3494 = vpop.f32.mrb[0].mxu0
        %v3495 = vadd.f32 0.0, %v3494
        %3496 = vmatprep.mubr.f32.mxu0 0.0
        %3497 = vmatmul.mubr.f32.gmra.mrb[0].mxu0 %v1718
        %v3498 = vpop.f32.mrb[0].mxu0
        %v3499 = vadd.f32 0.0, %v3498
        %v3500 = vpop.f32.mrb[0].mxu0
        %v3501 = vadd.f32 0.0, %v3500
        %3502 = vmatprep.mubr.f32.mxu0 0.0
        %3503 = vmatmul.mubr.f32.gmra.mrb[0].mxu0 %v1721
        %v3504 = vpop.f32.mrb[0].mxu0
        %v3505 = vadd.f32 0.0, %v3504
        %v3506 = vpop.f32.mrb[0].mxu0
        %v3507 = vadd.f32 0.0, %v3506
        %3508 = vmatprep.mubr.f32.mxu0 0.0
        %3509 = vmatmul.mubr.f32.gmra.mrb[0].mxu0 %v1724
        %v3510 = vpop.f32.mrb[0].mxu0
        %v3511 = vadd.f32 0.0, %v3510
        %v3512 = vpop.f32.mrb[0].mxu0
        %v3513 = vadd.f32 0.0, %v3512
        %3514 = vdwg.mxu0
        %v3515 = vmul.f32 %v3418, %v3418
        %v3516 = vmul.f32 %v3419, %v3419
        %v3517 = vmul.f32 %v3420, %v3420
        %v3518 = vmul.f32 %v3421, %v3421
        %v3519 = vmul.f32 %v3422, %v3422
        %v3520 = vmul.f32 %v3423, %v3423
        %v3521 = vmul.f32 %v3424, %v3424
        %v3522 = vmul.f32 %v3425, %v3425
        %3523 = vmatprep.subr.mxu0 %v3516
        %3524 = vmatpush1.msra.mxu0 %v3515
        %3525 = vmatprep.subr.mxu0 %v3518
        %3526 = vmatpush1.msra.mxu0 %v3517
        %3527 = vmatprep.subr.mxu0 %v3520
        %3528 = vmatpush1.msra.mxu0 %v3519
        %3529 = vmatprep.subr.mxu0 %v3522
        %3530 = vmatpush1.msra.mxu0 %v3521
        %3531 = vmatprep.subr.mxu0 0.0
        %3532 = vmatpush1.msra.mxu0 0.0
        %3533 = vmatprep.subr.mxu0 0.0
        %3534 = vmatpush1.msra.mxu0 0.0
        %3535 = vmatprep.subr.mxu0 0.0
        %3536 = vmatpush1.msra.mxu0 0.0
        %3537 = vmatprep.subr.mxu0 0.0
        %3538 = vmatpush1.msra.mxu0 0.0
        %3539 = vmatprep.subr.mxu0 0.0
        %3540 = vmatpush1.msra.mxu0 0.0
        %3541 = vmatprep.subr.mxu0 0.0
        %3542 = vmatpush1.msra.mxu0 0.0
        %3543 = vmatprep.subr.mxu0 0.0
        %3544 = vmatpush1.msra.mxu0 0.0
        %3545 = vmatprep.subr.mxu0 0.0
        %3546 = vmatpush1.msra.mxu0 0.0
        %3547 = vmatprep.subr.mxu0 0.0
        %3548 = vmatpush1.msra.mxu0 0.0
        %3549 = vmatprep.subr.mxu0 0.0
        %3550 = vmatpush1.msra.mxu0 0.0
        %3551 = vmatprep.subr.mxu0 0.0
        %3552 = vmatpush1.msra.mxu0 0.0
        %3553 = vmatprep.subr.mxu0 0.0
        %3554 = vmatpush1.msra.mxu0 0.0
        %3555 = vmatprep.subr.mxu0 0.0
        %3556 = vmatpush1.msra.mxu0 0.0
        %3557 = vmatprep.subr.mxu0 0.0
        %3558 = vmatpush1.msra.mxu0 0.0
        %3559 = vmatprep.subr.mxu0 0.0
        %3560 = vmatpush1.msra.mxu0 0.0
        %3561 = vmatprep.subr.mxu0 0.0
        %3562 = vmatpush1.msra.mxu0 0.0
        %3563 = vmatprep.subr.mxu0 0.0
        %3564 = vmatpush1.msra.mxu0 0.0
        %3565 = vmatprep.subr.mxu0 0.0
        %3566 = vmatpush1.msra.mxu0 0.0
        %3567 = vmatprep.subr.mxu0 0.0
        %3568 = vmatpush1.msra.mxu0 0.0
        %3569 = vmatprep.subr.mxu0 0.0
        %3570 = vmatpush1.msra.mxu0 0.0
        %3571 = vmatprep.subr.mxu0 0.0
        %3572 = vmatpush1.msra.mxu0 0.0
        %3573 = vmatprep.subr.mxu0 0.0
        %3574 = vmatpush1.msra.mxu0 0.0
        %3575 = vmatprep.subr.mxu0 0.0
        %3576 = vmatpush1.msra.mxu0 0.0
        %3577 = vmatprep.subr.mxu0 0.0
        %3578 = vmatpush1.msra.mxu0 0.0
        %3579 = vmatprep.subr.mxu0 0.0
        %3580 = vmatpush1.msra.mxu0 0.0
        %3581 = vmatprep.subr.mxu0 0.0
        %3582 = vmatpush1.msra.mxu0 0.0
        %3583 = vmatprep.subr.mxu0 0.0
        %3584 = vmatpush1.msra.mxu0 0.0
        %3585 = vmatprep.subr.mxu0 0.0
        %3586 = vmatpush1.msra.mxu0 0.0
        %3587 = vmatprep.mubr.f32.mxu0 0.0
        %3588 = vmatmul.mubr.f32.gmra.mrb[0].mxu0 %v1715
        %v3589 = vpop.f32.mrb[0].mxu0
        %v3590 = vadd.f32 0.0, %v3589
        %v3591 = vpop.f32.mrb[0].mxu0
        %v3592 = vadd.f32 0.0, %v3591
        %3593 = vmatprep.mubr.f32.mxu0 0.0
        %3594 = vmatmul.mubr.f32.gmra.mrb[0].mxu0 %v1718
        %v3595 = vpop.f32.mrb[0].mxu0
        %v3596 = vadd.f32 0.0, %v3595
        %v3597 = vpop.f32.mrb[0].mxu0
        %v3598 = vadd.f32 0.0, %v3597
        %3599 = vmatprep.mubr.f32.mxu0 0.0
        %3600 = vmatmul.mubr.f32.gmra.mrb[0].mxu0 %v1721
        %v3601 = vpop.f32.mrb[0].mxu0
        %v3602 = vadd.f32 0.0, %v3601
        %v3603 = vpop.f32.mrb[0].mxu0
        %v3604 = vadd.f32 0.0, %v3603
        %3605 = vmatprep.mubr.f32.mxu0 0.0
        %3606 = vmatmul.mubr.f32.gmra.mrb[0].mxu0 %v1724
        %v3607 = vpop.f32.mrb[0].mxu0
        %v3608 = vadd.f32 0.0, %v3607
        %v3609 = vpop.f32.mrb[0].mxu0
        %v3610 = vadd.f32 0.0, %v3609
        %3611 = vdwg.mxu0
        %v3612 = vadd.f32 %v3493, %v3495
        %3613 = vadd.xlane.f32.xlu0 %v3612
        %v3614 = vpop.xlane.xlu0 %3613
        %v3615 = vadd.f32 %v3499, %v3501
        %3616 = vadd.xlane.f32.xlu0 %v3615
        %v3617 = vpop.xlane.xlu0 %3616
        %v3618 = vadd.f32 %v3505, %v3507
        %3619 = vadd.xlane.f32.xlu0 %v3618
        %v3620 = vpop.xlane.xlu0 %3619
        %v3621 = vadd.f32 %v3511, %v3513
        %3622 = vadd.xlane.f32.xlu0 %v3621
        %v3623 = vpop.xlane.xlu0 %3622
        %v3624 = vmul.f32 %v3614, 0.0009765625
        %v3625 = vmul.f32 %v3617, 0.0009765625
        %v3626 = vmul.f32 %v3620, 0.0009765625
        %v3627 = vmul.f32 %v3623, 0.0009765625
        %v3628 = vadd.f32 %v3590, %v3592
        %3629 = vadd.xlane.f32.xlu0 %v3628
        %v3630 = vpop.xlane.xlu0 %3629
        %v3631 = vadd.f32 %v3596, %v3598
        %3632 = vadd.xlane.f32.xlu0 %v3631
        %v3633 = vpop.xlane.xlu0 %3632
        %v3634 = vadd.f32 %v3602, %v3604
        %3635 = vadd.xlane.f32.xlu0 %v3634
        %v3636 = vpop.xlane.xlu0 %3635
        %v3637 = vadd.f32 %v3608, %v3610
        %3638 = vadd.xlane.f32.xlu0 %v3637
        %v3639 = vpop.xlane.xlu0 %3638
        %v3640 = vmul.f32 %v3630, 0.0009765625
        %v3641 = vmul.f32 %v3633, 0.0009765625
        %v3642 = vmul.f32 %v3636, 0.0009765625
        %v3643 = vmul.f32 %v3639, 0.0009765625
        %v3644 = vmul.f32 %v3624, %v3624
        %v3645 = vmul.f32 %v3625, %v3625
        %v3646 = vmul.f32 %v3626, %v3626
        %v3647 = vmul.f32 %v3627, %v3627
        %v3648 = vsub.f32 %v3640, %v3644
        %v3649 = vsub.f32 %v3641, %v3645
        %v3650 = vsub.f32 %v3642, %v3646
        %v3651 = vsub.f32 %v3643, %v3647
        %v3652 = vmax.f32 %v3648, 0.0
        %v3653 = vmax.f32 %v3649, 0.0
        %v3654 = vmax.f32 %v3650, 0.0
        %v3655 = vmax.f32 %v3651, 0.0
        %v3656 = vsub.f32 %v3418, %v3624
        %v3657 = vsub.f32 %v3419, %v3624
        %v3658 = vsub.f32 %v3420, %v3625
        %v3659 = vsub.f32 %v3421, %v3625
        %v3660 = vsub.f32 %v3422, %v3626
        %v3661 = vsub.f32 %v3423, %v3626
        %v3662 = vsub.f32 %v3424, %v3627
        %v3663 = vsub.f32 %v3425, %v3627
        %v3664 = vadd.f32 %v3652, 1e-05
        %v3665 = vadd.f32 %v3653, 1e-05
        %v3666 = vadd.f32 %v3654, 1e-05
        %v3667 = vadd.f32 %v3655, 1e-05
        %v3668 = vrsqrt.pop %v3664
        %v3669 = vrsqrt.pop %v3665
        %v3670 = vrsqrt.pop %v3666
        %v3671 = vrsqrt.pop %v3667
        %v3672 = vmul.f32 %v3656, %v3668
        %v3673 = vmul.f32 %v3657, %v3668
        %v3674 = vmul.f32 %v3658, %v3669
        %v3675 = vmul.f32 %v3659, %v3669
        %v3676 = vmul.f32 %v3660, %v3670
        %v3677 = vmul.f32 %v3661, %v3670
        %v3678 = vmul.f32 %v3662, %v3671
        %v3679 = vmul.f32 %v3663, %v3671
        %3680 = vset.pattern.permute.xlu0 7
        %3681 = vperm.xlu0 %3680, %v516
        %v3682 = vpop.permute.xlu0 %3681
        %3684 = vset.pattern.permute.xlu0 7
        %3685 = vperm.xlu0 %3684, %v517
        %v3686 = vpop.permute.xlu0 %3685
        %3688 = vset.pattern.permute.xlu0 7
        %3689 = vperm.xlu0 %3688, %v518
        %v3690 = vpop.permute.xlu0 %3689
        %3692 = vset.pattern.permute.xlu0 7
        %3693 = vperm.xlu0 %3692, %v519
        %v3694 = vpop.permute.xlu0 %3693
        %v3696 = vmul.f32 %v3672, %v3682
        %v3697 = vmul.f32 %v3673, %v3682
        %v3698 = vmul.f32 %v3674, %v3686
        %v3699 = vmul.f32 %v3675, %v3686
        %v3700 = vmul.f32 %v3676, %v3690
        %v3701 = vmul.f32 %v3677, %v3690
        %v3702 = vmul.f32 %v3678, %v3694
        %v3703 = vmul.f32 %v3679, %v3694
        %3704 = vset.pattern.permute.xlu0 8
        %3705 = vperm.xlu0 %3704, %v516
        %v3706 = vpop.permute.xlu0 %3705
        %3708 = vset.pattern.permute.xlu0 8
        %3709 = vperm.xlu0 %3708, %v517
        %v3710 = vpop.permute.xlu0 %3709
        %3712 = vset.pattern.permute.xlu0 8
        %3713 = vperm.xlu0 %3712, %v518
        %v3714 = vpop.permute.xlu0 %3713
        %3716 = vset.pattern.permute.xlu0 8
        %3717 = vperm.xlu0 %3716, %v519
        %v3718 = vpop.permute.xlu0 %3717
        %v3720 = vadd.f32 %v3696, %v3706
        %v3721 = vadd.f32 %v3697, %v3706
        %v3722 = vadd.f32 %v3698, %v3710
        %v3723 = vadd.f32 %v3699, %v3710
        %v3724 = vadd.f32 %v3700, %v3714
        %v3725 = vadd.f32 %v3701, %v3714
        %v3726 = vadd.f32 %v3702, %v3718
        %v3727 = vadd.f32 %v3703, %v3718
        %v3728 = vxor.u32 %v3720, 2147483648
        %v3729 = vxor.u32 %v3721, 2147483648
        %v3730 = vxor.u32 %v3722, 2147483648
        %v3731 = vxor.u32 %v3723, 2147483648
        %v3732 = vxor.u32 %v3724, 2147483648
        %v3733 = vxor.u32 %v3725, 2147483648
        %v3734 = vxor.u32 %v3726, 2147483648
        %v3735 = vxor.u32 %v3727, 2147483648
        %v3736 = vmul.f32 %v3728, 1.442695
        %v3737 = vpow.pop %v3736
        %v3738 = vmul.f32 %v3729, 1.442695
        %v3739 = vpow.pop %v3738
        %v3740 = vmul.f32 %v3730, 1.442695
        %v3741 = vpow.pop %v3740
        %v3742 = vmul.f32 %v3731, 1.442695
        %v3743 = vpow.pop %v3742
        %v3744 = vmul.f32 %v3732, 1.442695
        %v3745 = vpow.pop %v3744
        %v3746 = vmul.f32 %v3733, 1.442695
        %v3747 = vpow.pop %v3746
        %v3748 = vmul.f32 %v3734, 1.442695
        %v3749 = vpow.pop %v3748
        %v3750 = vmul.f32 %v3735, 1.442695
        %v3751 = vpow.pop %v3750
        %v3752 = vadd.f32 %v3737, 1.0
        %v3753 = vadd.f32 %v3739, 1.0
        %v3754 = vadd.f32 %v3741, 1.0
        %v3755 = vadd.f32 %v3743, 1.0
        %v3756 = vadd.f32 %v3745, 1.0
        %v3757 = vadd.f32 %v3747, 1.0
        %v3758 = vadd.f32 %v3749, 1.0
        %v3759 = vadd.f32 %v3751, 1.0
        %v3760 = vrcp.pop %v3752
        %v3761 = vmul.f32 1.0, %v3760
        %v3762 = vrcp.pop %v3753
        %v3763 = vmul.f32 1.0, %v3762
        %v3764 = vrcp.pop %v3754
        %v3765 = vmul.f32 1.0, %v3764
        %v3766 = vrcp.pop %v3755
        %v3767 = vmul.f32 1.0, %v3766
        %v3768 = vrcp.pop %v3756
        %v3769 = vmul.f32 1.0, %v3768
        %v3770 = vrcp.pop %v3757
        %v3771 = vmul.f32 1.0, %v3770
        %v3772 = vrcp.pop %v3758
        %v3773 = vmul.f32 1.0, %v3772
        %v3774 = vrcp.pop %v3759
        %v3775 = vmul.f32 1.0, %v3774
        %v3776 = vmul.f32 %v3720, %v3761
        %v3777 = vmul.f32 %v3721, %v3763
        %v3778 = vmul.f32 %v3722, %v3765
        %v3779 = vmul.f32 %v3723, %v3767
        %v3780 = vmul.f32 %v3724, %v3769
        %v3781 = vmul.f32 %v3725, %v3771
        %v3782 = vmul.f32 %v3726, %v3773
        %v3783 = vmul.f32 %v3727, %v3775
        %3784 = vrot.lane.b32.xlu0 %v3776, 17
        %v3785 = vpop.permute.xlu0 %3784
        %3786 = vrot.lane.b32.xlu0 %v3778, 17
        %v3787 = vpop.permute.xlu0 %3786
        %3788 = vrot.lane.b32.xlu0 %v3780, 17
        %v3789 = vpop.permute.xlu0 %3788
        %3790 = vrot.lane.b32.xlu0 %v3782, 17
        %v3791 = vpop.permute.xlu0 %3790
        %3792 = vrot.lane.b32.xlu0 %v3777, 17
        %v3793 = vpop.permute.xlu0 %3792
        %3794 = vrot.lane.b32.xlu0 %v3779, 17
        %v3795 = vpop.permute.xlu0 %3794
        %3796 = vrot.lane.b32.xlu0 %v3781, 17
        %v3797 = vpop.permute.xlu0 %3796
        %3798 = vrot.lane.b32.xlu0 %v3783, 17
        %v3799 = vpop.permute.xlu0 %3798
        %v3800 = vsel %vm1417, %v3785, %v3793
        %v3801 = vsel %vm1417, %v3787, %v3795
        %v3802 = vsel %vm1417, %v3789, %v3797
        %v3803 = vsel %vm1417, %v3791, %v3799
        %v3804 = vsel %vm1417, %v3793, %v3785
        %v3805 = vsel %vm1417, %v3795, %v3787
        %v3806 = vsel %vm1417, %v3797, %v3789
        %v3807 = vsel %vm1417, %v3799, %v3791
        %v3808 = vmul.f32 %v3804, %v1425
        %v3809 = vmul.f32 %v3800, %v1429
        %v3810 = vmul.f32 %v3805, %v1425
        %v3811 = vmul.f32 %v3801, %v1429
        %v3812 = vmul.f32 %v3806, %v1425
        %v3813 = vmul.f32 %v3802, %v1429
        %v3814 = vmul.f32 %v3807, %v1425
        %v3815 = vmul.f32 %v3803, %v1429
        %3816 = vrot.lane.b32.xlu0 %v3776, 16
        %v3817 = vpop.permute.xlu0 %3816
        %3818 = vrot.lane.b32.xlu0 %v3778, 16
        %v3819 = vpop.permute.xlu0 %3818
        %3820 = vrot.lane.b32.xlu0 %v3780, 16
        %v3821 = vpop.permute.xlu0 %3820
        %3822 = vrot.lane.b32.xlu0 %v3782, 16
        %v3823 = vpop.permute.xlu0 %3822
        %3824 = vrot.lane.b32.xlu0 %v3777, 16
        %v3825 = vpop.permute.xlu0 %3824
        %3826 = vrot.lane.b32.xlu0 %v3779, 16
        %v3827 = vpop.permute.xlu0 %3826
        %3828 = vrot.lane.b32.xlu0 %v3781, 16
        %v3829 = vpop.permute.xlu0 %3828
        %3830 = vrot.lane.b32.xlu0 %v3783, 16
        %v3831 = vpop.permute.xlu0 %3830
        %v3832 = vsel %vm1438, %v3817, %v3825
        %v3833 = vsel %vm1438, %v3819, %v3827
        %v3834 = vsel %vm1438, %v3821, %v3829
        %v3835 = vsel %vm1438, %v3823, %v3831
        %v3836 = vsel %vm1438, %v3825, %v3817
        %v3837 = vsel %vm1438, %v3827, %v3819
        %v3838 = vsel %vm1438, %v3829, %v3821
        %v3839 = vsel %vm1438, %v3831, %v3823
        %v3840 = vmul.f32 %v3836, %v1447
        %v3841 = vmul.f32 %v3832, %v1451
        %v3842 = vmul.f32 %v3837, %v1447
        %v3843 = vmul.f32 %v3833, %v1451
        %v3844 = vmul.f32 %v3838, %v1447
        %v3845 = vmul.f32 %v3834, %v1451
        %v3846 = vmul.f32 %v3839, %v1447
        %v3847 = vmul.f32 %v3835, %v1451
        %3848 = vrot.lane.b32.xlu0 %v3776, 15
        %v3849 = vpop.permute.xlu0 %3848
        %3850 = vrot.lane.b32.xlu0 %v3778, 15
        %v3851 = vpop.permute.xlu0 %3850
        %3852 = vrot.lane.b32.xlu0 %v3780, 15
        %v3853 = vpop.permute.xlu0 %3852
        %3854 = vrot.lane.b32.xlu0 %v3782, 15
        %v3855 = vpop.permute.xlu0 %3854
        %3856 = vrot.lane.b32.xlu0 %v3777, 15
        %v3857 = vpop.permute.xlu0 %3856
        %3858 = vrot.lane.b32.xlu0 %v3779, 15
        %v3859 = vpop.permute.xlu0 %3858
        %3860 = vrot.lane.b32.xlu0 %v3781, 15
        %v3861 = vpop.permute.xlu0 %3860
        %3862 = vrot.lane.b32.xlu0 %v3783, 15
        %v3863 = vpop.permute.xlu0 %3862
        %v3864 = vsel %vm1460, %v3849, %v3857
        %v3865 = vsel %vm1460, %v3851, %v3859
        %v3866 = vsel %vm1460, %v3853, %v3861
        %v3867 = vsel %vm1460, %v3855, %v3863
        %v3868 = vsel %vm1460, %v3857, %v3849
        %v3869 = vsel %vm1460, %v3859, %v3851
        %v3870 = vsel %vm1460, %v3861, %v3853
        %v3871 = vsel %vm1460, %v3863, %v3855
        %v3872 = vmul.f32 %v3868, %v1469
        %v3873 = vmul.f32 %v3864, %v1473
        %v3874 = vmul.f32 %v3869, %v1469
        %v3875 = vmul.f32 %v3865, %v1473
        %v3876 = vmul.f32 %v3870, %v1469
        %v3877 = vmul.f32 %v3866, %v1473
        %v3878 = vmul.f32 %v3871, %v1469
        %v3879 = vmul.f32 %v3867, %v1473
        %3880 = vrot.lane.b32.xlu0 %v3776, 1
        %v3881 = vpop.permute.xlu0 %3880
        %3882 = vrot.lane.b32.xlu0 %v3778, 1
        %v3883 = vpop.permute.xlu0 %3882
        %3884 = vrot.lane.b32.xlu0 %v3780, 1
        %v3885 = vpop.permute.xlu0 %3884
        %3886 = vrot.lane.b32.xlu0 %v3782, 1
        %v3887 = vpop.permute.xlu0 %3886
        %3888 = vrot.lane.b32.xlu0 %v3777, 1
        %v3889 = vpop.permute.xlu0 %3888
        %3890 = vrot.lane.b32.xlu0 %v3779, 1
        %v3891 = vpop.permute.xlu0 %3890
        %3892 = vrot.lane.b32.xlu0 %v3781, 1
        %v3893 = vpop.permute.xlu0 %3892
        %3894 = vrot.lane.b32.xlu0 %v3783, 1
        %v3895 = vpop.permute.xlu0 %3894
        %v3896 = vsel %vm1482, %v3881, %v3889
        %v3897 = vsel %vm1482, %v3883, %v3891
        %v3898 = vsel %vm1482, %v3885, %v3893
        %v3899 = vsel %vm1482, %v3887, %v3895
        %v3900 = vsel %vm1482, %v3889, %v3881
        %v3901 = vsel %vm1482, %v3891, %v3883
        %v3902 = vsel %vm1482, %v3893, %v3885
        %v3903 = vsel %vm1482, %v3895, %v3887
        %v3904 = vmul.f32 %v3900, %v1491
        %v3905 = vmul.f32 %v3896, %v1495
        %v3906 = vmul.f32 %v3901, %v1491
        %v3907 = vmul.f32 %v3897, %v1495
        %v3908 = vmul.f32 %v3902, %v1491
        %v3909 = vmul.f32 %v3898, %v1495
        %v3910 = vmul.f32 %v3903, %v1491
        %v3911 = vmul.f32 %v3899, %v1495
        %3912 = vrot.lane.b32.xlu0 %v3776, 127
        %v3913 = vpop.permute.xlu0 %3912
        %3914 = vrot.lane.b32.xlu0 %v3778, 127
        %v3915 = vpop.permute.xlu0 %3914
        %3916 = vrot.lane.b32.xlu0 %v3780, 127
        %v3917 = vpop.permute.xlu0 %3916
        %3918 = vrot.lane.b32.xlu0 %v3782, 127
        %v3919 = vpop.permute.xlu0 %3918
        %3920 = vrot.lane.b32.xlu0 %v3777, 127
        %v3921 = vpop.permute.xlu0 %3920
        %3922 = vrot.lane.b32.xlu0 %v3779, 127
        %v3923 = vpop.permute.xlu0 %3922
        %3924 = vrot.lane.b32.xlu0 %v3781, 127
        %v3925 = vpop.permute.xlu0 %3924
        %3926 = vrot.lane.b32.xlu0 %v3783, 127
        %v3927 = vpop.permute.xlu0 %3926
        %v3928 = vsel %vm1504, %v3913, %v3921
        %v3929 = vsel %vm1504, %v3915, %v3923
        %v3930 = vsel %vm1504, %v3917, %v3925
        %v3931 = vsel %vm1504, %v3919, %v3927
        %v3932 = vsel %vm1504, %v3921, %v3913
        %v3933 = vsel %vm1504, %v3923, %v3915
        %v3934 = vsel %vm1504, %v3925, %v3917
        %v3935 = vsel %vm1504, %v3927, %v3919
        %v3936 = vmul.f32 %v3928, %v1513
        %v3937 = vmul.f32 %v3932, %v1517
        %v3938 = vmul.f32 %v3929, %v1513
        %v3939 = vmul.f32 %v3933, %v1517
        %v3940 = vmul.f32 %v3930, %v1513
        %v3941 = vmul.f32 %v3934, %v1517
        %v3942 = vmul.f32 %v3931, %v1513
        %v3943 = vmul.f32 %v3935, %v1517
        %3944 = vrot.lane.b32.xlu0 %v3776, 113
        %v3945 = vpop.permute.xlu0 %3944
        %3946 = vrot.lane.b32.xlu0 %v3778, 113
        %v3947 = vpop.permute.xlu0 %3946
        %3948 = vrot.lane.b32.xlu0 %v3780, 113
        %v3949 = vpop.permute.xlu0 %3948
        %3950 = vrot.lane.b32.xlu0 %v3782, 113
        %v3951 = vpop.permute.xlu0 %3950
        %3952 = vrot.lane.b32.xlu0 %v3777, 113
        %v3953 = vpop.permute.xlu0 %3952
        %3954 = vrot.lane.b32.xlu0 %v3779, 113
        %v3955 = vpop.permute.xlu0 %3954
        %3956 = vrot.lane.b32.xlu0 %v3781, 113
        %v3957 = vpop.permute.xlu0 %3956
        %3958 = vrot.lane.b32.xlu0 %v3783, 113
        %v3959 = vpop.permute.xlu0 %3958
        %v3960 = vsel %vm1526, %v3945, %v3953
        %v3961 = vsel %vm1526, %v3947, %v3955
        %v3962 = vsel %vm1526, %v3949, %v3957
        %v3963 = vsel %vm1526, %v3951, %v3959
        %v3964 = vsel %vm1526, %v3953, %v3945
        %v3965 = vsel %vm1526, %v3955, %v3947
        %v3966 = vsel %vm1526, %v3957, %v3949
        %v3967 = vsel %vm1526, %v3959, %v3951
        %v3968 = vmul.f32 %v3960, %v1535
        %v3969 = vmul.f32 %v3964, %v1539
        %v3970 = vmul.f32 %v3961, %v1535
        %v3971 = vmul.f32 %v3965, %v1539
        %v3972 = vmul.f32 %v3962, %v1535
        %v3973 = vmul.f32 %v3966, %v1539
        %v3974 = vmul.f32 %v3963, %v1535
        %v3975 = vmul.f32 %v3967, %v1539
        %3976 = vrot.lane.b32.xlu0 %v3776, 112
        %v3977 = vpop.permute.xlu0 %3976
        %3978 = vrot.lane.b32.xlu0 %v3778, 112
        %v3979 = vpop.permute.xlu0 %3978
        %3980 = vrot.lane.b32.xlu0 %v3780, 112
        %v3981 = vpop.permute.xlu0 %3980
        %3982 = vrot.lane.b32.xlu0 %v3782, 112
        %v3983 = vpop.permute.xlu0 %3982
        %3984 = vrot.lane.b32.xlu0 %v3777, 112
        %v3985 = vpop.permute.xlu0 %3984
        %3986 = vrot.lane.b32.xlu0 %v3779, 112
        %v3987 = vpop.permute.xlu0 %3986
        %3988 = vrot.lane.b32.xlu0 %v3781, 112
        %v3989 = vpop.permute.xlu0 %3988
        %3990 = vrot.lane.b32.xlu0 %v3783, 112
        %v3991 = vpop.permute.xlu0 %3990
        %v3992 = vsel %vm1548, %v3977, %v3985
        %v3993 = vsel %vm1548, %v3979, %v3987
        %v3994 = vsel %vm1548, %v3981, %v3989
        %v3995 = vsel %vm1548, %v3983, %v3991
        %v3996 = vsel %vm1548, %v3985, %v3977
        %v3997 = vsel %vm1548, %v3987, %v3979
        %v3998 = vsel %vm1548, %v3989, %v3981
        %v3999 = vsel %vm1548, %v3991, %v3983
        %v4000 = vmul.f32 %v3992, %v1557
        %v4001 = vmul.f32 %v3996, %v1561
        %v4002 = vmul.f32 %v3993, %v1557
        %v4003 = vmul.f32 %v3997, %v1561
        %v4004 = vmul.f32 %v3994, %v1557
        %v4005 = vmul.f32 %v3998, %v1561
        %v4006 = vmul.f32 %v3995, %v1557
        %v4007 = vmul.f32 %v3999, %v1561
        %4008 = vrot.lane.b32.xlu0 %v3776, 111
        %v4009 = vpop.permute.xlu0 %4008
        %4010 = vrot.lane.b32.xlu0 %v3778, 111
        %v4011 = vpop.permute.xlu0 %4010
        %4012 = vrot.lane.b32.xlu0 %v3780, 111
        %v4013 = vpop.permute.xlu0 %4012
        %4014 = vrot.lane.b32.xlu0 %v3782, 111
        %v4015 = vpop.permute.xlu0 %4014
        %4016 = vrot.lane.b32.xlu0 %v3777, 111
        %v4017 = vpop.permute.xlu0 %4016
        %4018 = vrot.lane.b32.xlu0 %v3779, 111
        %v4019 = vpop.permute.xlu0 %4018
        %4020 = vrot.lane.b32.xlu0 %v3781, 111
        %v4021 = vpop.permute.xlu0 %4020
        %4022 = vrot.lane.b32.xlu0 %v3783, 111
        %v4023 = vpop.permute.xlu0 %4022
        %v4024 = vsel %vm1570, %v4009, %v4017
        %v4025 = vsel %vm1570, %v4011, %v4019
        %v4026 = vsel %vm1570, %v4013, %v4021
        %v4027 = vsel %vm1570, %v4015, %v4023
        %v4028 = vsel %vm1570, %v4017, %v4009
        %v4029 = vsel %vm1570, %v4019, %v4011
        %v4030 = vsel %vm1570, %v4021, %v4013
        %v4031 = vsel %vm1570, %v4023, %v4015
        %v4032 = vmul.f32 %v4024, %v1579
        %v4033 = vmul.f32 %v4028, %v1583
        %v4034 = vmul.f32 %v4025, %v1579
        %v4035 = vmul.f32 %v4029, %v1583
        %v4036 = vmul.f32 %v4026, %v1579
        %v4037 = vmul.f32 %v4030, %v1583
        %v4038 = vmul.f32 %v4027, %v1579
        %v4039 = vmul.f32 %v4031, %v1583
        %v4040 = vld [vmem:[#allocation5] sm:$0xff]
        %v4041 = vld [vmem:[#allocation5 + $0x8] sm:$0xf]
        %4043 = vset.pattern.permute.xlu0 10
        %4044 = vperm.xlu0 %4043, %v520
        %v4045 = vpop.permute.xlu0 %4044
        %v4049 = vcombine.high %v4040, %v4040
        %v4051 = vsel %vm657, %v4041, 0
        %4053 = vmatprep.subr.mxu0 %v3809
        %4054 = vmatpush1.msra.mxu0 %v3808
        %4055 = vmatprep.subr.mxu0 %v3811
        %4056 = vmatpush1.msra.mxu0 %v3810
        %4057 = vmatprep.subr.mxu0 %v3813
        %4058 = vmatpush1.msra.mxu0 %v3812
        %4059 = vmatprep.subr.mxu0 %v3815
        %4060 = vmatpush1.msra.mxu0 %v3814
        %4061 = vmatprep.subr.mxu0 %v3841
        %4062 = vmatpush1.msra.mxu0 %v3840
        %4063 = vmatprep.subr.mxu0 %v3843
        %4064 = vmatpush1.msra.mxu0 %v3842
        %4065 = vmatprep.subr.mxu0 %v3845
        %4066 = vmatpush1.msra.mxu0 %v3844
        %4067 = vmatprep.subr.mxu0 %v3847
        %4068 = vmatpush1.msra.mxu0 %v3846
        %4069 = vmatprep.subr.mxu0 %v3873
        %4070 = vmatpush1.msra.mxu0 %v3872
        %4071 = vmatprep.subr.mxu0 %v3875
        %4072 = vmatpush1.msra.mxu0 %v3874
        %4073 = vmatprep.subr.mxu0 %v3877
        %4074 = vmatpush1.msra.mxu0 %v3876
        %4075 = vmatprep.subr.mxu0 %v3879
        %4076 = vmatpush1.msra.mxu0 %v3878
        %4077 = vmatprep.subr.mxu0 %v3905
        %4078 = vmatpush1.msra.mxu0 %v3904
        %4079 = vmatprep.subr.mxu0 %v3907
        %4080 = vmatpush1.msra.mxu0 %v3906
        %4081 = vmatprep.subr.mxu0 %v3909
        %4082 = vmatpush1.msra.mxu0 %v3908
        %4083 = vmatprep.subr.mxu0 %v3911
        %4084 = vmatpush1.msra.mxu0 %v3910
        %4085 = vmatprep.subr.mxu0 %v3777
        %4086 = vmatpush1.msra.mxu0 %v3776
        %4087 = vmatprep.subr.mxu0 %v3779
        %4088 = vmatpush1.msra.mxu0 %v3778
        %4089 = vmatprep.subr.mxu0 %v3781
        %4090 = vmatpush1.msra.mxu0 %v3780
        %4091 = vmatprep.subr.mxu0 %v3783
        %4092 = vmatpush1.msra.mxu0 %v3782
        %4093 = vmatprep.subr.mxu0 %v3937
        %4094 = vmatpush1.msra.mxu0 %v3936
        %4095 = vmatprep.subr.mxu0 %v3939
        %4096 = vmatpush1.msra.mxu0 %v3938
        %4097 = vmatprep.subr.mxu0 %v3941
        %4098 = vmatpush1.msra.mxu0 %v3940
        %4099 = vmatprep.subr.mxu0 %v3943
        %4100 = vmatpush1.msra.mxu0 %v3942
        %4101 = vmatprep.subr.mxu0 %v3969
        %4102 = vmatpush1.msra.mxu0 %v3968
        %4103 = vmatprep.subr.mxu0 %v3971
        %4104 = vmatpush1.msra.mxu0 %v3970
        %4105 = vmatprep.subr.mxu0 %v3973
        %4106 = vmatpush1.msra.mxu0 %v3972
        %4107 = vmatprep.subr.mxu0 %v3975
        %4108 = vmatpush1.msra.mxu0 %v3974
        %4109 = vmatprep.subr.mxu0 %v4001
        %4110 = vmatpush1.msra.mxu0 %v4000
        %4111 = vmatprep.subr.mxu0 %v4003
        %4112 = vmatpush1.msra.mxu0 %v4002
        %4113 = vmatprep.subr.mxu0 %v4005
        %4114 = vmatpush1.msra.mxu0 %v4004
        %4115 = vmatprep.subr.mxu0 %v4007
        %4116 = vmatpush1.msra.mxu0 %v4006
        %4117 = vmatprep.mubr.f32.mxu0 %v4049
        %4118 = vmatmul.mubr.f32.gmra.mrb[0].mxu0 %v4040
        %v4119 = vpop.f32.mrb[0].mxu0
        %v4120 = vadd.f32 %v4045, %v4119
        %v4121 = vpop.f32.mrb[0].mxu0
        %v4122 = vadd.f32 %v4045, %v4121
        %4123 = vdwg.mxu0
        %4124 = vmatprep.subr.mxu0 %v4033
        %4125 = vmatpush1.msra.mxu0 %v4032
        %4126 = vmatprep.subr.mxu0 %v4035
        %4127 = vmatpush1.msra.mxu0 %v4034
        %4128 = vmatprep.subr.mxu0 %v4037
        %4129 = vmatpush1.msra.mxu0 %v4036
        %4130 = vmatprep.subr.mxu0 %v4039
        %4131 = vmatpush1.msra.mxu0 %v4038
        %4132 = vmatprep.subr.mxu0 0.0
        %4133 = vmatpush1.msra.mxu0 0.0
        %4134 = vmatprep.subr.mxu0 0.0
        %4135 = vmatpush1.msra.mxu0 0.0
        %4136 = vmatprep.subr.mxu0 0.0
        %4137 = vmatpush1.msra.mxu0 0.0
        %4138 = vmatprep.subr.mxu0 0.0
        %4139 = vmatpush1.msra.mxu0 0.0
        %4140 = vmatprep.subr.mxu0 0.0
        %4141 = vmatpush1.msra.mxu0 0.0
        %4142 = vmatprep.subr.mxu0 0.0
        %4143 = vmatpush1.msra.mxu0 0.0
        %4144 = vmatprep.subr.mxu0 0.0
        %4145 = vmatpush1.msra.mxu0 0.0
        %4146 = vmatprep.subr.mxu0 0.0
        %4147 = vmatpush1.msra.mxu0 0.0
        %4148 = vmatprep.subr.mxu0 0.0
        %4149 = vmatpush1.msra.mxu0 0.0
        %4150 = vmatprep.subr.mxu0 0.0
        %4151 = vmatpush1.msra.mxu0 0.0
        %4152 = vmatprep.subr.mxu0 0.0
        %4153 = vmatpush1.msra.mxu0 0.0
        %4154 = vmatprep.subr.mxu0 0.0
        %4155 = vmatpush1.msra.mxu0 0.0
        %4156 = vmatprep.subr.mxu0 0.0
        %4157 = vmatpush1.msra.mxu0 0.0
        %4158 = vmatprep.subr.mxu0 0.0
        %4159 = vmatpush1.msra.mxu0 0.0
        %4160 = vmatprep.subr.mxu0 0.0
        %4161 = vmatpush1.msra.mxu0 0.0
        %4162 = vmatprep.subr.mxu0 0.0
        %4163 = vmatpush1.msra.mxu0 0.0
        %4164 = vmatprep.subr.mxu0 0.0
        %4165 = vmatpush1.msra.mxu0 0.0
        %4166 = vmatprep.subr.mxu0 0.0
        %4167 = vmatpush1.msra.mxu0 0.0
        %4168 = vmatprep.subr.mxu0 0.0
        %4169 = vmatpush1.msra.mxu0 0.0
        %4170 = vmatprep.subr.mxu0 0.0
        %4171 = vmatpush1.msra.mxu0 0.0
        %4172 = vmatprep.subr.mxu0 0.0
        %4173 = vmatpush1.msra.mxu0 0.0
        %4174 = vmatprep.subr.mxu0 0.0
        %4175 = vmatpush1.msra.mxu0 0.0
        %4176 = vmatprep.subr.mxu0 0.0
        %4177 = vmatpush1.msra.mxu0 0.0
        %4178 = vmatprep.subr.mxu0 0.0
        %4179 = vmatpush1.msra.mxu0 0.0
        %4180 = vmatprep.subr.mxu0 0.0
        %4181 = vmatpush1.msra.mxu0 0.0
        %4182 = vmatprep.subr.mxu0 0.0
        %4183 = vmatpush1.msra.mxu0 0.0
        %4184 = vmatprep.subr.mxu0 0.0
        %4185 = vmatpush1.msra.mxu0 0.0
        %4186 = vmatprep.subr.mxu0 0.0
        %4187 = vmatpush1.msra.mxu0 0.0
        %4188 = vmatprep.mubr.f32.mxu0 0.0
        %4189 = vmatmul.mubr.f32.gmra.mrb[0].mxu0 %v4051
        %v4190 = vpop.f32.mrb[0].mxu0
        %v4191 = vadd.f32 %v4120, %v4190
        %v4192 = vpop.f32.mrb[0].mxu0
        %v4193 = vadd.f32 %v4122, %v4192
        %4194 = vdwg.mxu0
        %v4197 = vcombine.low %v4191, %v4193
        %4199 = vst [vmem:[%s505] sm:$0xff] %v4197
        %s4200 = sand.u32 %s321, 1
        %s4201 = scalar_lea.sflag [#allocation4], %s4200
        %s4202 = sand.u32 %s321, 1
        %s4203 = smul.addr %s4202, 8
        %s4204 = scalar_lea.vmem [#allocation10], %s4203
        // Predicated region
        $region89: #{tpu_custom_call.1} parent=71 // pred_check
          %p4205 = pneg %p331
        $region90: #{tpu_custom_call.1} parent=71 // pred_check_branch
          %4207 = sbr.rel (%p4205) target = $region92
        $region91: #{tpu_custom_call.1} parent=71 // pred_region
          %s4209 = ssub.s32 128, 128
          %4210 = vsyncadd %s4201, %s4209
          %s4211 = smul.addr %s30, 2
          %s4212 = smul.addr %s4211, 64
          %s4213 = scalar_lea.hbm %s13, %s4212
          %s4215 = sshll.u32 %s4204, 4
          %s4216 = int_to_ptr.vmem [resolvable:$true] %s4215
          %4218 = dma.vmem_to_hbm [thread:$0]  %s4216, 128, %s4213, %s4201
        $region92: #{tpu_custom_call.1} parent=71 // pred_fallthru
          _
      $region72: #{tpu_custom_call.1} parent=5 // pred_fallthru
        _
      %p4219 = scmp.le.s32.totalorder 2, %s25
      // Predicated region
      $region93: #{tpu_custom_call.1} parent=5 // pred_check
        %p4220 = pneg %p4219
      $region94: #{tpu_custom_call.1} parent=5 // pred_check_branch
        %4222 = sbr.rel (%p4220) target = $region96
      $region95: #{tpu_custom_call.1} parent=5 // pred_region
        %s4223 = ssub.s32 %s25, 2
        // Predicated region
        $region97: #{tpu_custom_call.1} parent=95 // pred_check
          %p4224 = pneg %p337
        $region98: #{tpu_custom_call.1} parent=95 // pred_check_branch
          %4226 = sbr.rel (%p4224) target = $region100
        $region99: #{tpu_custom_call.1} parent=95 // pred_region
          %s4227 = sand.u32 %s322, 1
          %s4228 = scalar_lea.sflag [#allocation4], %s4227
          %s4229 = sand.u32 %s322, 1
          %s4230 = smul.addr %s4229, 8
          %s4231 = scalar_lea.vmem [#allocation10], %s4230
          %4232 = dma.done %s4228, 128
        $region100: #{tpu_custom_call.1} parent=95 // pred_fallthru
          _
      $region96: #{tpu_custom_call.1} parent=5 // pred_fallthru
        _
    $region6: #{tpu_custom_call.1} parent=1 // loop_footer
      %s29 = sadd.s32 1, %s25
    $region7: #{tpu_custom_call.1} parent=1 // loop_footer_branch
      %24 = sbr.rel target = $region3
    $region8: #{tpu_custom_call.1} parent=1 // loop_exit
      _
    %4233 = vsyncpa [#allocation3], 1
    %s4234 = scalar_lea.sflag [#allocation3], 1
    %4235 = vsyncpa %s4234, 1
    %4236 = vsyncpa [#allocation6], 1
    %4237 = vsyncpa [#allocation9], 1
    %4238 = vsyncpa [#allocation4], 1
    %s4239 = scalar_lea.sflag [#allocation4], 1
    %4240 = vsyncpa %s4239, 1

</llo_original>
